<compile_context>
chip_gen: v5e
topology: v5e:2x2
jax: 0.10.0
libtpu: 0.0.40
codegen_flags: <defaults>
</compile_context>

<pallas_src>
import math
import functools

import jax
import jax.numpy as jnp
from jax.experimental import pallas as pl
from jax.experimental.pallas import tpu as pltpu


# ----------------------------------------------------------------------------- helpers

def _layernorm(x, w, b, eps=1e-5):
    mu = jnp.mean(x, axis=-1, keepdims=True)
    var = jnp.mean((x - mu) ** 2, axis=-1, keepdims=True)
    return (x - mu) * jax.lax.rsqrt(var + eps) * w + b


# ----------------------------------------------------------------------------- kernel

def fused_forward_kernel(x_ref, pos_ref, in_w_ref, in_b_ref,
                         wqkv_ref, bqkv_ref, wo_ref, bo_ref,
                         ln1_w_ref, ln1_b_ref,
                         ff1_w_ref, ff1_b_ref, ff2_w_ref, ff2_b_ref,
                         ln2_w_ref, ln2_b_ref,
                         chunk_w_ref, chunk_b_ref,
                         seq1_w_ref, seq1_b_ref, seq_ln_w_ref, seq_ln_b_ref,
                         seq2_w_ref, seq2_b_ref,
                         chunk_ref, seq_ref,
                         *, num_layers, num_heads, batch, seq_len):
    # x_ref: (B*S, E)   pos_ref: (B*S, H)
    # wqkv_ref: (L, H, 3H)  bqkv_ref: (L, 1, 3H)  wo_ref: (L, H, H)  bo_ref: (L, 1, H)
    # chunk/seq2 classifier weights are zero-padded to 128 output lanes.
    H = in_w_ref.shape[1]
    hd = H // num_heads
    scale = 1.0 / math.sqrt(hd)
    BS = batch * seq_len

    # ---- input projection + positional encoding on the flattened activation ----
    y = (jnp.dot(x_ref[...], in_w_ref[...], preferred_element_type=jnp.float32)
         + in_b_ref[...] + pos_ref[...])                              # (B*S, H)

    def split_heads(t):
        # (B*S, H) -> (B*NH, S, hd): static lane slices per head + stack on a new
        # outer axis (batch folded into the head-batch axis of the dot_generals).
        t3 = t.reshape(batch, seq_len, H)
        heads = [t3[:, :, h * hd:(h + 1) * hd] for h in range(num_heads)]
        return jnp.stack(heads, axis=1).reshape(batch * num_heads, seq_len, hd)

    # ---- transformer encoder layers (post-LN, ReLU feed-forward) ----
    for l in range(num_layers):                                        # static unroll, L=2
        # single flattened QKV projection
        qkv = (jnp.dot(y, wqkv_ref[l], preferred_element_type=jnp.float32)
               + bqkv_ref[l])                                          # (B*S, 3H)
        qh = split_heads(qkv[:, 0 * H:1 * H])                          # (B*NH, S, hd)
        kh = split_heads(qkv[:, 1 * H:2 * H])
        vh = split_heads(qkv[:, 2 * H:3 * H])

        s = jnp.einsum('nqd,nkd->nqk', qh, kh,
                       preferred_element_type=jnp.float32) * scale     # (B*NH, S, S)
        s = s - jnp.max(s, axis=-1, keepdims=True)
        p = jnp.exp(s)
        denom = jnp.sum(p, axis=-1, keepdims=True)
        # exact reciprocal + multiply; pl.reciprocal(denom, approx=True) would be
        # ~free (EUP slot) at ~1e-3 accuracy cost vs. the PyTorch reference.
        p = p * (1.0 / denom)
        ctx = jnp.einsum('nqk,nkd->nqd', p, vh,
                         preferred_element_type=jnp.float32)            # (B*NH, S, hd)

        # merge heads back onto the lane axis -> one full-width output projection
        ctx4 = ctx.reshape(batch, num_heads, seq_len, hd)
        ctx_m = jnp.concatenate([ctx4[:, h] for h in range(num_heads)],
                                axis=-1)                                # (B, S, H)
        ctx_f = ctx_m.reshape(BS, H)
        attn = (jnp.dot(ctx_f, wo_ref[l], preferred_element_type=jnp.float32)
                + bo_ref[l])                                            # (B*S, H)

        # post-LN residual block 1
        y = _layernorm(y + attn, ln1_w_ref[l], ln1_b_ref[l])

        # feed-forward (ReLU, the PyTorch default activation), flattened batch
        h1 = jnp.dot(y, ff1_w_ref[l], preferred_element_type=jnp.float32) + ff1_b_ref[l]
        h1 = jnp.maximum(h1, 0.0)
        h2 = jnp.dot(h1, ff2_w_ref[l], preferred_element_type=jnp.float32) + ff2_b_ref[l]

        # post-LN residual block 2
        y = _layernorm(y + h2, ln2_w_ref[l], ln2_b_ref[l])

    # ---- chunk classifier: lane-dense (weights zero-padded to 128 columns) ----
    chunk_ref[...] = (jnp.dot(y, chunk_w_ref[...], preferred_element_type=jnp.float32)
                      + chunk_b_ref[...])                               # (B*S, 128)

    # ---- sequence classifier: mean-pool -> Linear -> LayerNorm -> GELU -> Linear ----
    gf = jnp.mean(y.reshape(batch, seq_len, H), axis=1)                 # (B, H)
    g = jnp.dot(gf, seq1_w_ref[...], preferred_element_type=jnp.float32) + seq1_b_ref[...]
    g = _layernorm(g, seq_ln_w_ref[...], seq_ln_b_ref[...])
    g = 0.5 * g * (1.0 + jax.lax.erf(g / math.sqrt(2.0)))               # exact GELU
    seq_ref[...] = (jnp.dot(g, seq2_w_ref[...], preferred_element_type=jnp.float32)
                    + seq2_b_ref[...])                                  # (B, 128)


# ----------------------------------------------------------------------------- wrapper

def hierarchical_forward(params, x, *, num_heads):
    B, S, E = x.shape
    H = params["in_w_t"].shape[1]
    layers = params["layers"]
    L = len(layers)
    PAD = 128  # lane-dense output width

    # ---- trace-time glue (plain JAX, tiny): flatten batch, tile pos, stack weights ----
    x2 = x.reshape(B * S, E)
    pos2 = jnp.tile(params["pos_encoding"][0, :S, :], (B, 1))            # (B*S, H)

    wqkv = jnp.stack([l["in_w_t"] for l in layers])                      # (L, H, 3H)
    bqkv = jnp.stack([l["in_b"] for l in layers])                        # (L, 1, 3H)
    wo = jnp.stack([l["out_w_t"] for l in layers])                       # (L, H, H)
    bo = jnp.stack([l["out_b"] for l in layers])                         # (L, 1, H)
    ln1_w = jnp.stack([l["ln1_w"] for l in layers])
    ln1_b = jnp.stack([l["ln1_b"] for l in layers])
    ff1_w = jnp.stack([l["ff1_w_t"] for l in layers])
    ff1_b = jnp.stack([l["ff1_b"] for l in layers])
    ff2_w = jnp.stack([l["ff2_w_t"] for l in layers])
    ff2_b = jnp.stack([l["ff2_b"] for l in layers])
    ln2_w = jnp.stack([l["ln2_w"] for l in layers])
    ln2_b = jnp.stack([l["ln2_b"] for l in layers])

    # zero-pad the 2-wide classifier heads to 128 lanes -> unmasked lane-dense stores
    chunk_w = jnp.zeros((H, PAD), jnp.float32).at[:, :2].set(params["chunk_w_t"])
    chunk_b = jnp.zeros((1, PAD), jnp.float32).at[:, :2].set(params["chunk_b"])
    H2 = params["seq1_w_t"].shape[1]
    seq2_w = jnp.zeros((H2, PAD), jnp.float32).at[:, :2].set(params["seq2_w_t"])
    seq2_b = jnp.zeros((1, PAD), jnp.float32).at[:, :2].set(params["seq2_b"])

    kernel = functools.partial(fused_forward_kernel, num_layers=L,
                               num_heads=num_heads, batch=B, seq_len=S)

    inputs = (x2, pos2, params["in_w_t"], params["in_b"],
              wqkv, bqkv, wo, bo,
              ln1_w, ln1_b, ff1_w, ff1_b, ff2_w, ff2_b, ln2_w, ln2_b,
              chunk_w, chunk_b,
              params["seq1_w_t"], params["seq1_b"],
              params["seq_ln_w"], params["seq_ln_b"],
              seq2_w, seq2_b)

    vmem = pltpu.MemorySpace.VMEM
    chunk_pad, seq_pad = pl.pallas_call(
        kernel,
        out_shape=(jax.ShapeDtypeStruct((B * S, PAD), jnp.float32),
                   jax.ShapeDtypeStruct((B, PAD), jnp.float32)),
        in_specs=[pl.BlockSpec(memory_space=vmem) for _ in inputs],
        out_specs=(pl.BlockSpec(memory_space=vmem),
                   pl.BlockSpec(memory_space=vmem)),
    )(*inputs)

    return chunk_pad[:, :2].reshape(B, S, 2), seq_pad[:, :2]


# ----------------------------------------------------------------------------- params

def make_params(key, embed_dim, hidden_dim, dim_feedforward, num_layers):
    H2 = hidden_dim // 2
    keys = iter(jax.random.split(key, 64))

    def w(shape, scale=0.02):
        return (scale * jax.random.normal(next(keys), shape)).astype(jnp.float32)

    params = {
        # input_projection (stored transposed: (E, H)) + pos encoding
        "in_w_t": w((embed_dim, hidden_dim)),
        "in_b": w((1, hidden_dim)),
        "pos_encoding": w((1, 100, hidden_dim)),
        "layers": [],
        # chunk_classifier
        "chunk_w_t": w((hidden_dim, 2)),
        "chunk_b": w((1, 2)),
        # sequence_classifier: Linear -> LayerNorm -> GELU -> (Dropout) -> Linear
        "seq1_w_t": w((hidden_dim, H2)),
        "seq1_b": w((1, H2)),
        "seq_ln_w": jnp.ones((1, H2), jnp.float32),
        "seq_ln_b": jnp.zeros((1, H2), jnp.float32),
        "seq2_w_t": w((H2, 2)),
        "seq2_b": w((1, 2)),
    }
    for _ in range(num_layers):
        params["layers"].append({
            "in_w_t": w((hidden_dim, 3 * hidden_dim)),   # packed [q|k|v] projection (transposed)
            "in_b": w((1, 3 * hidden_dim)),
            "out_w_t": w((hidden_dim, hidden_dim)),
            "out_b": w((1, hidden_dim)),
            "ln1_w": jnp.ones((1, hidden_dim), jnp.float32),
            "ln1_b": jnp.zeros((1, hidden_dim), jnp.float32),
            "ff1_w_t": w((hidden_dim, dim_feedforward)),
            "ff1_b": w((1, dim_feedforward)),
            "ff2_w_t": w((dim_feedforward, hidden_dim)),
            "ff2_b": w((1, hidden_dim)),
            "ln2_w": jnp.ones((1, hidden_dim), jnp.float32),
            "ln2_b": jnp.zeros((1, hidden_dim), jnp.float32),
        })
    return params


# ----------------------------------------------------------------------------- main

if __name__ == "__main__":
    # Small shapes consistent with the module's forward: x is [batch, seq, embed_dim].
    B, S, E = 2, 8, 32
    H, FF, L, NH = 128, 256, 2, 8    # hidden_dim, dim_feedforward, layers, heads

    key = jax.random.PRNGKey(0)
    pkey, xkey = jax.random.split(key)
    params = make_params(pkey, E, H, FF, L)
    x = jax.random.normal(xkey, (B, S, E), dtype=jnp.float32)

    # TODO(synk): dropout layers are treated as identity (inference semantics).
    chunk_logits, seq_logits = hierarchical_forward(params, x, num_heads=NH)
    jax.block_until_ready((chunk_logits, seq_logits))

    assert chunk_logits.shape == (B, S, 2), chunk_logits.shape
    assert seq_logits.shape == (B, 2), seq_logits.shape
    assert jnp.all(jnp.isfinite(chunk_logits)) and jnp.all(jnp.isfinite(seq_logits))
    print("KERNEL_OK")
</pallas_src>

<mosaic_0001>
module attributes {stable_mosaic.version = 11 : i64} {
  func.func @fused_forward_kernel(%arg0: memref<16x32xf32, #tpu.memory_space<vmem>>, %arg1: memref<16x128xf32, #tpu.memory_space<vmem>>, %arg2: memref<32x128xf32, #tpu.memory_space<vmem>>, %arg3: memref<1x128xf32, #tpu.memory_space<vmem>>, %arg4: memref<2x128x384xf32, #tpu.memory_space<vmem>>, %arg5: memref<2x1x384xf32, #tpu.memory_space<vmem>>, %arg6: memref<2x128x128xf32, #tpu.memory_space<vmem>>, %arg7: memref<2x1x128xf32, #tpu.memory_space<vmem>>, %arg8: memref<2x1x128xf32, #tpu.memory_space<vmem>>, %arg9: memref<2x1x128xf32, #tpu.memory_space<vmem>>, %arg10: memref<2x128x256xf32, #tpu.memory_space<vmem>>, %arg11: memref<2x1x256xf32, #tpu.memory_space<vmem>>, %arg12: memref<2x256x128xf32, #tpu.memory_space<vmem>>, %arg13: memref<2x1x128xf32, #tpu.memory_space<vmem>>, %arg14: memref<2x1x128xf32, #tpu.memory_space<vmem>>, %arg15: memref<2x1x128xf32, #tpu.memory_space<vmem>>, %arg16: memref<128x128xf32, #tpu.memory_space<vmem>>, %arg17: memref<1x128xf32, #tpu.memory_space<vmem>>, %arg18: memref<128x64xf32, #tpu.memory_space<vmem>>, %arg19: memref<1x64xf32, #tpu.memory_space<vmem>>, %arg20: memref<1x64xf32, #tpu.memory_space<vmem>>, %arg21: memref<1x64xf32, #tpu.memory_space<vmem>>, %arg22: memref<64x128xf32, #tpu.memory_space<vmem>>, %arg23: memref<1x128xf32, #tpu.memory_space<vmem>>, %arg24: memref<16x128xf32, #tpu.memory_space<vmem>>, %arg25: memref<2x128xf32, #tpu.memory_space<vmem>>) attributes {dimension_semantics = [], scalar_prefetch = 0 : i64, scratch_operands = 0 : i64, tpu.core_type = #tpu.core_type<tc>} {
    %c0 = arith.constant 0 : index
    %c0_0 = arith.constant 0 : index
    %0 = vector.load %arg0[%c0, %c0_0] : memref<16x32xf32, #tpu.memory_space<vmem>>, vector<16x32xf32>
    %c0_1 = arith.constant 0 : index
    %c0_2 = arith.constant 0 : index
    %1 = vector.load %arg2[%c0_1, %c0_2] : memref<32x128xf32, #tpu.memory_space<vmem>>, vector<32x128xf32>
    %cst = arith.constant dense<0.000000e+00> : vector<16x128xf32>
    %2 = tpu.matmul %0, %1, %cst {dimension_numbers = #tpu.dot_dimension_numbers<[1], [0], [0], [1], [0, 0, 1, 1], [], []>} : vector<16x32xf32>, vector<32x128xf32>, vector<16x128xf32> -> vector<16x128xf32>
    %c0_3 = arith.constant 0 : index
    %c0_4 = arith.constant 0 : index
    %3 = vector.load %arg3[%c0_3, %c0_4] : memref<1x128xf32, #tpu.memory_space<vmem>>, vector<1x128xf32>
    %4 = vector.broadcast %3 : vector<1x128xf32> to vector<16x128xf32>
    %5 = arith.addf %2, %4 : vector<16x128xf32>
    %c0_5 = arith.constant 0 : index
    %c0_6 = arith.constant 0 : index
    %6 = vector.load %arg1[%c0_5, %c0_6] : memref<16x128xf32, #tpu.memory_space<vmem>>, vector<16x128xf32>
    %7 = arith.addf %5, %6 : vector<16x128xf32>
    %c0_7 = arith.constant 0 : index
    %c0_8 = arith.constant 0 : index
    %c0_9 = arith.constant 0 : index
    %8 = vector.load %arg4[%c0_7, %c0_8, %c0_9] : memref<2x128x384xf32, #tpu.memory_space<vmem>>, vector<1x128x384xf32>
    %9 = vector.shape_cast %8 : vector<1x128x384xf32> to vector<128x384xf32>
    %cst_10 = arith.constant dense<0.000000e+00> : vector<16x384xf32>
    %10 = tpu.matmul %7, %9, %cst_10 {dimension_numbers = #tpu.dot_dimension_numbers<[1], [0], [0], [1], [0, 0, 1, 1], [], []>} : vector<16x128xf32>, vector<128x384xf32>, vector<16x384xf32> -> vector<16x384xf32>
    %c0_11 = arith.constant 0 : index
    %c0_12 = arith.constant 0 : index
    %c0_13 = arith.constant 0 : index
    %11 = vector.load %arg5[%c0_11, %c0_12, %c0_13] : memref<2x1x384xf32, #tpu.memory_space<vmem>>, vector<1x1x384xf32>
    %12 = vector.shape_cast %11 : vector<1x1x384xf32> to vector<1x384xf32>
    %13 = vector.broadcast %12 : vector<1x384xf32> to vector<16x384xf32>
    %14 = arith.addf %10, %13 : vector<16x384xf32>
    %15 = vector.extract_strided_slice %14 {offsets = [0, 0], sizes = [16, 128], strides = [1, 1]} : vector<16x384xf32> to vector<16x128xf32>
    %16 = vector.shape_cast %15 : vector<16x128xf32> to vector<2x8x128xf32>
    %17 = vector.extract_strided_slice %16 {offsets = [0, 0, 0], sizes = [2, 8, 16], strides = [1, 1, 1]} : vector<2x8x128xf32> to vector<2x8x16xf32>
    %18 = vector.extract_strided_slice %16 {offsets = [0, 0, 16], sizes = [2, 8, 16], strides = [1, 1, 1]} : vector<2x8x128xf32> to vector<2x8x16xf32>
    %19 = vector.extract_strided_slice %16 {offsets = [0, 0, 32], sizes = [2, 8, 16], strides = [1, 1, 1]} : vector<2x8x128xf32> to vector<2x8x16xf32>
    %20 = vector.extract_strided_slice %16 {offsets = [0, 0, 48], sizes = [2, 8, 16], strides = [1, 1, 1]} : vector<2x8x128xf32> to vector<2x8x16xf32>
    %21 = vector.extract_strided_slice %16 {offsets = [0, 0, 64], sizes = [2, 8, 16], strides = [1, 1, 1]} : vector<2x8x128xf32> to vector<2x8x16xf32>
    %22 = vector.extract_strided_slice %16 {offsets = [0, 0, 80], sizes = [2, 8, 16], strides = [1, 1, 1]} : vector<2x8x128xf32> to vector<2x8x16xf32>
    %23 = vector.extract_strided_slice %16 {offsets = [0, 0, 96], sizes = [2, 8, 16], strides = [1, 1, 1]} : vector<2x8x128xf32> to vector<2x8x16xf32>
    %24 = vector.extract_strided_slice %16 {offsets = [0, 0, 112], sizes = [2, 8, 16], strides = [1, 1, 1]} : vector<2x8x128xf32> to vector<2x8x16xf32>
    %25 = vector.shape_cast %17 : vector<2x8x16xf32> to vector<2x1x8x16xf32>
    %26 = vector.shape_cast %18 : vector<2x8x16xf32> to vector<2x1x8x16xf32>
    %27 = vector.shape_cast %19 : vector<2x8x16xf32> to vector<2x1x8x16xf32>
    %28 = vector.shape_cast %20 : vector<2x8x16xf32> to vector<2x1x8x16xf32>
    %29 = vector.shape_cast %21 : vector<2x8x16xf32> to vector<2x1x8x16xf32>
    %30 = vector.shape_cast %22 : vector<2x8x16xf32> to vector<2x1x8x16xf32>
    %31 = vector.shape_cast %23 : vector<2x8x16xf32> to vector<2x1x8x16xf32>
    %32 = vector.shape_cast %24 : vector<2x8x16xf32> to vector<2x1x8x16xf32>
    %33 = tpu.concatenate %25, %26, %27, %28, %29, %30, %31, %32 in 1 : vector<2x1x8x16xf32>, vector<2x1x8x16xf32>, vector<2x1x8x16xf32>, vector<2x1x8x16xf32>, vector<2x1x8x16xf32>, vector<2x1x8x16xf32>, vector<2x1x8x16xf32>, vector<2x1x8x16xf32> -> vector<2x8x8x16xf32>
    %34 = vector.shape_cast %33 : vector<2x8x8x16xf32> to vector<16x8x16xf32>
    %35 = vector.extract_strided_slice %14 {offsets = [0, 128], sizes = [16, 128], strides = [1, 1]} : vector<16x384xf32> to vector<16x128xf32>
    %36 = vector.shape_cast %35 : vector<16x128xf32> to vector<2x8x128xf32>
    %37 = vector.extract_strided_slice %36 {offsets = [0, 0, 0], sizes = [2, 8, 16], strides = [1, 1, 1]} : vector<2x8x128xf32> to vector<2x8x16xf32>
    %38 = vector.extract_strided_slice %36 {offsets = [0, 0, 16], sizes = [2, 8, 16], strides = [1, 1, 1]} : vector<2x8x128xf32> to vector<2x8x16xf32>
    %39 = vector.extract_strided_slice %36 {offsets = [0, 0, 32], sizes = [2, 8, 16], strides = [1, 1, 1]} : vector<2x8x128xf32> to vector<2x8x16xf32>
    %40 = vector.extract_strided_slice %36 {offsets = [0, 0, 48], sizes = [2, 8, 16], strides = [1, 1, 1]} : vector<2x8x128xf32> to vector<2x8x16xf32>
    %41 = vector.extract_strided_slice %36 {offsets = [0, 0, 64], sizes = [2, 8, 16], strides = [1, 1, 1]} : vector<2x8x128xf32> to vector<2x8x16xf32>
    %42 = vector.extract_strided_slice %36 {offsets = [0, 0, 80], sizes = [2, 8, 16], strides = [1, 1, 1]} : vector<2x8x128xf32> to vector<2x8x16xf32>
    %43 = vector.extract_strided_slice %36 {offsets = [0, 0, 96], sizes = [2, 8, 16], strides = [1, 1, 1]} : vector<2x8x128xf32> to vector<2x8x16xf32>
    %44 = vector.extract_strided_slice %36 {offsets = [0, 0, 112], sizes = [2, 8, 16], strides = [1, 1, 1]} : vector<2x8x128xf32> to vector<2x8x16xf32>
    %45 = vector.shape_cast %37 : vector<2x8x16xf32> to vector<2x1x8x16xf32>
    %46 = vector.shape_cast %38 : vector<2x8x16xf32> to vector<2x1x8x16xf32>
    %47 = vector.shape_cast %39 : vector<2x8x16xf32> to vector<2x1x8x16xf32>
    %48 = vector.shape_cast %40 : vector<2x8x16xf32> to vector<2x1x8x16xf32>
    %49 = vector.shape_cast %41 : vector<2x8x16xf32> to vector<2x1x8x16xf32>
    %50 = vector.shape_cast %42 : vector<2x8x16xf32> to vector<2x1x8x16xf32>
    %51 = vector.shape_cast %43 : vector<2x8x16xf32> to vector<2x1x8x16xf32>
    %52 = vector.shape_cast %44 : vector<2x8x16xf32> to vector<2x1x8x16xf32>
    %53 = tpu.concatenate %45, %46, %47, %48, %49, %50, %51, %52 in 1 : vector<2x1x8x16xf32>, vector<2x1x8x16xf32>, vector<2x1x8x16xf32>, vector<2x1x8x16xf32>, vector<2x1x8x16xf32>, vector<2x1x8x16xf32>, vector<2x1x8x16xf32>, vector<2x1x8x16xf32> -> vector<2x8x8x16xf32>
    %54 = vector.shape_cast %53 : vector<2x8x8x16xf32> to vector<16x8x16xf32>
    %55 = vector.extract_strided_slice %14 {offsets = [0, 256], sizes = [16, 128], strides = [1, 1]} : vector<16x384xf32> to vector<16x128xf32>
    %56 = vector.shape_cast %55 : vector<16x128xf32> to vector<2x8x128xf32>
    %57 = vector.extract_strided_slice %56 {offsets = [0, 0, 0], sizes = [2, 8, 16], strides = [1, 1, 1]} : vector<2x8x128xf32> to vector<2x8x16xf32>
    %58 = vector.extract_strided_slice %56 {offsets = [0, 0, 16], sizes = [2, 8, 16], strides = [1, 1, 1]} : vector<2x8x128xf32> to vector<2x8x16xf32>
    %59 = vector.extract_strided_slice %56 {offsets = [0, 0, 32], sizes = [2, 8, 16], strides = [1, 1, 1]} : vector<2x8x128xf32> to vector<2x8x16xf32>
    %60 = vector.extract_strided_slice %56 {offsets = [0, 0, 48], sizes = [2, 8, 16], strides = [1, 1, 1]} : vector<2x8x128xf32> to vector<2x8x16xf32>
    %61 = vector.extract_strided_slice %56 {offsets = [0, 0, 64], sizes = [2, 8, 16], strides = [1, 1, 1]} : vector<2x8x128xf32> to vector<2x8x16xf32>
    %62 = vector.extract_strided_slice %56 {offsets = [0, 0, 80], sizes = [2, 8, 16], strides = [1, 1, 1]} : vector<2x8x128xf32> to vector<2x8x16xf32>
    %63 = vector.extract_strided_slice %56 {offsets = [0, 0, 96], sizes = [2, 8, 16], strides = [1, 1, 1]} : vector<2x8x128xf32> to vector<2x8x16xf32>
    %64 = vector.extract_strided_slice %56 {offsets = [0, 0, 112], sizes = [2, 8, 16], strides = [1, 1, 1]} : vector<2x8x128xf32> to vector<2x8x16xf32>
    %65 = vector.shape_cast %57 : vector<2x8x16xf32> to vector<2x1x8x16xf32>
    %66 = vector.shape_cast %58 : vector<2x8x16xf32> to vector<2x1x8x16xf32>
    %67 = vector.shape_cast %59 : vector<2x8x16xf32> to vector<2x1x8x16xf32>
    %68 = vector.shape_cast %60 : vector<2x8x16xf32> to vector<2x1x8x16xf32>
    %69 = vector.shape_cast %61 : vector<2x8x16xf32> to vector<2x1x8x16xf32>
    %70 = vector.shape_cast %62 : vector<2x8x16xf32> to vector<2x1x8x16xf32>
    %71 = vector.shape_cast %63 : vector<2x8x16xf32> to vector<2x1x8x16xf32>
    %72 = vector.shape_cast %64 : vector<2x8x16xf32> to vector<2x1x8x16xf32>
    %73 = tpu.concatenate %65, %66, %67, %68, %69, %70, %71, %72 in 1 : vector<2x1x8x16xf32>, vector<2x1x8x16xf32>, vector<2x1x8x16xf32>, vector<2x1x8x16xf32>, vector<2x1x8x16xf32>, vector<2x1x8x16xf32>, vector<2x1x8x16xf32>, vector<2x1x8x16xf32> -> vector<2x8x8x16xf32>
    %74 = vector.shape_cast %73 : vector<2x8x8x16xf32> to vector<16x8x16xf32>
    "tpu.trace_start"() <{level = 10 : i32, message = "nqd,nkd->nqk"}> : () -> ()
    %cst_14 = arith.constant dense<0.000000e+00> : vector<16x8x8xf32>
    %75 = tpu.matmul %34, %54, %cst_14 {dimension_numbers = #tpu.dot_dimension_numbers<[2], [2], [1], [1], [0, 0, 0, 1, 1, 1], [0], [0]>} : vector<16x8x16xf32>, vector<16x8x16xf32>, vector<16x8x8xf32> -> vector<16x8x8xf32>
    "tpu.trace_stop"() : () -> ()
    %cst_15 = arith.constant 2.500000e-01 : f32
    %76 = vector.broadcast %cst_15 : f32 to vector<16x8x8xf32>
    %77 = arith.mulf %75, %76 : vector<16x8x8xf32>
    %cst_16 = arith.constant dense<0xFF800000> : vector<16x8xf32>
    %78 = vector.multi_reduction <maximumf>, %77, %cst_16 [2] : vector<16x8x8xf32> to vector<16x8xf32>
    %79 = vector.shape_cast %78 : vector<16x8xf32> to vector<16x8x1xf32>
    %80 = vector.broadcast %79 : vector<16x8x1xf32> to vector<16x8x8xf32>
    %81 = arith.subf %77, %80 : vector<16x8x8xf32>
    %82 = math.exp %81 : vector<16x8x8xf32>
    %cst_17 = arith.constant dense<0.000000e+00> : vector<16x8xf32>
    %83 = vector.multi_reduction <add>, %82, %cst_17 [2] : vector<16x8x8xf32> to vector<16x8xf32>
    %84 = vector.shape_cast %83 : vector<16x8xf32> to vector<16x8x1xf32>
    %cst_18 = arith.constant 1.000000e+00 : f32
    %85 = vector.broadcast %cst_18 : f32 to vector<16x8x1xf32>
    %86 = arith.divf %85, %84 : vector<16x8x1xf32>
    %87 = vector.broadcast %86 : vector<16x8x1xf32> to vector<16x8x8xf32>
    %88 = arith.mulf %82, %87 : vector<16x8x8xf32>
    "tpu.trace_start"() <{level = 10 : i32, message = "nqk,nkd->nqd"}> : () -> ()
    %cst_19 = arith.constant dense<0.000000e+00> : vector<16x8x16xf32>
    %89 = tpu.matmul %88, %74, %cst_19 {dimension_numbers = #tpu.dot_dimension_numbers<[2], [1], [1], [2], [0, 0, 0, 1, 1, 2], [0], [0]>} : vector<16x8x8xf32>, vector<16x8x16xf32>, vector<16x8x16xf32> -> vector<16x8x16xf32>
    "tpu.trace_stop"() : () -> ()
    %90 = vector.shape_cast %89 : vector<16x8x16xf32> to vector<2x8x8x16xf32>
    %91 = vector.extract_strided_slice %90 {offsets = [0, 0, 0, 0], sizes = [2, 1, 8, 16], strides = [1, 1, 1, 1]} : vector<2x8x8x16xf32> to vector<2x1x8x16xf32>
    %92 = vector.shape_cast %91 : vector<2x1x8x16xf32> to vector<2x8x16xf32>
    %93 = vector.extract_strided_slice %90 {offsets = [0, 1, 0, 0], sizes = [2, 1, 8, 16], strides = [1, 1, 1, 1]} : vector<2x8x8x16xf32> to vector<2x1x8x16xf32>
    %94 = vector.shape_cast %93 : vector<2x1x8x16xf32> to vector<2x8x16xf32>
    %95 = vector.extract_strided_slice %90 {offsets = [0, 2, 0, 0], sizes = [2, 1, 8, 16], strides = [1, 1, 1, 1]} : vector<2x8x8x16xf32> to vector<2x1x8x16xf32>
    %96 = vector.shape_cast %95 : vector<2x1x8x16xf32> to vector<2x8x16xf32>
    %97 = vector.extract_strided_slice %90 {offsets = [0, 3, 0, 0], sizes = [2, 1, 8, 16], strides = [1, 1, 1, 1]} : vector<2x8x8x16xf32> to vector<2x1x8x16xf32>
    %98 = vector.shape_cast %97 : vector<2x1x8x16xf32> to vector<2x8x16xf32>
    %99 = vector.extract_strided_slice %90 {offsets = [0, 4, 0, 0], sizes = [2, 1, 8, 16], strides = [1, 1, 1, 1]} : vector<2x8x8x16xf32> to vector<2x1x8x16xf32>
    %100 = vector.shape_cast %99 : vector<2x1x8x16xf32> to vector<2x8x16xf32>
    %101 = vector.extract_strided_slice %90 {offsets = [0, 5, 0, 0], sizes = [2, 1, 8, 16], strides = [1, 1, 1, 1]} : vector<2x8x8x16xf32> to vector<2x1x8x16xf32>
    %102 = vector.shape_cast %101 : vector<2x1x8x16xf32> to vector<2x8x16xf32>
    %103 = vector.extract_strided_slice %90 {offsets = [0, 6, 0, 0], sizes = [2, 1, 8, 16], strides = [1, 1, 1, 1]} : vector<2x8x8x16xf32> to vector<2x1x8x16xf32>
    %104 = vector.shape_cast %103 : vector<2x1x8x16xf32> to vector<2x8x16xf32>
    %105 = vector.extract_strided_slice %90 {offsets = [0, 7, 0, 0], sizes = [2, 1, 8, 16], strides = [1, 1, 1, 1]} : vector<2x8x8x16xf32> to vector<2x1x8x16xf32>
    %106 = vector.shape_cast %105 : vector<2x1x8x16xf32> to vector<2x8x16xf32>
    %107 = tpu.concatenate %92, %94, %96, %98, %100, %102, %104, %106 in 2 : vector<2x8x16xf32>, vector<2x8x16xf32>, vector<2x8x16xf32>, vector<2x8x16xf32>, vector<2x8x16xf32>, vector<2x8x16xf32>, vector<2x8x16xf32>, vector<2x8x16xf32> -> vector<2x8x128xf32>
    %108 = vector.shape_cast %107 : vector<2x8x128xf32> to vector<16x128xf32>
    %c0_20 = arith.constant 0 : index
    %c0_21 = arith.constant 0 : index
    %c0_22 = arith.constant 0 : index
    %109 = vector.load %arg6[%c0_20, %c0_21, %c0_22] : memref<2x128x128xf32, #tpu.memory_space<vmem>>, vector<1x128x128xf32>
    %110 = vector.shape_cast %109 : vector<1x128x128xf32> to vector<128x128xf32>
    %cst_23 = arith.constant dense<0.000000e+00> : vector<16x128xf32>
    %111 = tpu.matmul %108, %110, %cst_23 {dimension_numbers = #tpu.dot_dimension_numbers<[1], [0], [0], [1], [0, 0, 1, 1], [], []>} : vector<16x128xf32>, vector<128x128xf32>, vector<16x128xf32> -> vector<16x128xf32>
    %c0_24 = arith.constant 0 : index
    %c0_25 = arith.constant 0 : index
    %c0_26 = arith.constant 0 : index
    %112 = vector.load %arg7[%c0_24, %c0_25, %c0_26] : memref<2x1x128xf32, #tpu.memory_space<vmem>>, vector<1x1x128xf32>
    %113 = vector.shape_cast %112 : vector<1x1x128xf32> to vector<1x128xf32>
    %114 = vector.broadcast %113 : vector<1x128xf32> to vector<16x128xf32>
    %115 = arith.addf %111, %114 : vector<16x128xf32>
    %116 = arith.addf %7, %115 : vector<16x128xf32>
    %c0_27 = arith.constant 0 : index
    %c0_28 = arith.constant 0 : index
    %c0_29 = arith.constant 0 : index
    %117 = vector.load %arg8[%c0_27, %c0_28, %c0_29] : memref<2x1x128xf32, #tpu.memory_space<vmem>>, vector<1x1x128xf32>
    %118 = vector.shape_cast %117 : vector<1x1x128xf32> to vector<1x128xf32>
    %c0_30 = arith.constant 0 : index
    %c0_31 = arith.constant 0 : index
    %c0_32 = arith.constant 0 : index
    %119 = vector.load %arg9[%c0_30, %c0_31, %c0_32] : memref<2x1x128xf32, #tpu.memory_space<vmem>>, vector<1x1x128xf32>
    %120 = vector.shape_cast %119 : vector<1x1x128xf32> to vector<1x128xf32>
    %cst_33 = arith.constant dense<0.000000e+00> : vector<16xf32>
    %121 = vector.multi_reduction <add>, %116, %cst_33 [1] : vector<16x128xf32> to vector<16xf32>
    %122 = vector.shape_cast %121 : vector<16xf32> to vector<16x1xf32>
    %cst_34 = arith.constant 1.280000e+02 : f32
    %123 = vector.broadcast %cst_34 : f32 to vector<16x1xf32>
    %124 = arith.divf %122, %123 : vector<16x1xf32>
    %125 = vector.broadcast %124 : vector<16x1xf32> to vector<16x128xf32>
    %126 = arith.subf %116, %125 : vector<16x128xf32>
    %127 = arith.mulf %126, %126 : vector<16x128xf32>
    %cst_35 = arith.constant dense<0.000000e+00> : vector<16xf32>
    %128 = vector.multi_reduction <add>, %127, %cst_35 [1] : vector<16x128xf32> to vector<16xf32>
    %129 = vector.shape_cast %128 : vector<16xf32> to vector<16x1xf32>
    %cst_36 = arith.constant 1.280000e+02 : f32
    %130 = vector.broadcast %cst_36 : f32 to vector<16x1xf32>
    %131 = arith.divf %129, %130 : vector<16x1xf32>
    %132 = vector.broadcast %124 : vector<16x1xf32> to vector<16x128xf32>
    %133 = arith.subf %116, %132 : vector<16x128xf32>
    %cst_37 = arith.constant 9.99999974E-6 : f32
    %134 = vector.broadcast %cst_37 : f32 to vector<16x1xf32>
    %135 = arith.addf %131, %134 : vector<16x1xf32>
    %136 = math.rsqrt %135 : vector<16x1xf32>
    %137 = vector.broadcast %136 : vector<16x1xf32> to vector<16x128xf32>
    %138 = arith.mulf %133, %137 : vector<16x128xf32>
    %139 = vector.broadcast %118 : vector<1x128xf32> to vector<16x128xf32>
    %140 = arith.mulf %138, %139 : vector<16x128xf32>
    %141 = vector.broadcast %120 : vector<1x128xf32> to vector<16x128xf32>
    %142 = arith.addf %140, %141 : vector<16x128xf32>
    %c0_38 = arith.constant 0 : index
    %c0_39 = arith.constant 0 : index
    %c0_40 = arith.constant 0 : index
    %143 = vector.load %arg10[%c0_38, %c0_39, %c0_40] : memref<2x128x256xf32, #tpu.memory_space<vmem>>, vector<1x128x256xf32>
    %144 = vector.shape_cast %143 : vector<1x128x256xf32> to vector<128x256xf32>
    %cst_41 = arith.constant dense<0.000000e+00> : vector<16x256xf32>
    %145 = tpu.matmul %142, %144, %cst_41 {dimension_numbers = #tpu.dot_dimension_numbers<[1], [0], [0], [1], [0, 0, 1, 1], [], []>} : vector<16x128xf32>, vector<128x256xf32>, vector<16x256xf32> -> vector<16x256xf32>
    %c0_42 = arith.constant 0 : index
    %c0_43 = arith.constant 0 : index
    %c0_44 = arith.constant 0 : index
    %146 = vector.load %arg11[%c0_42, %c0_43, %c0_44] : memref<2x1x256xf32, #tpu.memory_space<vmem>>, vector<1x1x256xf32>
    %147 = vector.shape_cast %146 : vector<1x1x256xf32> to vector<1x256xf32>
    %148 = vector.broadcast %147 : vector<1x256xf32> to vector<16x256xf32>
    %149 = arith.addf %145, %148 : vector<16x256xf32>
    %cst_45 = arith.constant 0.000000e+00 : f32
    %150 = vector.broadcast %cst_45 : f32 to vector<16x256xf32>
    %151 = arith.maximumf %149, %150 : vector<16x256xf32>
    %c0_46 = arith.constant 0 : index
    %c0_47 = arith.constant 0 : index
    %c0_48 = arith.constant 0 : index
    %152 = vector.load %arg12[%c0_46, %c0_47, %c0_48] : memref<2x256x128xf32, #tpu.memory_space<vmem>>, vector<1x256x128xf32>
    %153 = vector.shape_cast %152 : vector<1x256x128xf32> to vector<256x128xf32>
    %cst_49 = arith.constant dense<0.000000e+00> : vector<16x128xf32>
    %154 = tpu.matmul %151, %153, %cst_49 {dimension_numbers = #tpu.dot_dimension_numbers<[1], [0], [0], [1], [0, 0, 1, 1], [], []>} : vector<16x256xf32>, vector<256x128xf32>, vector<16x128xf32> -> vector<16x128xf32>
    %c0_50 = arith.constant 0 : index
    %c0_51 = arith.constant 0 : index
    %c0_52 = arith.constant 0 : index
    %155 = vector.load %arg13[%c0_50, %c0_51, %c0_52] : memref<2x1x128xf32, #tpu.memory_space<vmem>>, vector<1x1x128xf32>
    %156 = vector.shape_cast %155 : vector<1x1x128xf32> to vector<1x128xf32>
    %157 = vector.broadcast %156 : vector<1x128xf32> to vector<16x128xf32>
    %158 = arith.addf %154, %157 : vector<16x128xf32>
    %159 = arith.addf %142, %158 : vector<16x128xf32>
    %c0_53 = arith.constant 0 : index
    %c0_54 = arith.constant 0 : index
    %c0_55 = arith.constant 0 : index
    %160 = vector.load %arg14[%c0_53, %c0_54, %c0_55] : memref<2x1x128xf32, #tpu.memory_space<vmem>>, vector<1x1x128xf32>
    %161 = vector.shape_cast %160 : vector<1x1x128xf32> to vector<1x128xf32>
    %c0_56 = arith.constant 0 : index
    %c0_57 = arith.constant 0 : index
    %c0_58 = arith.constant 0 : index
    %162 = vector.load %arg15[%c0_56, %c0_57, %c0_58] : memref<2x1x128xf32, #tpu.memory_space<vmem>>, vector<1x1x128xf32>
    %163 = vector.shape_cast %162 : vector<1x1x128xf32> to vector<1x128xf32>
    %cst_59 = arith.constant dense<0.000000e+00> : vector<16xf32>
    %164 = vector.multi_reduction <add>, %159, %cst_59 [1] : vector<16x128xf32> to vector<16xf32>
    %165 = vector.shape_cast %164 : vector<16xf32> to vector<16x1xf32>
    %cst_60 = arith.constant 1.280000e+02 : f32
    %166 = vector.broadcast %cst_60 : f32 to vector<16x1xf32>
    %167 = arith.divf %165, %166 : vector<16x1xf32>
    %168 = vector.broadcast %167 : vector<16x1xf32> to vector<16x128xf32>
    %169 = arith.subf %159, %168 : vector<16x128xf32>
    %170 = arith.mulf %169, %169 : vector<16x128xf32>
    %cst_61 = arith.constant dense<0.000000e+00> : vector<16xf32>
    %171 = vector.multi_reduction <add>, %170, %cst_61 [1] : vector<16x128xf32> to vector<16xf32>
    %172 = vector.shape_cast %171 : vector<16xf32> to vector<16x1xf32>
    %cst_62 = arith.constant 1.280000e+02 : f32
    %173 = vector.broadcast %cst_62 : f32 to vector<16x1xf32>
    %174 = arith.divf %172, %173 : vector<16x1xf32>
    %175 = vector.broadcast %167 : vector<16x1xf32> to vector<16x128xf32>
    %176 = arith.subf %159, %175 : vector<16x128xf32>
    %cst_63 = arith.constant 9.99999974E-6 : f32
    %177 = vector.broadcast %cst_63 : f32 to vector<16x1xf32>
    %178 = arith.addf %174, %177 : vector<16x1xf32>
    %179 = math.rsqrt %178 : vector<16x1xf32>
    %180 = vector.broadcast %179 : vector<16x1xf32> to vector<16x128xf32>
    %181 = arith.mulf %176, %180 : vector<16x128xf32>
    %182 = vector.broadcast %161 : vector<1x128xf32> to vector<16x128xf32>
    %183 = arith.mulf %181, %182 : vector<16x128xf32>
    %184 = vector.broadcast %163 : vector<1x128xf32> to vector<16x128xf32>
    %185 = arith.addf %183, %184 : vector<16x128xf32>
    %c1 = arith.constant 1 : index
    %c0_64 = arith.constant 0 : index
    %c0_65 = arith.constant 0 : index
    %186 = vector.load %arg4[%c1, %c0_64, %c0_65] : memref<2x128x384xf32, #tpu.memory_space<vmem>>, vector<1x128x384xf32>
    %187 = vector.shape_cast %186 : vector<1x128x384xf32> to vector<128x384xf32>
    %cst_66 = arith.constant dense<0.000000e+00> : vector<16x384xf32>
    %188 = tpu.matmul %185, %187, %cst_66 {dimension_numbers = #tpu.dot_dimension_numbers<[1], [0], [0], [1], [0, 0, 1, 1], [], []>} : vector<16x128xf32>, vector<128x384xf32>, vector<16x384xf32> -> vector<16x384xf32>
    %c1_67 = arith.constant 1 : index
    %c0_68 = arith.constant 0 : index
    %c0_69 = arith.constant 0 : index
    %189 = vector.load %arg5[%c1_67, %c0_68, %c0_69] : memref<2x1x384xf32, #tpu.memory_space<vmem>>, vector<1x1x384xf32>
    %190 = vector.shape_cast %189 : vector<1x1x384xf32> to vector<1x384xf32>
    %191 = vector.broadcast %190 : vector<1x384xf32> to vector<16x384xf32>
    %192 = arith.addf %188, %191 : vector<16x384xf32>
    %193 = vector.extract_strided_slice %192 {offsets = [0, 0], sizes = [16, 128], strides = [1, 1]} : vector<16x384xf32> to vector<16x128xf32>
    %194 = vector.shape_cast %193 : vector<16x128xf32> to vector<2x8x128xf32>
    %195 = vector.extract_strided_slice %194 {offsets = [0, 0, 0], sizes = [2, 8, 16], strides = [1, 1, 1]} : vector<2x8x128xf32> to vector<2x8x16xf32>
    %196 = vector.extract_strided_slice %194 {offsets = [0, 0, 16], sizes = [2, 8, 16], strides = [1, 1, 1]} : vector<2x8x128xf32> to vector<2x8x16xf32>
    %197 = vector.extract_strided_slice %194 {offsets = [0, 0, 32], sizes = [2, 8, 16], strides = [1, 1, 1]} : vector<2x8x128xf32> to vector<2x8x16xf32>
    %198 = vector.extract_strided_slice %194 {offsets = [0, 0, 48], sizes = [2, 8, 16], strides = [1, 1, 1]} : vector<2x8x128xf32> to vector<2x8x16xf32>
    %199 = vector.extract_strided_slice %194 {offsets = [0, 0, 64], sizes = [2, 8, 16], strides = [1, 1, 1]} : vector<2x8x128xf32> to vector<2x8x16xf32>
    %200 = vector.extract_strided_slice %194 {offsets = [0, 0, 80], sizes = [2, 8, 16], strides = [1, 1, 1]} : vector<2x8x128xf32> to vector<2x8x16xf32>
    %201 = vector.extract_strided_slice %194 {offsets = [0, 0, 96], sizes = [2, 8, 16], strides = [1, 1, 1]} : vector<2x8x128xf32> to vector<2x8x16xf32>
    %202 = vector.extract_strided_slice %194 {offsets = [0, 0, 112], sizes = [2, 8, 16], strides = [1, 1, 1]} : vector<2x8x128xf32> to vector<2x8x16xf32>
    %203 = vector.shape_cast %195 : vector<2x8x16xf32> to vector<2x1x8x16xf32>
    %204 = vector.shape_cast %196 : vector<2x8x16xf32> to vector<2x1x8x16xf32>
    %205 = vector.shape_cast %197 : vector<2x8x16xf32> to vector<2x1x8x16xf32>
    %206 = vector.shape_cast %198 : vector<2x8x16xf32> to vector<2x1x8x16xf32>
    %207 = vector.shape_cast %199 : vector<2x8x16xf32> to vector<2x1x8x16xf32>
    %208 = vector.shape_cast %200 : vector<2x8x16xf32> to vector<2x1x8x16xf32>
    %209 = vector.shape_cast %201 : vector<2x8x16xf32> to vector<2x1x8x16xf32>
    %210 = vector.shape_cast %202 : vector<2x8x16xf32> to vector<2x1x8x16xf32>
    %211 = tpu.concatenate %203, %204, %205, %206, %207, %208, %209, %210 in 1 : vector<2x1x8x16xf32>, vector<2x1x8x16xf32>, vector<2x1x8x16xf32>, vector<2x1x8x16xf32>, vector<2x1x8x16xf32>, vector<2x1x8x16xf32>, vector<2x1x8x16xf32>, vector<2x1x8x16xf32> -> vector<2x8x8x16xf32>
    %212 = vector.shape_cast %211 : vector<2x8x8x16xf32> to vector<16x8x16xf32>
    %213 = vector.extract_strided_slice %192 {offsets = [0, 128], sizes = [16, 128], strides = [1, 1]} : vector<16x384xf32> to vector<16x128xf32>
    %214 = vector.shape_cast %213 : vector<16x128xf32> to vector<2x8x128xf32>
    %215 = vector.extract_strided_slice %214 {offsets = [0, 0, 0], sizes = [2, 8, 16], strides = [1, 1, 1]} : vector<2x8x128xf32> to vector<2x8x16xf32>
    %216 = vector.extract_strided_slice %214 {offsets = [0, 0, 16], sizes = [2, 8, 16], strides = [1, 1, 1]} : vector<2x8x128xf32> to vector<2x8x16xf32>
    %217 = vector.extract_strided_slice %214 {offsets = [0, 0, 32], sizes = [2, 8, 16], strides = [1, 1, 1]} : vector<2x8x128xf32> to vector<2x8x16xf32>
    %218 = vector.extract_strided_slice %214 {offsets = [0, 0, 48], sizes = [2, 8, 16], strides = [1, 1, 1]} : vector<2x8x128xf32> to vector<2x8x16xf32>
    %219 = vector.extract_strided_slice %214 {offsets = [0, 0, 64], sizes = [2, 8, 16], strides = [1, 1, 1]} : vector<2x8x128xf32> to vector<2x8x16xf32>
    %220 = vector.extract_strided_slice %214 {offsets = [0, 0, 80], sizes = [2, 8, 16], strides = [1, 1, 1]} : vector<2x8x128xf32> to vector<2x8x16xf32>
    %221 = vector.extract_strided_slice %214 {offsets = [0, 0, 96], sizes = [2, 8, 16], strides = [1, 1, 1]} : vector<2x8x128xf32> to vector<2x8x16xf32>
    %222 = vector.extract_strided_slice %214 {offsets = [0, 0, 112], sizes = [2, 8, 16], strides = [1, 1, 1]} : vector<2x8x128xf32> to vector<2x8x16xf32>
    %223 = vector.shape_cast %215 : vector<2x8x16xf32> to vector<2x1x8x16xf32>
    %224 = vector.shape_cast %216 : vector<2x8x16xf32> to vector<2x1x8x16xf32>
    %225 = vector.shape_cast %217 : vector<2x8x16xf32> to vector<2x1x8x16xf32>
    %226 = vector.shape_cast %218 : vector<2x8x16xf32> to vector<2x1x8x16xf32>
    %227 = vector.shape_cast %219 : vector<2x8x16xf32> to vector<2x1x8x16xf32>
    %228 = vector.shape_cast %220 : vector<2x8x16xf32> to vector<2x1x8x16xf32>
    %229 = vector.shape_cast %221 : vector<2x8x16xf32> to vector<2x1x8x16xf32>
    %230 = vector.shape_cast %222 : vector<2x8x16xf32> to vector<2x1x8x16xf32>
    %231 = tpu.concatenate %223, %224, %225, %226, %227, %228, %229, %230 in 1 : vector<2x1x8x16xf32>, vector<2x1x8x16xf32>, vector<2x1x8x16xf32>, vector<2x1x8x16xf32>, vector<2x1x8x16xf32>, vector<2x1x8x16xf32>, vector<2x1x8x16xf32>, vector<2x1x8x16xf32> -> vector<2x8x8x16xf32>
    %232 = vector.shape_cast %231 : vector<2x8x8x16xf32> to vector<16x8x16xf32>
    %233 = vector.extract_strided_slice %192 {offsets = [0, 256], sizes = [16, 128], strides = [1, 1]} : vector<16x384xf32> to vector<16x128xf32>
    %234 = vector.shape_cast %233 : vector<16x128xf32> to vector<2x8x128xf32>
    %235 = vector.extract_strided_slice %234 {offsets = [0, 0, 0], sizes = [2, 8, 16], strides = [1, 1, 1]} : vector<2x8x128xf32> to vector<2x8x16xf32>
    %236 = vector.extract_strided_slice %234 {offsets = [0, 0, 16], sizes = [2, 8, 16], strides = [1, 1, 1]} : vector<2x8x128xf32> to vector<2x8x16xf32>
    %237 = vector.extract_strided_slice %234 {offsets = [0, 0, 32], sizes = [2, 8, 16], strides = [1, 1, 1]} : vector<2x8x128xf32> to vector<2x8x16xf32>
    %238 = vector.extract_strided_slice %234 {offsets = [0, 0, 48], sizes = [2, 8, 16], strides = [1, 1, 1]} : vector<2x8x128xf32> to vector<2x8x16xf32>
    %239 = vector.extract_strided_slice %234 {offsets = [0, 0, 64], sizes = [2, 8, 16], strides = [1, 1, 1]} : vector<2x8x128xf32> to vector<2x8x16xf32>
    %240 = vector.extract_strided_slice %234 {offsets = [0, 0, 80], sizes = [2, 8, 16], strides = [1, 1, 1]} : vector<2x8x128xf32> to vector<2x8x16xf32>
    %241 = vector.extract_strided_slice %234 {offsets = [0, 0, 96], sizes = [2, 8, 16], strides = [1, 1, 1]} : vector<2x8x128xf32> to vector<2x8x16xf32>
    %242 = vector.extract_strided_slice %234 {offsets = [0, 0, 112], sizes = [2, 8, 16], strides = [1, 1, 1]} : vector<2x8x128xf32> to vector<2x8x16xf32>
    %243 = vector.shape_cast %235 : vector<2x8x16xf32> to vector<2x1x8x16xf32>
    %244 = vector.shape_cast %236 : vector<2x8x16xf32> to vector<2x1x8x16xf32>
    %245 = vector.shape_cast %237 : vector<2x8x16xf32> to vector<2x1x8x16xf32>
    %246 = vector.shape_cast %238 : vector<2x8x16xf32> to vector<2x1x8x16xf32>
    %247 = vector.shape_cast %239 : vector<2x8x16xf32> to vector<2x1x8x16xf32>
    %248 = vector.shape_cast %240 : vector<2x8x16xf32> to vector<2x1x8x16xf32>
    %249 = vector.shape_cast %241 : vector<2x8x16xf32> to vector<2x1x8x16xf32>
    %250 = vector.shape_cast %242 : vector<2x8x16xf32> to vector<2x1x8x16xf32>
    %251 = tpu.concatenate %243, %244, %245, %246, %247, %248, %249, %250 in 1 : vector<2x1x8x16xf32>, vector<2x1x8x16xf32>, vector<2x1x8x16xf32>, vector<2x1x8x16xf32>, vector<2x1x8x16xf32>, vector<2x1x8x16xf32>, vector<2x1x8x16xf32>, vector<2x1x8x16xf32> -> vector<2x8x8x16xf32>
    %252 = vector.shape_cast %251 : vector<2x8x8x16xf32> to vector<16x8x16xf32>
    "tpu.trace_start"() <{level = 10 : i32, message = "nqd,nkd->nqk"}> : () -> ()
    %cst_70 = arith.constant dense<0.000000e+00> : vector<16x8x8xf32>
    %253 = tpu.matmul %212, %232, %cst_70 {dimension_numbers = #tpu.dot_dimension_numbers<[2], [2], [1], [1], [0, 0, 0, 1, 1, 1], [0], [0]>} : vector<16x8x16xf32>, vector<16x8x16xf32>, vector<16x8x8xf32> -> vector<16x8x8xf32>
    "tpu.trace_stop"() : () -> ()
    %cst_71 = arith.constant 2.500000e-01 : f32
    %254 = vector.broadcast %cst_71 : f32 to vector<16x8x8xf32>
    %255 = arith.mulf %253, %254 : vector<16x8x8xf32>
    %cst_72 = arith.constant dense<0xFF800000> : vector<16x8xf32>
    %256 = vector.multi_reduction <maximumf>, %255, %cst_72 [2] : vector<16x8x8xf32> to vector<16x8xf32>
    %257 = vector.shape_cast %256 : vector<16x8xf32> to vector<16x8x1xf32>
    %258 = vector.broadcast %257 : vector<16x8x1xf32> to vector<16x8x8xf32>
    %259 = arith.subf %255, %258 : vector<16x8x8xf32>
    %260 = math.exp %259 : vector<16x8x8xf32>
    %cst_73 = arith.constant dense<0.000000e+00> : vector<16x8xf32>
    %261 = vector.multi_reduction <add>, %260, %cst_73 [2] : vector<16x8x8xf32> to vector<16x8xf32>
    %262 = vector.shape_cast %261 : vector<16x8xf32> to vector<16x8x1xf32>
    %cst_74 = arith.constant 1.000000e+00 : f32
    %263 = vector.broadcast %cst_74 : f32 to vector<16x8x1xf32>
    %264 = arith.divf %263, %262 : vector<16x8x1xf32>
    %265 = vector.broadcast %264 : vector<16x8x1xf32> to vector<16x8x8xf32>
    %266 = arith.mulf %260, %265 : vector<16x8x8xf32>
    "tpu.trace_start"() <{level = 10 : i32, message = "nqk,nkd->nqd"}> : () -> ()
    %cst_75 = arith.constant dense<0.000000e+00> : vector<16x8x16xf32>
    %267 = tpu.matmul %266, %252, %cst_75 {dimension_numbers = #tpu.dot_dimension_numbers<[2], [1], [1], [2], [0, 0, 0, 1, 1, 2], [0], [0]>} : vector<16x8x8xf32>, vector<16x8x16xf32>, vector<16x8x16xf32> -> vector<16x8x16xf32>
    "tpu.trace_stop"() : () -> ()
    %268 = vector.shape_cast %267 : vector<16x8x16xf32> to vector<2x8x8x16xf32>
    %269 = vector.extract_strided_slice %268 {offsets = [0, 0, 0, 0], sizes = [2, 1, 8, 16], strides = [1, 1, 1, 1]} : vector<2x8x8x16xf32> to vector<2x1x8x16xf32>
    %270 = vector.shape_cast %269 : vector<2x1x8x16xf32> to vector<2x8x16xf32>
    %271 = vector.extract_strided_slice %268 {offsets = [0, 1, 0, 0], sizes = [2, 1, 8, 16], strides = [1, 1, 1, 1]} : vector<2x8x8x16xf32> to vector<2x1x8x16xf32>
    %272 = vector.shape_cast %271 : vector<2x1x8x16xf32> to vector<2x8x16xf32>
    %273 = vector.extract_strided_slice %268 {offsets = [0, 2, 0, 0], sizes = [2, 1, 8, 16], strides = [1, 1, 1, 1]} : vector<2x8x8x16xf32> to vector<2x1x8x16xf32>
    %274 = vector.shape_cast %273 : vector<2x1x8x16xf32> to vector<2x8x16xf32>
    %275 = vector.extract_strided_slice %268 {offsets = [0, 3, 0, 0], sizes = [2, 1, 8, 16], strides = [1, 1, 1, 1]} : vector<2x8x8x16xf32> to vector<2x1x8x16xf32>
    %276 = vector.shape_cast %275 : vector<2x1x8x16xf32> to vector<2x8x16xf32>
    %277 = vector.extract_strided_slice %268 {offsets = [0, 4, 0, 0], sizes = [2, 1, 8, 16], strides = [1, 1, 1, 1]} : vector<2x8x8x16xf32> to vector<2x1x8x16xf32>
    %278 = vector.shape_cast %277 : vector<2x1x8x16xf32> to vector<2x8x16xf32>
    %279 = vector.extract_strided_slice %268 {offsets = [0, 5, 0, 0], sizes = [2, 1, 8, 16], strides = [1, 1, 1, 1]} : vector<2x8x8x16xf32> to vector<2x1x8x16xf32>
    %280 = vector.shape_cast %279 : vector<2x1x8x16xf32> to vector<2x8x16xf32>
    %281 = vector.extract_strided_slice %268 {offsets = [0, 6, 0, 0], sizes = [2, 1, 8, 16], strides = [1, 1, 1, 1]} : vector<2x8x8x16xf32> to vector<2x1x8x16xf32>
    %282 = vector.shape_cast %281 : vector<2x1x8x16xf32> to vector<2x8x16xf32>
    %283 = vector.extract_strided_slice %268 {offsets = [0, 7, 0, 0], sizes = [2, 1, 8, 16], strides = [1, 1, 1, 1]} : vector<2x8x8x16xf32> to vector<2x1x8x16xf32>
    %284 = vector.shape_cast %283 : vector<2x1x8x16xf32> to vector<2x8x16xf32>
    %285 = tpu.concatenate %270, %272, %274, %276, %278, %280, %282, %284 in 2 : vector<2x8x16xf32>, vector<2x8x16xf32>, vector<2x8x16xf32>, vector<2x8x16xf32>, vector<2x8x16xf32>, vector<2x8x16xf32>, vector<2x8x16xf32>, vector<2x8x16xf32> -> vector<2x8x128xf32>
    %286 = vector.shape_cast %285 : vector<2x8x128xf32> to vector<16x128xf32>
    %c1_76 = arith.constant 1 : index
    %c0_77 = arith.constant 0 : index
    %c0_78 = arith.constant 0 : index
    %287 = vector.load %arg6[%c1_76, %c0_77, %c0_78] : memref<2x128x128xf32, #tpu.memory_space<vmem>>, vector<1x128x128xf32>
    %288 = vector.shape_cast %287 : vector<1x128x128xf32> to vector<128x128xf32>
    %cst_79 = arith.constant dense<0.000000e+00> : vector<16x128xf32>
    %289 = tpu.matmul %286, %288, %cst_79 {dimension_numbers = #tpu.dot_dimension_numbers<[1], [0], [0], [1], [0, 0, 1, 1], [], []>} : vector<16x128xf32>, vector<128x128xf32>, vector<16x128xf32> -> vector<16x128xf32>
    %c1_80 = arith.constant 1 : index
    %c0_81 = arith.constant 0 : index
    %c0_82 = arith.constant 0 : index
    %290 = vector.load %arg7[%c1_80, %c0_81, %c0_82] : memref<2x1x128xf32, #tpu.memory_space<vmem>>, vector<1x1x128xf32>
    %291 = vector.shape_cast %290 : vector<1x1x128xf32> to vector<1x128xf32>
    %292 = vector.broadcast %291 : vector<1x128xf32> to vector<16x128xf32>
    %293 = arith.addf %289, %292 : vector<16x128xf32>
    %294 = arith.addf %185, %293 : vector<16x128xf32>
    %c1_83 = arith.constant 1 : index
    %c0_84 = arith.constant 0 : index
    %c0_85 = arith.constant 0 : index
    %295 = vector.load %arg8[%c1_83, %c0_84, %c0_85] : memref<2x1x128xf32, #tpu.memory_space<vmem>>, vector<1x1x128xf32>
    %296 = vector.shape_cast %295 : vector<1x1x128xf32> to vector<1x128xf32>
    %c1_86 = arith.constant 1 : index
    %c0_87 = arith.constant 0 : index
    %c0_88 = arith.constant 0 : index
    %297 = vector.load %arg9[%c1_86, %c0_87, %c0_88] : memref<2x1x128xf32, #tpu.memory_space<vmem>>, vector<1x1x128xf32>
    %298 = vector.shape_cast %297 : vector<1x1x128xf32> to vector<1x128xf32>
    %cst_89 = arith.constant dense<0.000000e+00> : vector<16xf32>
    %299 = vector.multi_reduction <add>, %294, %cst_89 [1] : vector<16x128xf32> to vector<16xf32>
    %300 = vector.shape_cast %299 : vector<16xf32> to vector<16x1xf32>
    %cst_90 = arith.constant 1.280000e+02 : f32
    %301 = vector.broadcast %cst_90 : f32 to vector<16x1xf32>
    %302 = arith.divf %300, %301 : vector<16x1xf32>
    %303 = vector.broadcast %302 : vector<16x1xf32> to vector<16x128xf32>
    %304 = arith.subf %294, %303 : vector<16x128xf32>
    %305 = arith.mulf %304, %304 : vector<16x128xf32>
    %cst_91 = arith.constant dense<0.000000e+00> : vector<16xf32>
    %306 = vector.multi_reduction <add>, %305, %cst_91 [1] : vector<16x128xf32> to vector<16xf32>
    %307 = vector.shape_cast %306 : vector<16xf32> to vector<16x1xf32>
    %cst_92 = arith.constant 1.280000e+02 : f32
    %308 = vector.broadcast %cst_92 : f32 to vector<16x1xf32>
    %309 = arith.divf %307, %308 : vector<16x1xf32>
    %310 = vector.broadcast %302 : vector<16x1xf32> to vector<16x128xf32>
    %311 = arith.subf %294, %310 : vector<16x128xf32>
    %cst_93 = arith.constant 9.99999974E-6 : f32
    %312 = vector.broadcast %cst_93 : f32 to vector<16x1xf32>
    %313 = arith.addf %309, %312 : vector<16x1xf32>
    %314 = math.rsqrt %313 : vector<16x1xf32>
    %315 = vector.broadcast %314 : vector<16x1xf32> to vector<16x128xf32>
    %316 = arith.mulf %311, %315 : vector<16x128xf32>
    %317 = vector.broadcast %296 : vector<1x128xf32> to vector<16x128xf32>
    %318 = arith.mulf %316, %317 : vector<16x128xf32>
    %319 = vector.broadcast %298 : vector<1x128xf32> to vector<16x128xf32>
    %320 = arith.addf %318, %319 : vector<16x128xf32>
    %c1_94 = arith.constant 1 : index
    %c0_95 = arith.constant 0 : index
    %c0_96 = arith.constant 0 : index
    %321 = vector.load %arg10[%c1_94, %c0_95, %c0_96] : memref<2x128x256xf32, #tpu.memory_space<vmem>>, vector<1x128x256xf32>
    %322 = vector.shape_cast %321 : vector<1x128x256xf32> to vector<128x256xf32>
    %cst_97 = arith.constant dense<0.000000e+00> : vector<16x256xf32>
    %323 = tpu.matmul %320, %322, %cst_97 {dimension_numbers = #tpu.dot_dimension_numbers<[1], [0], [0], [1], [0, 0, 1, 1], [], []>} : vector<16x128xf32>, vector<128x256xf32>, vector<16x256xf32> -> vector<16x256xf32>
    %c1_98 = arith.constant 1 : index
    %c0_99 = arith.constant 0 : index
    %c0_100 = arith.constant 0 : index
    %324 = vector.load %arg11[%c1_98, %c0_99, %c0_100] : memref<2x1x256xf32, #tpu.memory_space<vmem>>, vector<1x1x256xf32>
    %325 = vector.shape_cast %324 : vector<1x1x256xf32> to vector<1x256xf32>
    %326 = vector.broadcast %325 : vector<1x256xf32> to vector<16x256xf32>
    %327 = arith.addf %323, %326 : vector<16x256xf32>
    %cst_101 = arith.constant 0.000000e+00 : f32
    %328 = vector.broadcast %cst_101 : f32 to vector<16x256xf32>
    %329 = arith.maximumf %327, %328 : vector<16x256xf32>
    %c1_102 = arith.constant 1 : index
    %c0_103 = arith.constant 0 : index
    %c0_104 = arith.constant 0 : index
    %330 = vector.load %arg12[%c1_102, %c0_103, %c0_104] : memref<2x256x128xf32, #tpu.memory_space<vmem>>, vector<1x256x128xf32>
    %331 = vector.shape_cast %330 : vector<1x256x128xf32> to vector<256x128xf32>
    %cst_105 = arith.constant dense<0.000000e+00> : vector<16x128xf32>
    %332 = tpu.matmul %329, %331, %cst_105 {dimension_numbers = #tpu.dot_dimension_numbers<[1], [0], [0], [1], [0, 0, 1, 1], [], []>} : vector<16x256xf32>, vector<256x128xf32>, vector<16x128xf32> -> vector<16x128xf32>
    %c1_106 = arith.constant 1 : index
    %c0_107 = arith.constant 0 : index
    %c0_108 = arith.constant 0 : index
    %333 = vector.load %arg13[%c1_106, %c0_107, %c0_108] : memref<2x1x128xf32, #tpu.memory_space<vmem>>, vector<1x1x128xf32>
    %334 = vector.shape_cast %333 : vector<1x1x128xf32> to vector<1x128xf32>
    %335 = vector.broadcast %334 : vector<1x128xf32> to vector<16x128xf32>
    %336 = arith.addf %332, %335 : vector<16x128xf32>
    %337 = arith.addf %320, %336 : vector<16x128xf32>
    %c1_109 = arith.constant 1 : index
    %c0_110 = arith.constant 0 : index
    %c0_111 = arith.constant 0 : index
    %338 = vector.load %arg14[%c1_109, %c0_110, %c0_111] : memref<2x1x128xf32, #tpu.memory_space<vmem>>, vector<1x1x128xf32>
    %339 = vector.shape_cast %338 : vector<1x1x128xf32> to vector<1x128xf32>
    %c1_112 = arith.constant 1 : index
    %c0_113 = arith.constant 0 : index
    %c0_114 = arith.constant 0 : index
    %340 = vector.load %arg15[%c1_112, %c0_113, %c0_114] : memref<2x1x128xf32, #tpu.memory_space<vmem>>, vector<1x1x128xf32>
    %341 = vector.shape_cast %340 : vector<1x1x128xf32> to vector<1x128xf32>
    %cst_115 = arith.constant dense<0.000000e+00> : vector<16xf32>
    %342 = vector.multi_reduction <add>, %337, %cst_115 [1] : vector<16x128xf32> to vector<16xf32>
    %343 = vector.shape_cast %342 : vector<16xf32> to vector<16x1xf32>
    %cst_116 = arith.constant 1.280000e+02 : f32
    %344 = vector.broadcast %cst_116 : f32 to vector<16x1xf32>
    %345 = arith.divf %343, %344 : vector<16x1xf32>
    %346 = vector.broadcast %345 : vector<16x1xf32> to vector<16x128xf32>
    %347 = arith.subf %337, %346 : vector<16x128xf32>
    %348 = arith.mulf %347, %347 : vector<16x128xf32>
    %cst_117 = arith.constant dense<0.000000e+00> : vector<16xf32>
    %349 = vector.multi_reduction <add>, %348, %cst_117 [1] : vector<16x128xf32> to vector<16xf32>
    %350 = vector.shape_cast %349 : vector<16xf32> to vector<16x1xf32>
    %cst_118 = arith.constant 1.280000e+02 : f32
    %351 = vector.broadcast %cst_118 : f32 to vector<16x1xf32>
    %352 = arith.divf %350, %351 : vector<16x1xf32>
    %353 = vector.broadcast %345 : vector<16x1xf32> to vector<16x128xf32>
    %354 = arith.subf %337, %353 : vector<16x128xf32>
    %cst_119 = arith.constant 9.99999974E-6 : f32
    %355 = vector.broadcast %cst_119 : f32 to vector<16x1xf32>
    %356 = arith.addf %352, %355 : vector<16x1xf32>
    %357 = math.rsqrt %356 : vector<16x1xf32>
    %358 = vector.broadcast %357 : vector<16x1xf32> to vector<16x128xf32>
    %359 = arith.mulf %354, %358 : vector<16x128xf32>
    %360 = vector.broadcast %339 : vector<1x128xf32> to vector<16x128xf32>
    %361 = arith.mulf %359, %360 : vector<16x128xf32>
    %362 = vector.broadcast %341 : vector<1x128xf32> to vector<16x128xf32>
    %363 = arith.addf %361, %362 : vector<16x128xf32>
    %c0_120 = arith.constant 0 : index
    %c0_121 = arith.constant 0 : index
    %364 = vector.load %arg16[%c0_120, %c0_121] : memref<128x128xf32, #tpu.memory_space<vmem>>, vector<128x128xf32>
    %cst_122 = arith.constant dense<0.000000e+00> : vector<16x128xf32>
    %365 = tpu.matmul %363, %364, %cst_122 {dimension_numbers = #tpu.dot_dimension_numbers<[1], [0], [0], [1], [0, 0, 1, 1], [], []>} : vector<16x128xf32>, vector<128x128xf32>, vector<16x128xf32> -> vector<16x128xf32>
    %c0_123 = arith.constant 0 : index
    %c0_124 = arith.constant 0 : index
    %366 = vector.load %arg17[%c0_123, %c0_124] : memref<1x128xf32, #tpu.memory_space<vmem>>, vector<1x128xf32>
    %367 = vector.broadcast %366 : vector<1x128xf32> to vector<16x128xf32>
    %368 = arith.addf %365, %367 : vector<16x128xf32>
    %c0_125 = arith.constant 0 : index
    %c0_126 = arith.constant 0 : index
    %369 = vector.load %arg24[%c0_125, %c0_126] : memref<16x128xf32, #tpu.memory_space<vmem>>, vector<16x128xf32>
    tpu.vector_store %arg24[%c0_125, %c0_126], %368 {strides = array<i32>} : memref<16x128xf32, #tpu.memory_space<vmem>>, vector<16x128xf32>,
    %370 = vector.shape_cast %363 : vector<16x128xf32> to vector<2x8x128xf32>
    %cst_127 = arith.constant dense<0.000000e+00> : vector<2x128xf32>
    %371 = vector.multi_reduction <add>, %370, %cst_127 [1] : vector<2x8x128xf32> to vector<2x128xf32>
    %cst_128 = arith.constant 8.000000e+00 : f32
    %372 = vector.broadcast %cst_128 : f32 to vector<2x128xf32>
    %373 = arith.divf %371, %372 : vector<2x128xf32>
    %c0_129 = arith.constant 0 : index
    %c0_130 = arith.constant 0 : index
    %374 = vector.load %arg18[%c0_129, %c0_130] : memref<128x64xf32, #tpu.memory_space<vmem>>, vector<128x64xf32>
    %cst_131 = arith.constant dense<0.000000e+00> : vector<2x64xf32>
    %375 = tpu.matmul %373, %374, %cst_131 {dimension_numbers = #tpu.dot_dimension_numbers<[1], [0], [0], [1], [0, 0, 1, 1], [], []>} : vector<2x128xf32>, vector<128x64xf32>, vector<2x64xf32> -> vector<2x64xf32>
    %c0_132 = arith.constant 0 : index
    %c0_133 = arith.constant 0 : index
    %376 = vector.load %arg19[%c0_132, %c0_133] : memref<1x64xf32, #tpu.memory_space<vmem>>, vector<1x64xf32>
    %377 = vector.broadcast %376 : vector<1x64xf32> to vector<2x64xf32>
    %378 = arith.addf %375, %377 : vector<2x64xf32>
    %c0_134 = arith.constant 0 : index
    %c0_135 = arith.constant 0 : index
    %379 = vector.load %arg20[%c0_134, %c0_135] : memref<1x64xf32, #tpu.memory_space<vmem>>, vector<1x64xf32>
    %c0_136 = arith.constant 0 : index
    %c0_137 = arith.constant 0 : index
    %380 = vector.load %arg21[%c0_136, %c0_137] : memref<1x64xf32, #tpu.memory_space<vmem>>, vector<1x64xf32>
    %cst_138 = arith.constant dense<0.000000e+00> : vector<2xf32>
    %381 = vector.multi_reduction <add>, %378, %cst_138 [1] : vector<2x64xf32> to vector<2xf32>
    %382 = vector.shape_cast %381 : vector<2xf32> to vector<2x1xf32>
    %cst_139 = arith.constant 6.400000e+01 : f32
    %383 = vector.broadcast %cst_139 : f32 to vector<2x1xf32>
    %384 = arith.divf %382, %383 : vector<2x1xf32>
    %385 = vector.broadcast %384 : vector<2x1xf32> to vector<2x64xf32>
    %386 = arith.subf %378, %385 : vector<2x64xf32>
    %387 = arith.mulf %386, %386 : vector<2x64xf32>
    %cst_140 = arith.constant dense<0.000000e+00> : vector<2xf32>
    %388 = vector.multi_reduction <add>, %387, %cst_140 [1] : vector<2x64xf32> to vector<2xf32>
    %389 = vector.shape_cast %388 : vector<2xf32> to vector<2x1xf32>
    %cst_141 = arith.constant 6.400000e+01 : f32
    %390 = vector.broadcast %cst_141 : f32 to vector<2x1xf32>
    %391 = arith.divf %389, %390 : vector<2x1xf32>
    %392 = vector.broadcast %384 : vector<2x1xf32> to vector<2x64xf32>
    %393 = arith.subf %378, %392 : vector<2x64xf32>
    %cst_142 = arith.constant 9.99999974E-6 : f32
    %394 = vector.broadcast %cst_142 : f32 to vector<2x1xf32>
    %395 = arith.addf %391, %394 : vector<2x1xf32>
    %396 = math.rsqrt %395 : vector<2x1xf32>
    %397 = vector.broadcast %396 : vector<2x1xf32> to vector<2x64xf32>
    %398 = arith.mulf %393, %397 : vector<2x64xf32>
    %399 = vector.broadcast %379 : vector<1x64xf32> to vector<2x64xf32>
    %400 = arith.mulf %398, %399 : vector<2x64xf32>
    %401 = vector.broadcast %380 : vector<1x64xf32> to vector<2x64xf32>
    %402 = arith.addf %400, %401 : vector<2x64xf32>
    %cst_143 = arith.constant 5.000000e-01 : f32
    %403 = vector.broadcast %cst_143 : f32 to vector<2x64xf32>
    %404 = arith.mulf %403, %402 : vector<2x64xf32>
    %cst_144 = arith.constant 1.41421354 : f32
    %405 = vector.broadcast %cst_144 : f32 to vector<2x64xf32>
    %406 = arith.divf %402, %405 : vector<2x64xf32>
    %407 = math.erf %406 : vector<2x64xf32>
    %cst_145 = arith.constant 1.000000e+00 : f32
    %408 = vector.broadcast %cst_145 : f32 to vector<2x64xf32>
    %409 = arith.addf %408, %407 : vector<2x64xf32>
    %410 = arith.mulf %404, %409 : vector<2x64xf32>
    %c0_146 = arith.constant 0 : index
    %c0_147 = arith.constant 0 : index
    %411 = vector.load %arg22[%c0_146, %c0_147] : memref<64x128xf32, #tpu.memory_space<vmem>>, vector<64x128xf32>
    %cst_148 = arith.constant dense<0.000000e+00> : vector<2x128xf32>
    %412 = tpu.matmul %410, %411, %cst_148 {dimension_numbers = #tpu.dot_dimension_numbers<[1], [0], [0], [1], [0, 0, 1, 1], [], []>} : vector<2x64xf32>, vector<64x128xf32>, vector<2x128xf32> -> vector<2x128xf32>
    %c0_149 = arith.constant 0 : index
    %c0_150 = arith.constant 0 : index
    %413 = vector.load %arg23[%c0_149, %c0_150] : memref<1x128xf32, #tpu.memory_space<vmem>>, vector<1x128xf32>
    %414 = vector.broadcast %413 : vector<1x128xf32> to vector<2x128xf32>
    %415 = arith.addf %412, %414 : vector<2x128xf32>
    %c0_151 = arith.constant 0 : index
    %c0_152 = arith.constant 0 : index
    %416 = vector.load %arg25[%c0_151, %c0_152] : memref<2x128xf32, #tpu.memory_space<vmem>>, vector<2x128xf32>
    tpu.vector_store %arg25[%c0_151, %c0_152], %415 {strides = array<i32>} : memref<2x128xf32, #tpu.memory_space<vmem>>, vector<2x128xf32>,
    return
  }
}

</mosaic_0001>

<llo_original>
// kernel: tpu_custom_call.1
$region0: #{tpu_custom_call.1}
  #allocation0 [shape = 'u32[]', space=smem, size = 0x4, offset = 0x4, fixed_abs, tag = 'smem constant byte address 0x4 - core index']
  #allocation1 [shape = 'u32[72,128]{1,0:T(1,128)}', space=vmem, size = 0x9000, scoped, tag = 'internal scratch']
  %s0 = inlined_call_operand.hbm [shape: f32[16,32], index: 0, kind: input, shape index: {}]
  %s1 = inlined_call_operand.hbm [shape: f32[16,128], index: 1, kind: input, shape index: {}]
  %s2 = inlined_call_operand.hbm [shape: f32[32,128], index: 2, kind: input, shape index: {}]
  %s3 = inlined_call_operand.vmem [shape: f32[1,128], index: 3, kind: input, shape index: {}]
  %s4 = inlined_call_operand.hbm [shape: f32[2,128,384], index: 4, kind: input, shape index: {}]
  %s5 = inlined_call_operand.vmem [shape: f32[2,1,384], index: 5, kind: input, shape index: {}]
  %s6 = inlined_call_operand.hbm [shape: f32[2,128,128], index: 6, kind: input, shape index: {}]
  %s7 = inlined_call_operand.vmem [shape: f32[2,1,128], index: 7, kind: input, shape index: {}]
  %s8 = inlined_call_operand.vmem [shape: f32[2,1,128], index: 8, kind: input, shape index: {}]
  %s9 = inlined_call_operand.hbm [shape: f32[2,1,128], index: 9, kind: input, shape index: {}]
  %s10 = inlined_call_operand.hbm [shape: f32[2,128,256], index: 10, kind: input, shape index: {}]
  %s11 = inlined_call_operand.vmem [shape: f32[2,1,256], index: 11, kind: input, shape index: {}]
  %s12 = inlined_call_operand.hbm [shape: f32[2,256,128], index: 12, kind: input, shape index: {}]
  %s13 = inlined_call_operand.hbm [shape: f32[2,1,128], index: 13, kind: input, shape index: {}]
  %s14 = inlined_call_operand.hbm [shape: f32[2,1,128], index: 14, kind: input, shape index: {}]
  %s15 = inlined_call_operand.hbm [shape: f32[2,1,128], index: 15, kind: input, shape index: {}]
  %s16 = inlined_call_operand.vmem [shape: f32[128,128], index: 16, kind: input, shape index: {}]
  %s17 = inlined_call_operand.hbm [shape: f32[1,128], index: 17, kind: input, shape index: {}]
  %s18 = inlined_call_operand.vmem [shape: f32[128,64], index: 18, kind: input, shape index: {}]
  %s19 = inlined_call_operand.vmem [shape: f32[1,64], index: 19, kind: input, shape index: {}]
  %s20 = inlined_call_operand.vmem [shape: f32[1,64], index: 20, kind: input, shape index: {}]
  %s21 = inlined_call_operand.vmem [shape: f32[1,64], index: 21, kind: input, shape index: {}]
  %s22 = inlined_call_operand.vmem [shape: f32[64,128], index: 22, kind: input, shape index: {}]
  %s23 = inlined_call_operand.vmem [shape: f32[1,128], index: 23, kind: input, shape index: {}]
  %s24 = inlined_call_operand.hbm [shape: f32[16,128], index: 24, kind: output, shape index: {0}]
  %s25 = inlined_call_operand.hbm [shape: f32[2,128], index: 25, kind: output, shape index: {1}]
  %26 = xla_tuple %s24, %s25
  %s27 = sld [smem:[#allocation0]]
  $region162: #{tpu_custom_call.1} parent=0
    _
  %s29 = ssub.s32 1, %s27
  %s30 = scalar_select 0, %s29, %s27
  $region1: #{tpu_custom_call.1} parent=0
    #allocation2 [shape = 'u8[8192]{0}', space=vmem, size = 0x2000, scoped, tag = 'input window, operand 0, single buffered']
    #allocation3 [shape = 's32[1]{0}', space=sflag, size = 0x4, scoped, tag = 'scoped memory for tpu_custom_call.1']
    #allocation4 [shape = 's32[1]{0}', space=sflag, size = 0x4, scoped, tag = 'scoped memory for tpu_custom_call.1']
    #allocation5 [shape = 'u8[8192]{0}', space=vmem, size = 0x2000, scoped, tag = 'input window, operand 1, single buffered']
    #allocation6 [shape = 's32[1]{0}', space=sflag, size = 0x4, scoped, tag = 'scoped memory for tpu_custom_call.1']
    #allocation7 [shape = 'u8[16384]{0}', space=vmem, size = 0x4000, scoped, tag = 'input window, operand 2, single buffered']
    #allocation8 [shape = 'u8[393216]{0}', space=vmem, size = 0x60000, scoped, tag = 'input window, operand 4, single buffered']
    #allocation9 [shape = 's32[1]{0}', space=sflag, size = 0x4, scoped, tag = 'scoped memory for tpu_custom_call.1']
    #allocation10 [shape = 'u8[131072]{0}', space=vmem, size = 0x20000, scoped, tag = 'input window, operand 6, single buffered']
    #allocation11 [shape = 'u8[1024]{0}', space=vmem, size = 0x400, scoped, tag = 'input window, operand 9, single buffered']
    #allocation12 [shape = 's32[1]{0}', space=sflag, size = 0x4, scoped, tag = 'scoped memory for tpu_custom_call.1']
    #allocation13 [shape = 'u8[262144]{0}', space=vmem, size = 0x40000, scoped, tag = 'input window, operand 10, single buffered']
    #allocation14 [shape = 'u8[262144]{0}', space=vmem, size = 0x40000, scoped, tag = 'input window, operand 12, single buffered']
    #allocation15 [shape = 's32[1]{0}', space=sflag, size = 0x4, scoped, tag = 'scoped memory for tpu_custom_call.1']
    #allocation16 [shape = 'u8[1024]{0}', space=vmem, size = 0x400, scoped, tag = 'input window, operand 13, single buffered']
    #allocation17 [shape = 'u8[1024]{0}', space=vmem, size = 0x400, scoped, tag = 'input window, operand 14, single buffered']
    #allocation18 [shape = 's32[1]{0}', space=sflag, size = 0x4, scoped, tag = 'scoped memory for tpu_custom_call.1']
    #allocation19 [shape = 'u8[1024]{0}', space=vmem, size = 0x400, scoped, tag = 'input window, operand 15, single buffered']
    #allocation20 [shape = 'u8[512]{0}', space=vmem, size = 0x400, scoped, tag = 'input window, operand 17, single buffered']
    #allocation21 [shape = 's32[1]{0}', space=sflag, size = 0x4, scoped, tag = 'scoped memory for tpu_custom_call.1']
    #allocation22 [shape = 'u8[8192]{0}', space=vmem, size = 0x2000, scoped, tag = 'output window, operand 0, single buffered']
    #allocation23 [shape = 'u8[1024]{0}', space=vmem, size = 0x400, scoped, tag = 'output window, operand 1, single buffered']
    #allocation24 [shape = 's32[1]{0}', space=sflag, size = 0x4, scoped, tag = 'scoped memory for tpu_custom_call.1']
    %31 = vsyncpa [#allocation3], 0
    %32 = vsyncpa [#allocation6], 0
    %33 = vsyncpa [#allocation9], 0
    %34 = vsyncpa [#allocation12], 0
    %35 = vsyncpa [#allocation15], 0
    %36 = vsyncpa [#allocation18], 0
    %37 = vsyncpa [#allocation21], 0
    %38 = vsyncpa [#allocation4], 0
    %39 = vsyncpa [#allocation24], 0
    // Predicated region
    $region2: #{tpu_custom_call.1} parent=1 // pred_check
      _
    $region3: #{tpu_custom_call.1} parent=1 // pred_check_branch
      %41 = sbr.rel (0) target = $region5
    $region4: #{tpu_custom_call.1} parent=1 // pred_region
      %43 = vsyncadd [#allocation3], 0
      %s44 = sshll.u32 %s0, 4
      %s45 = int_to_ptr.hbm [resolvable:$true] %s44
      %s46 = sshll.u32 [#allocation2], 4
      %s47 = int_to_ptr.vmem [resolvable:$true] %s46
      %52 = dma.hbm_to_vmem [thread:$0]  %s45, 256, %s47, [#allocation3], 128, 128, 8
    $region5: #{tpu_custom_call.1} parent=1 // pred_fallthru
      _
    // Predicated region
    $region6: #{tpu_custom_call.1} parent=1 // pred_check
      _
    $region7: #{tpu_custom_call.1} parent=1 // pred_check_branch
      %54 = sbr.rel (0) target = $region9
    $region8: #{tpu_custom_call.1} parent=1 // pred_region
      %56 = vsyncadd [#allocation6], 0
      %s57 = sshll.u32 %s1, 4
      %s58 = int_to_ptr.hbm [resolvable:$true] %s57
      %s59 = sshll.u32 [#allocation5], 4
      %s60 = int_to_ptr.vmem [resolvable:$true] %s59
      %65 = dma.hbm_to_vmem [thread:$0]  %s58, 256, %s60, [#allocation6], 128, 128, 8
    $region9: #{tpu_custom_call.1} parent=1 // pred_fallthru
      _
    // Predicated region
    $region10: #{tpu_custom_call.1} parent=1 // pred_check
      _
    $region11: #{tpu_custom_call.1} parent=1 // pred_check_branch
      %67 = sbr.rel (0) target = $region13
    $region12: #{tpu_custom_call.1} parent=1 // pred_region
      %69 = vsyncadd [#allocation6], 0
      %s70 = sshll.u32 %s2, 4
      %s71 = int_to_ptr.hbm [resolvable:$true] %s70
      %s72 = sshll.u32 [#allocation7], 4
      %s73 = int_to_ptr.vmem [resolvable:$true] %s72
      %78 = dma.hbm_to_vmem [thread:$0]  %s71, 512, %s73, [#allocation6], 128, 128, 8
    $region13: #{tpu_custom_call.1} parent=1 // pred_fallthru
      _
    // Predicated region
    $region14: #{tpu_custom_call.1} parent=1 // pred_check
      _
    $region15: #{tpu_custom_call.1} parent=1 // pred_check_branch
      %80 = sbr.rel (0) target = $region17
    $region16: #{tpu_custom_call.1} parent=1 // pred_region
      _
    $region17: #{tpu_custom_call.1} parent=1 // pred_fallthru
      _
    // Predicated region
    $region18: #{tpu_custom_call.1} parent=1 // pred_check
      _
    $region19: #{tpu_custom_call.1} parent=1 // pred_check_branch
      %82 = sbr.rel (0) target = $region21
    $region20: #{tpu_custom_call.1} parent=1 // pred_region
      %84 = vsyncadd [#allocation9], 0
      %s85 = sshll.u32 %s4, 4
      %s86 = int_to_ptr.hbm [resolvable:$true] %s85
      %s87 = sshll.u32 [#allocation8], 4
      %s88 = int_to_ptr.vmem [resolvable:$true] %s87
      %93 = dma.hbm_to_vmem [thread:$0]  %s86, 12288, %s88, [#allocation9], 384, 384, 24
    $region21: #{tpu_custom_call.1} parent=1 // pred_fallthru
      _
    // Predicated region
    $region22: #{tpu_custom_call.1} parent=1 // pred_check
      _
    $region23: #{tpu_custom_call.1} parent=1 // pred_check_branch
      %95 = sbr.rel (0) target = $region25
    $region24: #{tpu_custom_call.1} parent=1 // pred_region
      _
    $region25: #{tpu_custom_call.1} parent=1 // pred_fallthru
      _
    // Predicated region
    $region26: #{tpu_custom_call.1} parent=1 // pred_check
      _
    $region27: #{tpu_custom_call.1} parent=1 // pred_check_branch
      %97 = sbr.rel (0) target = $region29
    $region28: #{tpu_custom_call.1} parent=1 // pred_region
      %99 = vsyncadd [#allocation9], 0
      %s100 = sshll.u32 %s6, 4
      %s101 = int_to_ptr.hbm [resolvable:$true] %s100
      %s102 = sshll.u32 [#allocation10], 4
      %s103 = int_to_ptr.vmem [resolvable:$true] %s102
      %108 = dma.hbm_to_vmem [thread:$0]  %s101, 4096, %s103, [#allocation9], 128, 128, 8
    $region29: #{tpu_custom_call.1} parent=1 // pred_fallthru
      _
    // Predicated region
    $region30: #{tpu_custom_call.1} parent=1 // pred_check
      _
    $region31: #{tpu_custom_call.1} parent=1 // pred_check_branch
      %110 = sbr.rel (0) target = $region33
    $region32: #{tpu_custom_call.1} parent=1 // pred_region
      _
    $region33: #{tpu_custom_call.1} parent=1 // pred_fallthru
      _
    // Predicated region
    $region34: #{tpu_custom_call.1} parent=1 // pred_check
      _
    $region35: #{tpu_custom_call.1} parent=1 // pred_check_branch
      %112 = sbr.rel (0) target = $region37
    $region36: #{tpu_custom_call.1} parent=1 // pred_region
      _
    $region37: #{tpu_custom_call.1} parent=1 // pred_fallthru
      _
    // Predicated region
    $region38: #{tpu_custom_call.1} parent=1 // pred_check
      _
    $region39: #{tpu_custom_call.1} parent=1 // pred_check_branch
      %114 = sbr.rel (0) target = $region41
    $region40: #{tpu_custom_call.1} parent=1 // pred_region
      %116 = vsyncadd [#allocation12], 0
      %s117 = sshll.u32 %s9, 4
      %s118 = int_to_ptr.hbm [resolvable:$true] %s117
      %s119 = sshll.u32 [#allocation11], 4
      %s120 = int_to_ptr.vmem [resolvable:$true] %s119
      %125 = dma.hbm_to_vmem [thread:$0]  %s118, 32, %s120, [#allocation12], 16, 16, 1
    $region41: #{tpu_custom_call.1} parent=1 // pred_fallthru
      _
    // Predicated region
    $region42: #{tpu_custom_call.1} parent=1 // pred_check
      _
    $region43: #{tpu_custom_call.1} parent=1 // pred_check_branch
      %127 = sbr.rel (0) target = $region45
    $region44: #{tpu_custom_call.1} parent=1 // pred_region
      %129 = vsyncadd [#allocation12], 0
      %s130 = sshll.u32 %s10, 4
      %s131 = int_to_ptr.hbm [resolvable:$true] %s130
      %s132 = sshll.u32 [#allocation13], 4
      %s133 = int_to_ptr.vmem [resolvable:$true] %s132
      %138 = dma.hbm_to_vmem [thread:$0]  %s131, 8192, %s133, [#allocation12], 256, 256, 16
    $region45: #{tpu_custom_call.1} parent=1 // pred_fallthru
      _
    // Predicated region
    $region46: #{tpu_custom_call.1} parent=1 // pred_check
      _
    $region47: #{tpu_custom_call.1} parent=1 // pred_check_branch
      %140 = sbr.rel (0) target = $region49
    $region48: #{tpu_custom_call.1} parent=1 // pred_region
      _
    $region49: #{tpu_custom_call.1} parent=1 // pred_fallthru
      _
    // Predicated region
    $region50: #{tpu_custom_call.1} parent=1 // pred_check
      _
    $region51: #{tpu_custom_call.1} parent=1 // pred_check_branch
      %142 = sbr.rel (0) target = $region53
    $region52: #{tpu_custom_call.1} parent=1 // pred_region
      %144 = vsyncadd [#allocation15], 0
      %s145 = sshll.u32 %s12, 4
      %s146 = int_to_ptr.hbm [resolvable:$true] %s145
      %s147 = sshll.u32 [#allocation14], 4
      %s148 = int_to_ptr.vmem [resolvable:$true] %s147
      %153 = dma.hbm_to_vmem [thread:$0]  %s146, 8192, %s148, [#allocation15], 128, 128, 8
    $region53: #{tpu_custom_call.1} parent=1 // pred_fallthru
      _
    // Predicated region
    $region54: #{tpu_custom_call.1} parent=1 // pred_check
      _
    $region55: #{tpu_custom_call.1} parent=1 // pred_check_branch
      %155 = sbr.rel (0) target = $region57
    $region56: #{tpu_custom_call.1} parent=1 // pred_region
      %157 = vsyncadd [#allocation15], 0
      %s158 = sshll.u32 %s13, 4
      %s159 = int_to_ptr.hbm [resolvable:$true] %s158
      %s160 = sshll.u32 [#allocation16], 4
      %s161 = int_to_ptr.vmem [resolvable:$true] %s160
      %166 = dma.hbm_to_vmem [thread:$0]  %s159, 32, %s161, [#allocation15], 16, 16, 1
    $region57: #{tpu_custom_call.1} parent=1 // pred_fallthru
      _
    // Predicated region
    $region58: #{tpu_custom_call.1} parent=1 // pred_check
      _
    $region59: #{tpu_custom_call.1} parent=1 // pred_check_branch
      %168 = sbr.rel (0) target = $region61
    $region60: #{tpu_custom_call.1} parent=1 // pred_region
      %170 = vsyncadd [#allocation18], 0
      %s171 = sshll.u32 %s14, 4
      %s172 = int_to_ptr.hbm [resolvable:$true] %s171
      %s173 = sshll.u32 [#allocation17], 4
      %s174 = int_to_ptr.vmem [resolvable:$true] %s173
      %179 = dma.hbm_to_vmem [thread:$0]  %s172, 32, %s174, [#allocation18], 16, 16, 1
    $region61: #{tpu_custom_call.1} parent=1 // pred_fallthru
      _
    // Predicated region
    $region62: #{tpu_custom_call.1} parent=1 // pred_check
      _
    $region63: #{tpu_custom_call.1} parent=1 // pred_check_branch
      %181 = sbr.rel (0) target = $region65
    $region64: #{tpu_custom_call.1} parent=1 // pred_region
      %183 = vsyncadd [#allocation18], 0
      %s184 = sshll.u32 %s15, 4
      %s185 = int_to_ptr.hbm [resolvable:$true] %s184
      %s186 = sshll.u32 [#allocation19], 4
      %s187 = int_to_ptr.vmem [resolvable:$true] %s186
      %192 = dma.hbm_to_vmem [thread:$0]  %s185, 32, %s187, [#allocation18], 16, 16, 1
    $region65: #{tpu_custom_call.1} parent=1 // pred_fallthru
      _
    // Predicated region
    $region66: #{tpu_custom_call.1} parent=1 // pred_check
      _
    $region67: #{tpu_custom_call.1} parent=1 // pred_check_branch
      %194 = sbr.rel (0) target = $region69
    $region68: #{tpu_custom_call.1} parent=1 // pred_region
      _
    $region69: #{tpu_custom_call.1} parent=1 // pred_fallthru
      _
    // Predicated region
    $region70: #{tpu_custom_call.1} parent=1 // pred_check
      _
    $region71: #{tpu_custom_call.1} parent=1 // pred_check_branch
      %196 = sbr.rel (0) target = $region73
    $region72: #{tpu_custom_call.1} parent=1 // pred_region
      %198 = vsyncadd [#allocation21], 0
      %s200 = sshll.u32 %s17, 4
      %s201 = int_to_ptr.hbm [resolvable:$true] %s200
      %s202 = sshll.u32 [#allocation20], 4
      %s203 = int_to_ptr.vmem [resolvable:$true] %s202
      %205 = dma.hbm_to_vmem [thread:$0]  %s201, 16, %s203, [#allocation21]
    $region73: #{tpu_custom_call.1} parent=1 // pred_fallthru
      _
    // Predicated region
    $region74: #{tpu_custom_call.1} parent=1 // pred_check
      _
    $region75: #{tpu_custom_call.1} parent=1 // pred_check_branch
      %207 = sbr.rel (0) target = $region77
    $region76: #{tpu_custom_call.1} parent=1 // pred_region
      _
    $region77: #{tpu_custom_call.1} parent=1 // pred_fallthru
      _
    // Predicated region
    $region78: #{tpu_custom_call.1} parent=1 // pred_check
      _
    $region79: #{tpu_custom_call.1} parent=1 // pred_check_branch
      %209 = sbr.rel (0) target = $region81
    $region80: #{tpu_custom_call.1} parent=1 // pred_region
      _
    $region81: #{tpu_custom_call.1} parent=1 // pred_fallthru
      _
    // Predicated region
    $region82: #{tpu_custom_call.1} parent=1 // pred_check
      _
    $region83: #{tpu_custom_call.1} parent=1 // pred_check_branch
      %211 = sbr.rel (0) target = $region85
    $region84: #{tpu_custom_call.1} parent=1 // pred_region
      _
    $region85: #{tpu_custom_call.1} parent=1 // pred_fallthru
      _
    // Predicated region
    $region86: #{tpu_custom_call.1} parent=1 // pred_check
      _
    $region87: #{tpu_custom_call.1} parent=1 // pred_check_branch
      %213 = sbr.rel (0) target = $region89
    $region88: #{tpu_custom_call.1} parent=1 // pred_region
      _
    $region89: #{tpu_custom_call.1} parent=1 // pred_fallthru
      _
    // Predicated region
    $region90: #{tpu_custom_call.1} parent=1 // pred_check
      _
    $region91: #{tpu_custom_call.1} parent=1 // pred_check_branch
      %215 = sbr.rel (0) target = $region93
    $region92: #{tpu_custom_call.1} parent=1 // pred_region
      _
    $region93: #{tpu_custom_call.1} parent=1 // pred_fallthru
      _
    // Predicated region
    $region94: #{tpu_custom_call.1} parent=1 // pred_check
      _
    $region95: #{tpu_custom_call.1} parent=1 // pred_check_branch
      %217 = sbr.rel (0) target = $region97
    $region96: #{tpu_custom_call.1} parent=1 // pred_region
      _
    $region97: #{tpu_custom_call.1} parent=1 // pred_fallthru
      _
    // Predicated region
    $region98: #{tpu_custom_call.1} parent=1 // pred_check
      _
    $region99: #{tpu_custom_call.1} parent=1 // pred_check_branch
      %219 = sbr.rel (0) target = $region101
    $region100: #{tpu_custom_call.1} parent=1 // pred_region
      %221 = dma.done [#allocation3], 256
    $region101: #{tpu_custom_call.1} parent=1 // pred_fallthru
      _
    // Predicated region
    $region102: #{tpu_custom_call.1} parent=1 // pred_check
      _
    $region103: #{tpu_custom_call.1} parent=1 // pred_check_branch
      %223 = sbr.rel (0) target = $region105
    $region104: #{tpu_custom_call.1} parent=1 // pred_region
      %225 = dma.done [#allocation6], 256
    $region105: #{tpu_custom_call.1} parent=1 // pred_fallthru
      _
    // Predicated region
    $region106: #{tpu_custom_call.1} parent=1 // pred_check
      _
    $region107: #{tpu_custom_call.1} parent=1 // pred_check_branch
      %227 = sbr.rel (0) target = $region109
    $region108: #{tpu_custom_call.1} parent=1 // pred_region
      %229 = dma.done [#allocation6], 512
    $region109: #{tpu_custom_call.1} parent=1 // pred_fallthru
      _
    // Predicated region
    $region110: #{tpu_custom_call.1} parent=1 // pred_check
      _
    $region111: #{tpu_custom_call.1} parent=1 // pred_check_branch
      %231 = sbr.rel (0) target = $region113
    $region112: #{tpu_custom_call.1} parent=1 // pred_region
      %233 = dma.done [#allocation9], 12288
    $region113: #{tpu_custom_call.1} parent=1 // pred_fallthru
      _
    // Predicated region
    $region114: #{tpu_custom_call.1} parent=1 // pred_check
      _
    $region115: #{tpu_custom_call.1} parent=1 // pred_check_branch
      %235 = sbr.rel (0) target = $region117
    $region116: #{tpu_custom_call.1} parent=1 // pred_region
      %237 = dma.done [#allocation9], 4096
    $region117: #{tpu_custom_call.1} parent=1 // pred_fallthru
      _
    // Predicated region
    $region118: #{tpu_custom_call.1} parent=1 // pred_check
      _
    $region119: #{tpu_custom_call.1} parent=1 // pred_check_branch
      %239 = sbr.rel (0) target = $region121
    $region120: #{tpu_custom_call.1} parent=1 // pred_region
      %241 = dma.done [#allocation12], 32
    $region121: #{tpu_custom_call.1} parent=1 // pred_fallthru
      _
    // Predicated region
    $region122: #{tpu_custom_call.1} parent=1 // pred_check
      _
    $region123: #{tpu_custom_call.1} parent=1 // pred_check_branch
      %243 = sbr.rel (0) target = $region125
    $region124: #{tpu_custom_call.1} parent=1 // pred_region
      %245 = dma.done [#allocation12], 8192
    $region125: #{tpu_custom_call.1} parent=1 // pred_fallthru
      _
    // Predicated region
    $region126: #{tpu_custom_call.1} parent=1 // pred_check
      _
    $region127: #{tpu_custom_call.1} parent=1 // pred_check_branch
      %247 = sbr.rel (0) target = $region129
    $region128: #{tpu_custom_call.1} parent=1 // pred_region
      %249 = dma.done [#allocation15], 8192
    $region129: #{tpu_custom_call.1} parent=1 // pred_fallthru
      _
    // Predicated region
    $region130: #{tpu_custom_call.1} parent=1 // pred_check
      _
    $region131: #{tpu_custom_call.1} parent=1 // pred_check_branch
      %251 = sbr.rel (0) target = $region133
    $region132: #{tpu_custom_call.1} parent=1 // pred_region
      %253 = dma.done [#allocation15], 32
    $region133: #{tpu_custom_call.1} parent=1 // pred_fallthru
      _
    // Predicated region
    $region134: #{tpu_custom_call.1} parent=1 // pred_check
      _
    $region135: #{tpu_custom_call.1} parent=1 // pred_check_branch
      %255 = sbr.rel (0) target = $region137
    $region136: #{tpu_custom_call.1} parent=1 // pred_region
      %257 = dma.done [#allocation18], 32
    $region137: #{tpu_custom_call.1} parent=1 // pred_fallthru
      _
    // Predicated region
    $region138: #{tpu_custom_call.1} parent=1 // pred_check
      _
    $region139: #{tpu_custom_call.1} parent=1 // pred_check_branch
      %259 = sbr.rel (0) target = $region141
    $region140: #{tpu_custom_call.1} parent=1 // pred_region
      %261 = dma.done [#allocation18], 32
    $region141: #{tpu_custom_call.1} parent=1 // pred_fallthru
      _
    // Predicated region
    $region142: #{tpu_custom_call.1} parent=1 // pred_check
      _
    $region143: #{tpu_custom_call.1} parent=1 // pred_check_branch
      %263 = sbr.rel (0) target = $region145
    $region144: #{tpu_custom_call.1} parent=1 // pred_region
      %265 = dma.done [#allocation21], 16
    $region145: #{tpu_custom_call.1} parent=1 // pred_fallthru
      _
    %v266 = vld [vmem:[#allocation2] sm:$0xff]
    %v267 = vld [vmem:[#allocation2 + $0x8] sm:$0xff]
    %v268 = vld [vmem:[#allocation7] sm:$0xff]
    %v269 = vld [vmem:[#allocation7 + $0x8] sm:$0xff]
    %v270 = vld [vmem:[#allocation7 + $0x10] sm:$0xff]
    %v271 = vld [vmem:[#allocation7 + $0x18] sm:$0xff]
    %v272 = vld [vmem:[%s3] sm:$0x1]
    %v274 = vperm.slane %v272, 0
    %vm276 = vcmask 261120
    %v278 = vsel %vm276, %v266, 0
    %v281 = vsel %vm276, %v267, 0
    %283 = vmatpush.msra.mxu0 0.0
    %284 = vmatpush.msra.mxu0 0.0
    %285 = vmatpush.msra.mxu0 0.0
    %286 = vmatpush.msra.mxu0 0.0
    %287 = vmatpush.msra.mxu0 0.0
    %288 = vmatpush.msra.mxu0 0.0
    %289 = vmatpush.msra.mxu0 0.0
    %290 = vmatpush.msra.mxu0 0.0
    %291 = vmatpush.msra.mxu0 0.0
    %292 = vmatpush.msra.mxu0 0.0
    %293 = vmatpush.msra.mxu0 0.0
    %294 = vmatpush.msra.mxu0 0.0
    %295 = vmatpush.msra.mxu0 %v271
    %296 = vmatpush.msra.mxu0 %v270
    %297 = vmatpush.msra.mxu0 %v269
    %298 = vmatpush.msra.mxu0 %v268
    %299 = vmatmul.f32.gmra.mxu0 %v278
    %v300 = vpop.f32.mrf.mxu0
    %v301 = vadd.f32 %v274, %v300
    %302 = vmatmul.f32.gmra.mxu0 %v281
    %v303 = vpop.f32.mrf.mxu0
    %v304 = vadd.f32 %v274, %v303
    %305 = vdwg.mxu0
    %v306 = vld [vmem:[#allocation5] sm:$0xff]
    %v307 = vld [vmem:[#allocation5 + $0x8] sm:$0xff]
    %v308 = vadd.f32 %v301, %v306
    %v309 = vadd.f32 %v304, %v307
    %v310 = vld [vmem:[#allocation8] sm:$0xff]
    %v311 = vld [vmem:[#allocation8 + $0x8] sm:$0xff]
    %v312 = vld [vmem:[#allocation8 + $0x10] sm:$0xff]
    %v313 = vld [vmem:[#allocation8 + $0x18] sm:$0xff]
    %v314 = vld [vmem:[#allocation8 + $0x20] sm:$0xff]
    %v315 = vld [vmem:[#allocation8 + $0x28] sm:$0xff]
    %v316 = vld [vmem:[#allocation8 + $0x30] sm:$0xff]
    %v317 = vld [vmem:[#allocation8 + $0x38] sm:$0xff]
    %v318 = vld [vmem:[#allocation8 + $0x40] sm:$0xff]
    %v319 = vld [vmem:[#allocation8 + $0x48] sm:$0xff]
    %v320 = vld [vmem:[#allocation8 + $0x50] sm:$0xff]
    %v321 = vld [vmem:[#allocation8 + $0x58] sm:$0xff]
    %v322 = vld [vmem:[#allocation8 + $0x60] sm:$0xff]
    %v323 = vld [vmem:[#allocation8 + $0x68] sm:$0xff]
    %v324 = vld [vmem:[#allocation8 + $0x70] sm:$0xff]
    %v325 = vld [vmem:[#allocation8 + $0x78] sm:$0xff]
    %v326 = vld [vmem:[#allocation8 + $0x80] sm:$0xff]
    %v327 = vld [vmem:[#allocation8 + $0x88] sm:$0xff]
    %v328 = vld [vmem:[#allocation8 + $0x90] sm:$0xff]
    %v329 = vld [vmem:[#allocation8 + $0x98] sm:$0xff]
    %v330 = vld [vmem:[#allocation8 + $0xa0] sm:$0xff]
    %v331 = vld [vmem:[#allocation8 + $0xa8] sm:$0xff]
    %v332 = vld [vmem:[#allocation8 + $0xb0] sm:$0xff]
    %v333 = vld [vmem:[#allocation8 + $0xb8] sm:$0xff]
    %v334 = vld [vmem:[#allocation8 + $0xc0] sm:$0xff]
    %v335 = vld [vmem:[#allocation8 + $0xc8] sm:$0xff]
    %v336 = vld [vmem:[#allocation8 + $0xd0] sm:$0xff]
    %v337 = vld [vmem:[#allocation8 + $0xd8] sm:$0xff]
    %v338 = vld [vmem:[#allocation8 + $0xe0] sm:$0xff]
    %v339 = vld [vmem:[#allocation8 + $0xe8] sm:$0xff]
    %v340 = vld [vmem:[#allocation8 + $0xf0] sm:$0xff]
    %v341 = vld [vmem:[#allocation8 + $0xf8] sm:$0xff]
    %v342 = vld [vmem:[#allocation8 + $0x100] sm:$0xff]
    %v343 = vld [vmem:[#allocation8 + $0x108] sm:$0xff]
    %v344 = vld [vmem:[#allocation8 + $0x110] sm:$0xff]
    %v345 = vld [vmem:[#allocation8 + $0x118] sm:$0xff]
    %v346 = vld [vmem:[#allocation8 + $0x120] sm:$0xff]
    %v347 = vld [vmem:[#allocation8 + $0x128] sm:$0xff]
    %v348 = vld [vmem:[#allocation8 + $0x130] sm:$0xff]
    %v349 = vld [vmem:[#allocation8 + $0x138] sm:$0xff]
    %v350 = vld [vmem:[#allocation8 + $0x140] sm:$0xff]
    %v351 = vld [vmem:[#allocation8 + $0x148] sm:$0xff]
    %v352 = vld [vmem:[#allocation8 + $0x150] sm:$0xff]
    %v353 = vld [vmem:[#allocation8 + $0x158] sm:$0xff]
    %v354 = vld [vmem:[#allocation8 + $0x160] sm:$0xff]
    %v355 = vld [vmem:[#allocation8 + $0x168] sm:$0xff]
    %v356 = vld [vmem:[#allocation8 + $0x170] sm:$0xff]
    %v357 = vld [vmem:[#allocation8 + $0x178] sm:$0xff]
    %v358 = vld [vmem:[%s5] sm:$0x7]
    %v360 = vperm.slane %v358, 0
    %v361 = vperm.slane %v358, 1
    %v362 = vperm.slane %v358, 2
    %366 = vmatpush.msra.mxu0 %v355
    %367 = vmatpush.msra.mxu0 %v352
    %368 = vmatpush.msra.mxu0 %v349
    %369 = vmatpush.msra.mxu0 %v346
    %370 = vmatpush.msra.mxu0 %v343
    %371 = vmatpush.msra.mxu0 %v340
    %372 = vmatpush.msra.mxu0 %v337
    %373 = vmatpush.msra.mxu0 %v334
    %374 = vmatpush.msra.mxu0 %v331
    %375 = vmatpush.msra.mxu0 %v328
    %376 = vmatpush.msra.mxu0 %v325
    %377 = vmatpush.msra.mxu0 %v322
    %378 = vmatpush.msra.mxu0 %v319
    %379 = vmatpush.msra.mxu0 %v316
    %380 = vmatpush.msra.mxu0 %v313
    %381 = vmatpush.msra.mxu0 %v310
    %382 = vmatmul.f32.gmra.mxu0 %v308
    %v383 = vpop.f32.mrf.mxu0
    %v384 = vadd.f32 %v360, %v383
    %385 = vmatmul.f32.gmra.mxu0 %v309
    %v386 = vpop.f32.mrf.mxu0
    %v387 = vadd.f32 %v360, %v386
    %388 = vdwg.mxu0
    %389 = vmatpush.msra.mxu0 %v356
    %390 = vmatpush.msra.mxu0 %v353
    %391 = vmatpush.msra.mxu0 %v350
    %392 = vmatpush.msra.mxu0 %v347
    %393 = vmatpush.msra.mxu0 %v344
    %394 = vmatpush.msra.mxu0 %v341
    %395 = vmatpush.msra.mxu0 %v338
    %396 = vmatpush.msra.mxu0 %v335
    %397 = vmatpush.msra.mxu0 %v332
    %398 = vmatpush.msra.mxu0 %v329
    %399 = vmatpush.msra.mxu0 %v326
    %400 = vmatpush.msra.mxu0 %v323
    %401 = vmatpush.msra.mxu0 %v320
    %402 = vmatpush.msra.mxu0 %v317
    %403 = vmatpush.msra.mxu0 %v314
    %404 = vmatpush.msra.mxu0 %v311
    %405 = vmatmul.f32.gmra.mxu0 %v308
    %v406 = vpop.f32.mrf.mxu0
    %v407 = vadd.f32 %v361, %v406
    %408 = vmatmul.f32.gmra.mxu0 %v309
    %v409 = vpop.f32.mrf.mxu0
    %v410 = vadd.f32 %v361, %v409
    %411 = vdwg.mxu0
    %412 = vmatpush.msra.mxu0 %v357
    %413 = vmatpush.msra.mxu0 %v354
    %414 = vmatpush.msra.mxu0 %v351
    %415 = vmatpush.msra.mxu0 %v348
    %416 = vmatpush.msra.mxu0 %v345
    %417 = vmatpush.msra.mxu0 %v342
    %418 = vmatpush.msra.mxu0 %v339
    %419 = vmatpush.msra.mxu0 %v336
    %420 = vmatpush.msra.mxu0 %v333
    %421 = vmatpush.msra.mxu0 %v330
    %422 = vmatpush.msra.mxu0 %v327
    %423 = vmatpush.msra.mxu0 %v324
    %424 = vmatpush.msra.mxu0 %v321
    %425 = vmatpush.msra.mxu0 %v318
    %426 = vmatpush.msra.mxu0 %v315
    %427 = vmatpush.msra.mxu0 %v312
    %428 = vmatmul.f32.gmra.mxu0 %v308
    %v429 = vpop.f32.mrf.mxu0
    %v430 = vadd.f32 %v362, %v429
    %431 = vmatmul.f32.gmra.mxu0 %v309
    %v432 = vpop.f32.mrf.mxu0
    %v433 = vadd.f32 %v362, %v432
    %434 = vdwg.mxu0
    %437 = vrot.lane.b32.xlu0 %v384, 112
    %v438 = vpop.permute.xlu0 %437
    %439 = vrot.lane.b32.xlu0 %v387, 112
    %v440 = vpop.permute.xlu0 %439
    %441 = vrot.lane.b32.xlu0 %v384, 96
    %v442 = vpop.permute.xlu0 %441
    %443 = vrot.lane.b32.xlu0 %v387, 96
    %v444 = vpop.permute.xlu0 %443
    %445 = vrot.lane.b32.xlu0 %v384, 80
    %v446 = vpop.permute.xlu0 %445
    %447 = vrot.lane.b32.xlu0 %v387, 80
    %v448 = vpop.permute.xlu0 %447
    %449 = vrot.lane.b32.xlu0 %v384, 64
    %v450 = vpop.permute.xlu0 %449
    %451 = vrot.lane.b32.xlu0 %v387, 64
    %v452 = vpop.permute.xlu0 %451
    %453 = vrot.lane.b32.xlu0 %v384, 48
    %v454 = vpop.permute.xlu0 %453
    %455 = vrot.lane.b32.xlu0 %v387, 48
    %v456 = vpop.permute.xlu0 %455
    %457 = vrot.lane.b32.xlu0 %v384, 32
    %v458 = vpop.permute.xlu0 %457
    %459 = vrot.lane.b32.xlu0 %v387, 32
    %v460 = vpop.permute.xlu0 %459
    %461 = vrot.lane.b32.xlu0 %v384, 16
    %v462 = vpop.permute.xlu0 %461
    %463 = vrot.lane.b32.xlu0 %v387, 16
    %v464 = vpop.permute.xlu0 %463
    %467 = vrot.lane.b32.xlu0 %v407, 112
    %v468 = vpop.permute.xlu0 %467
    %469 = vrot.lane.b32.xlu0 %v410, 112
    %v470 = vpop.permute.xlu0 %469
    %471 = vrot.lane.b32.xlu0 %v407, 96
    %v472 = vpop.permute.xlu0 %471
    %473 = vrot.lane.b32.xlu0 %v410, 96
    %v474 = vpop.permute.xlu0 %473
    %475 = vrot.lane.b32.xlu0 %v407, 80
    %v476 = vpop.permute.xlu0 %475
    %477 = vrot.lane.b32.xlu0 %v410, 80
    %v478 = vpop.permute.xlu0 %477
    %479 = vrot.lane.b32.xlu0 %v407, 64
    %v480 = vpop.permute.xlu0 %479
    %481 = vrot.lane.b32.xlu0 %v410, 64
    %v482 = vpop.permute.xlu0 %481
    %483 = vrot.lane.b32.xlu0 %v407, 48
    %v484 = vpop.permute.xlu0 %483
    %485 = vrot.lane.b32.xlu0 %v410, 48
    %v486 = vpop.permute.xlu0 %485
    %487 = vrot.lane.b32.xlu0 %v407, 32
    %v488 = vpop.permute.xlu0 %487
    %489 = vrot.lane.b32.xlu0 %v410, 32
    %v490 = vpop.permute.xlu0 %489
    %491 = vrot.lane.b32.xlu0 %v407, 16
    %v492 = vpop.permute.xlu0 %491
    %493 = vrot.lane.b32.xlu0 %v410, 16
    %v494 = vpop.permute.xlu0 %493
    %497 = vrot.lane.b32.xlu0 %v430, 112
    %v498 = vpop.permute.xlu0 %497
    %499 = vrot.lane.b32.xlu0 %v433, 112
    %v500 = vpop.permute.xlu0 %499
    %503 = vrot.lane.b32.xlu0 %v430, 96
    %v504 = vpop.permute.xlu0 %503
    %505 = vrot.lane.b32.xlu0 %v433, 96
    %v506 = vpop.permute.xlu0 %505
    %509 = vrot.lane.b32.xlu0 %v430, 80
    %v510 = vpop.permute.xlu0 %509
    %511 = vrot.lane.b32.xlu0 %v433, 80
    %v512 = vpop.permute.xlu0 %511
    %515 = vrot.lane.b32.xlu0 %v430, 64
    %v516 = vpop.permute.xlu0 %515
    %517 = vrot.lane.b32.xlu0 %v433, 64
    %v518 = vpop.permute.xlu0 %517
    %521 = vrot.lane.b32.xlu0 %v430, 48
    %v522 = vpop.permute.xlu0 %521
    %523 = vrot.lane.b32.xlu0 %v433, 48
    %v524 = vpop.permute.xlu0 %523
    %527 = vrot.lane.b32.xlu0 %v430, 32
    %v528 = vpop.permute.xlu0 %527
    %529 = vrot.lane.b32.xlu0 %v433, 32
    %v530 = vpop.permute.xlu0 %529
    %533 = vrot.lane.b32.xlu0 %v430, 16
    %v534 = vpop.permute.xlu0 %533
    %535 = vrot.lane.b32.xlu0 %v433, 16
    %v536 = vpop.permute.xlu0 %535
    %vm539 = vcmask 130048
    %v540 = vsel %vm539, %v384, 0
    %v542 = vsel %vm539, %v407, 0
    %544 = vmatpush.xpose.msra.mxu0 0.0
    %545 = vmatpush.xpose.msra.mxu0 0.0
    %546 = vmatpush.xpose.msra.mxu0 0.0
    %547 = vmatpush.xpose.msra.mxu0 0.0
    %548 = vmatpush.xpose.msra.mxu0 0.0
    %549 = vmatpush.xpose.msra.mxu0 0.0
    %550 = vmatpush.xpose.msra.mxu0 0.0
    %551 = vmatpush.xpose.msra.mxu0 0.0
    %552 = vmatpush.xpose.msra.mxu0 0.0
    %553 = vmatpush.xpose.msra.mxu0 0.0
    %554 = vmatpush.xpose.msra.mxu0 0.0
    %555 = vmatpush.xpose.msra.mxu0 0.0
    %556 = vmatpush.xpose.msra.mxu0 0.0
    %557 = vmatpush.xpose.msra.mxu0 0.0
    %558 = vmatpush.xpose.msra.mxu0 0.0
    %559 = vmatpush.xpose.msra.mxu0 %v542
    %560 = vmatmul.f32.gmra.mxu0 %v540
    %v561 = vpop.f32.mrf.mxu0
    %v562 = vadd.f32 0.0, %v561
    %563 = vdwg.mxu0
    %v564 = vsel %vm539, %v438, 0
    %v566 = vsel %vm539, %v468, 0
    %568 = vmatpush.xpose.msra.mxu0 0.0
    %569 = vmatpush.xpose.msra.mxu0 0.0
    %570 = vmatpush.xpose.msra.mxu0 0.0
    %571 = vmatpush.xpose.msra.mxu0 0.0
    %572 = vmatpush.xpose.msra.mxu0 0.0
    %573 = vmatpush.xpose.msra.mxu0 0.0
    %574 = vmatpush.xpose.msra.mxu0 0.0
    %575 = vmatpush.xpose.msra.mxu0 0.0
    %576 = vmatpush.xpose.msra.mxu0 0.0
    %577 = vmatpush.xpose.msra.mxu0 0.0
    %578 = vmatpush.xpose.msra.mxu0 0.0
    %579 = vmatpush.xpose.msra.mxu0 0.0
    %580 = vmatpush.xpose.msra.mxu0 0.0
    %581 = vmatpush.xpose.msra.mxu0 0.0
    %582 = vmatpush.xpose.msra.mxu0 0.0
    %583 = vmatpush.xpose.msra.mxu0 %v566
    %584 = vmatmul.f32.gmra.mxu0 %v564
    %v585 = vpop.f32.mrf.mxu0
    %v586 = vadd.f32 0.0, %v585
    %587 = vdwg.mxu0
    %v588 = vsel %vm539, %v442, 0
    %v590 = vsel %vm539, %v472, 0
    %592 = vmatpush.xpose.msra.mxu0 0.0
    %593 = vmatpush.xpose.msra.mxu0 0.0
    %594 = vmatpush.xpose.msra.mxu0 0.0
    %595 = vmatpush.xpose.msra.mxu0 0.0
    %596 = vmatpush.xpose.msra.mxu0 0.0
    %597 = vmatpush.xpose.msra.mxu0 0.0
    %598 = vmatpush.xpose.msra.mxu0 0.0
    %599 = vmatpush.xpose.msra.mxu0 0.0
    %600 = vmatpush.xpose.msra.mxu0 0.0
    %601 = vmatpush.xpose.msra.mxu0 0.0
    %602 = vmatpush.xpose.msra.mxu0 0.0
    %603 = vmatpush.xpose.msra.mxu0 0.0
    %604 = vmatpush.xpose.msra.mxu0 0.0
    %605 = vmatpush.xpose.msra.mxu0 0.0
    %606 = vmatpush.xpose.msra.mxu0 0.0
    %607 = vmatpush.xpose.msra.mxu0 %v590
    %608 = vmatmul.f32.gmra.mxu0 %v588
    %v609 = vpop.f32.mrf.mxu0
    %v610 = vadd.f32 0.0, %v609
    %611 = vdwg.mxu0
    %v612 = vsel %vm539, %v446, 0
    %v614 = vsel %vm539, %v476, 0
    %616 = vmatpush.xpose.msra.mxu0 0.0
    %617 = vmatpush.xpose.msra.mxu0 0.0
    %618 = vmatpush.xpose.msra.mxu0 0.0
    %619 = vmatpush.xpose.msra.mxu0 0.0
    %620 = vmatpush.xpose.msra.mxu0 0.0
    %621 = vmatpush.xpose.msra.mxu0 0.0
    %622 = vmatpush.xpose.msra.mxu0 0.0
    %623 = vmatpush.xpose.msra.mxu0 0.0
    %624 = vmatpush.xpose.msra.mxu0 0.0
    %625 = vmatpush.xpose.msra.mxu0 0.0
    %626 = vmatpush.xpose.msra.mxu0 0.0
    %627 = vmatpush.xpose.msra.mxu0 0.0
    %628 = vmatpush.xpose.msra.mxu0 0.0
    %629 = vmatpush.xpose.msra.mxu0 0.0
    %630 = vmatpush.xpose.msra.mxu0 0.0
    %631 = vmatpush.xpose.msra.mxu0 %v614
    %632 = vmatmul.f32.gmra.mxu0 %v612
    %v633 = vpop.f32.mrf.mxu0
    %v634 = vadd.f32 0.0, %v633
    %635 = vdwg.mxu0
    %v636 = vsel %vm539, %v450, 0
    %v638 = vsel %vm539, %v480, 0
    %640 = vmatpush.xpose.msra.mxu0 0.0
    %641 = vmatpush.xpose.msra.mxu0 0.0
    %642 = vmatpush.xpose.msra.mxu0 0.0
    %643 = vmatpush.xpose.msra.mxu0 0.0
    %644 = vmatpush.xpose.msra.mxu0 0.0
    %645 = vmatpush.xpose.msra.mxu0 0.0
    %646 = vmatpush.xpose.msra.mxu0 0.0
    %647 = vmatpush.xpose.msra.mxu0 0.0
    %648 = vmatpush.xpose.msra.mxu0 0.0
    %649 = vmatpush.xpose.msra.mxu0 0.0
    %650 = vmatpush.xpose.msra.mxu0 0.0
    %651 = vmatpush.xpose.msra.mxu0 0.0
    %652 = vmatpush.xpose.msra.mxu0 0.0
    %653 = vmatpush.xpose.msra.mxu0 0.0
    %654 = vmatpush.xpose.msra.mxu0 0.0
    %655 = vmatpush.xpose.msra.mxu0 %v638
    %656 = vmatmul.f32.gmra.mxu0 %v636
    %v657 = vpop.f32.mrf.mxu0
    %v658 = vadd.f32 0.0, %v657
    %659 = vdwg.mxu0
    %v660 = vsel %vm539, %v454, 0
    %v662 = vsel %vm539, %v484, 0
    %664 = vmatpush.xpose.msra.mxu0 0.0
    %665 = vmatpush.xpose.msra.mxu0 0.0
    %666 = vmatpush.xpose.msra.mxu0 0.0
    %667 = vmatpush.xpose.msra.mxu0 0.0
    %668 = vmatpush.xpose.msra.mxu0 0.0
    %669 = vmatpush.xpose.msra.mxu0 0.0
    %670 = vmatpush.xpose.msra.mxu0 0.0
    %671 = vmatpush.xpose.msra.mxu0 0.0
    %672 = vmatpush.xpose.msra.mxu0 0.0
    %673 = vmatpush.xpose.msra.mxu0 0.0
    %674 = vmatpush.xpose.msra.mxu0 0.0
    %675 = vmatpush.xpose.msra.mxu0 0.0
    %676 = vmatpush.xpose.msra.mxu0 0.0
    %677 = vmatpush.xpose.msra.mxu0 0.0
    %678 = vmatpush.xpose.msra.mxu0 0.0
    %679 = vmatpush.xpose.msra.mxu0 %v662
    %680 = vmatmul.f32.gmra.mxu0 %v660
    %v681 = vpop.f32.mrf.mxu0
    %v682 = vadd.f32 0.0, %v681
    %683 = vdwg.mxu0
    %v684 = vsel %vm539, %v458, 0
    %v686 = vsel %vm539, %v488, 0
    %688 = vmatpush.xpose.msra.mxu0 0.0
    %689 = vmatpush.xpose.msra.mxu0 0.0
    %690 = vmatpush.xpose.msra.mxu0 0.0
    %691 = vmatpush.xpose.msra.mxu0 0.0
    %692 = vmatpush.xpose.msra.mxu0 0.0
    %693 = vmatpush.xpose.msra.mxu0 0.0
    %694 = vmatpush.xpose.msra.mxu0 0.0
    %695 = vmatpush.xpose.msra.mxu0 0.0
    %696 = vmatpush.xpose.msra.mxu0 0.0
    %697 = vmatpush.xpose.msra.mxu0 0.0
    %698 = vmatpush.xpose.msra.mxu0 0.0
    %699 = vmatpush.xpose.msra.mxu0 0.0
    %700 = vmatpush.xpose.msra.mxu0 0.0
    %701 = vmatpush.xpose.msra.mxu0 0.0
    %702 = vmatpush.xpose.msra.mxu0 0.0
    %703 = vmatpush.xpose.msra.mxu0 %v686
    %704 = vmatmul.f32.gmra.mxu0 %v684
    %v705 = vpop.f32.mrf.mxu0
    %v706 = vadd.f32 0.0, %v705
    %707 = vdwg.mxu0
    %v708 = vsel %vm539, %v462, 0
    %v710 = vsel %vm539, %v492, 0
    %712 = vmatpush.xpose.msra.mxu0 0.0
    %713 = vmatpush.xpose.msra.mxu0 0.0
    %714 = vmatpush.xpose.msra.mxu0 0.0
    %715 = vmatpush.xpose.msra.mxu0 0.0
    %716 = vmatpush.xpose.msra.mxu0 0.0
    %717 = vmatpush.xpose.msra.mxu0 0.0
    %718 = vmatpush.xpose.msra.mxu0 0.0
    %719 = vmatpush.xpose.msra.mxu0 0.0
    %720 = vmatpush.xpose.msra.mxu0 0.0
    %721 = vmatpush.xpose.msra.mxu0 0.0
    %722 = vmatpush.xpose.msra.mxu0 0.0
    %723 = vmatpush.xpose.msra.mxu0 0.0
    %724 = vmatpush.xpose.msra.mxu0 0.0
    %725 = vmatpush.xpose.msra.mxu0 0.0
    %726 = vmatpush.xpose.msra.mxu0 0.0
    %727 = vmatpush.xpose.msra.mxu0 %v710
    %728 = vmatmul.f32.gmra.mxu0 %v708
    %v729 = vpop.f32.mrf.mxu0
    %v730 = vadd.f32 0.0, %v729
    %731 = vdwg.mxu0
    %v732 = vsel %vm539, %v387, 0
    %v734 = vsel %vm539, %v410, 0
    %736 = vmatpush.xpose.msra.mxu0 0.0
    %737 = vmatpush.xpose.msra.mxu0 0.0
    %738 = vmatpush.xpose.msra.mxu0 0.0
    %739 = vmatpush.xpose.msra.mxu0 0.0
    %740 = vmatpush.xpose.msra.mxu0 0.0
    %741 = vmatpush.xpose.msra.mxu0 0.0
    %742 = vmatpush.xpose.msra.mxu0 0.0
    %743 = vmatpush.xpose.msra.mxu0 0.0
    %744 = vmatpush.xpose.msra.mxu0 0.0
    %745 = vmatpush.xpose.msra.mxu0 0.0
    %746 = vmatpush.xpose.msra.mxu0 0.0
    %747 = vmatpush.xpose.msra.mxu0 0.0
    %748 = vmatpush.xpose.msra.mxu0 0.0
    %749 = vmatpush.xpose.msra.mxu0 0.0
    %750 = vmatpush.xpose.msra.mxu0 0.0
    %751 = vmatpush.xpose.msra.mxu0 %v734
    %752 = vmatmul.f32.gmra.mxu0 %v732
    %v753 = vpop.f32.mrf.mxu0
    %v754 = vadd.f32 0.0, %v753
    %755 = vdwg.mxu0
    %v756 = vsel %vm539, %v440, 0
    %v758 = vsel %vm539, %v470, 0
    %760 = vmatpush.xpose.msra.mxu0 0.0
    %761 = vmatpush.xpose.msra.mxu0 0.0
    %762 = vmatpush.xpose.msra.mxu0 0.0
    %763 = vmatpush.xpose.msra.mxu0 0.0
    %764 = vmatpush.xpose.msra.mxu0 0.0
    %765 = vmatpush.xpose.msra.mxu0 0.0
    %766 = vmatpush.xpose.msra.mxu0 0.0
    %767 = vmatpush.xpose.msra.mxu0 0.0
    %768 = vmatpush.xpose.msra.mxu0 0.0
    %769 = vmatpush.xpose.msra.mxu0 0.0
    %770 = vmatpush.xpose.msra.mxu0 0.0
    %771 = vmatpush.xpose.msra.mxu0 0.0
    %772 = vmatpush.xpose.msra.mxu0 0.0
    %773 = vmatpush.xpose.msra.mxu0 0.0
    %774 = vmatpush.xpose.msra.mxu0 0.0
    %775 = vmatpush.xpose.msra.mxu0 %v758
    %776 = vmatmul.f32.gmra.mxu0 %v756
    %v777 = vpop.f32.mrf.mxu0
    %v778 = vadd.f32 0.0, %v777
    %779 = vdwg.mxu0
    %v780 = vsel %vm539, %v444, 0
    %v782 = vsel %vm539, %v474, 0
    %784 = vmatpush.xpose.msra.mxu0 0.0
    %785 = vmatpush.xpose.msra.mxu0 0.0
    %786 = vmatpush.xpose.msra.mxu0 0.0
    %787 = vmatpush.xpose.msra.mxu0 0.0
    %788 = vmatpush.xpose.msra.mxu0 0.0
    %789 = vmatpush.xpose.msra.mxu0 0.0
    %790 = vmatpush.xpose.msra.mxu0 0.0
    %791 = vmatpush.xpose.msra.mxu0 0.0
    %792 = vmatpush.xpose.msra.mxu0 0.0
    %793 = vmatpush.xpose.msra.mxu0 0.0
    %794 = vmatpush.xpose.msra.mxu0 0.0
    %795 = vmatpush.xpose.msra.mxu0 0.0
    %796 = vmatpush.xpose.msra.mxu0 0.0
    %797 = vmatpush.xpose.msra.mxu0 0.0
    %798 = vmatpush.xpose.msra.mxu0 0.0
    %799 = vmatpush.xpose.msra.mxu0 %v782
    %800 = vmatmul.f32.gmra.mxu0 %v780
    %v801 = vpop.f32.mrf.mxu0
    %v802 = vadd.f32 0.0, %v801
    %803 = vdwg.mxu0
    %v804 = vsel %vm539, %v448, 0
    %v806 = vsel %vm539, %v478, 0
    %808 = vmatpush.xpose.msra.mxu0 0.0
    %809 = vmatpush.xpose.msra.mxu0 0.0
    %810 = vmatpush.xpose.msra.mxu0 0.0
    %811 = vmatpush.xpose.msra.mxu0 0.0
    %812 = vmatpush.xpose.msra.mxu0 0.0
    %813 = vmatpush.xpose.msra.mxu0 0.0
    %814 = vmatpush.xpose.msra.mxu0 0.0
    %815 = vmatpush.xpose.msra.mxu0 0.0
    %816 = vmatpush.xpose.msra.mxu0 0.0
    %817 = vmatpush.xpose.msra.mxu0 0.0
    %818 = vmatpush.xpose.msra.mxu0 0.0
    %819 = vmatpush.xpose.msra.mxu0 0.0
    %820 = vmatpush.xpose.msra.mxu0 0.0
    %821 = vmatpush.xpose.msra.mxu0 0.0
    %822 = vmatpush.xpose.msra.mxu0 0.0
    %823 = vmatpush.xpose.msra.mxu0 %v806
    %824 = vmatmul.f32.gmra.mxu0 %v804
    %v825 = vpop.f32.mrf.mxu0
    %v826 = vadd.f32 0.0, %v825
    %827 = vdwg.mxu0
    %v828 = vsel %vm539, %v452, 0
    %v830 = vsel %vm539, %v482, 0
    %832 = vmatpush.xpose.msra.mxu0 0.0
    %833 = vmatpush.xpose.msra.mxu0 0.0
    %834 = vmatpush.xpose.msra.mxu0 0.0
    %835 = vmatpush.xpose.msra.mxu0 0.0
    %836 = vmatpush.xpose.msra.mxu0 0.0
    %837 = vmatpush.xpose.msra.mxu0 0.0
    %838 = vmatpush.xpose.msra.mxu0 0.0
    %839 = vmatpush.xpose.msra.mxu0 0.0
    %840 = vmatpush.xpose.msra.mxu0 0.0
    %841 = vmatpush.xpose.msra.mxu0 0.0
    %842 = vmatpush.xpose.msra.mxu0 0.0
    %843 = vmatpush.xpose.msra.mxu0 0.0
    %844 = vmatpush.xpose.msra.mxu0 0.0
    %845 = vmatpush.xpose.msra.mxu0 0.0
    %846 = vmatpush.xpose.msra.mxu0 0.0
    %847 = vmatpush.xpose.msra.mxu0 %v830
    %848 = vmatmul.f32.gmra.mxu0 %v828
    %v849 = vpop.f32.mrf.mxu0
    %v850 = vadd.f32 0.0, %v849
    %851 = vdwg.mxu0
    %v852 = vsel %vm539, %v456, 0
    %v854 = vsel %vm539, %v486, 0
    %856 = vmatpush.xpose.msra.mxu0 0.0
    %857 = vmatpush.xpose.msra.mxu0 0.0
    %858 = vmatpush.xpose.msra.mxu0 0.0
    %859 = vmatpush.xpose.msra.mxu0 0.0
    %860 = vmatpush.xpose.msra.mxu0 0.0
    %861 = vmatpush.xpose.msra.mxu0 0.0
    %862 = vmatpush.xpose.msra.mxu0 0.0
    %863 = vmatpush.xpose.msra.mxu0 0.0
    %864 = vmatpush.xpose.msra.mxu0 0.0
    %865 = vmatpush.xpose.msra.mxu0 0.0
    %866 = vmatpush.xpose.msra.mxu0 0.0
    %867 = vmatpush.xpose.msra.mxu0 0.0
    %868 = vmatpush.xpose.msra.mxu0 0.0
    %869 = vmatpush.xpose.msra.mxu0 0.0
    %870 = vmatpush.xpose.msra.mxu0 0.0
    %871 = vmatpush.xpose.msra.mxu0 %v854
    %872 = vmatmul.f32.gmra.mxu0 %v852
    %v873 = vpop.f32.mrf.mxu0
    %v874 = vadd.f32 0.0, %v873
    %875 = vdwg.mxu0
    %v876 = vsel %vm539, %v460, 0
    %v878 = vsel %vm539, %v490, 0
    %880 = vmatpush.xpose.msra.mxu0 0.0
    %881 = vmatpush.xpose.msra.mxu0 0.0
    %882 = vmatpush.xpose.msra.mxu0 0.0
    %883 = vmatpush.xpose.msra.mxu0 0.0
    %884 = vmatpush.xpose.msra.mxu0 0.0
    %885 = vmatpush.xpose.msra.mxu0 0.0
    %886 = vmatpush.xpose.msra.mxu0 0.0
    %887 = vmatpush.xpose.msra.mxu0 0.0
    %888 = vmatpush.xpose.msra.mxu0 0.0
    %889 = vmatpush.xpose.msra.mxu0 0.0
    %890 = vmatpush.xpose.msra.mxu0 0.0
    %891 = vmatpush.xpose.msra.mxu0 0.0
    %892 = vmatpush.xpose.msra.mxu0 0.0
    %893 = vmatpush.xpose.msra.mxu0 0.0
    %894 = vmatpush.xpose.msra.mxu0 0.0
    %895 = vmatpush.xpose.msra.mxu0 %v878
    %896 = vmatmul.f32.gmra.mxu0 %v876
    %v897 = vpop.f32.mrf.mxu0
    %v898 = vadd.f32 0.0, %v897
    %899 = vdwg.mxu0
    %v900 = vsel %vm539, %v464, 0
    %v902 = vsel %vm539, %v494, 0
    %904 = vmatpush.xpose.msra.mxu0 0.0
    %905 = vmatpush.xpose.msra.mxu0 0.0
    %906 = vmatpush.xpose.msra.mxu0 0.0
    %907 = vmatpush.xpose.msra.mxu0 0.0
    %908 = vmatpush.xpose.msra.mxu0 0.0
    %909 = vmatpush.xpose.msra.mxu0 0.0
    %910 = vmatpush.xpose.msra.mxu0 0.0
    %911 = vmatpush.xpose.msra.mxu0 0.0
    %912 = vmatpush.xpose.msra.mxu0 0.0
    %913 = vmatpush.xpose.msra.mxu0 0.0
    %914 = vmatpush.xpose.msra.mxu0 0.0
    %915 = vmatpush.xpose.msra.mxu0 0.0
    %916 = vmatpush.xpose.msra.mxu0 0.0
    %917 = vmatpush.xpose.msra.mxu0 0.0
    %918 = vmatpush.xpose.msra.mxu0 0.0
    %919 = vmatpush.xpose.msra.mxu0 %v902
    %920 = vmatmul.f32.gmra.mxu0 %v900
    %v921 = vpop.f32.mrf.mxu0
    %v922 = vadd.f32 0.0, %v921
    %923 = vdwg.mxu0
    %v924 = vmul.f32 %v562, 0.25
    %v925 = vmul.f32 %v586, 0.25
    %v926 = vmul.f32 %v610, 0.25
    %v927 = vmul.f32 %v634, 0.25
    %v928 = vmul.f32 %v658, 0.25
    %v929 = vmul.f32 %v682, 0.25
    %v930 = vmul.f32 %v706, 0.25
    %v931 = vmul.f32 %v730, 0.25
    %v932 = vmul.f32 %v754, 0.25
    %v933 = vmul.f32 %v778, 0.25
    %v934 = vmul.f32 %v802, 0.25
    %v935 = vmul.f32 %v826, 0.25
    %v936 = vmul.f32 %v850, 0.25
    %v937 = vmul.f32 %v874, 0.25
    %v938 = vmul.f32 %v898, 0.25
    %v939 = vmul.f32 %v922, 0.25
    %vm940 = vcmask 64512
    %v941 = vsel %vm940, %v924, -inf
    %942 = vmax.xlane.f32.xlu0 %v941
    %v943 = vpop.xlane.xlu0 %942
    %v944 = vsel %vm940, %v925, -inf
    %945 = vmax.xlane.f32.xlu0 %v944
    %v946 = vpop.xlane.xlu0 %945
    %v947 = vsel %vm940, %v926, -inf
    %948 = vmax.xlane.f32.xlu0 %v947
    %v949 = vpop.xlane.xlu0 %948
    %v950 = vsel %vm940, %v927, -inf
    %951 = vmax.xlane.f32.xlu0 %v950
    %v952 = vpop.xlane.xlu0 %951
    %v953 = vsel %vm940, %v928, -inf
    %954 = vmax.xlane.f32.xlu0 %v953
    %v955 = vpop.xlane.xlu0 %954
    %v956 = vsel %vm940, %v929, -inf
    %957 = vmax.xlane.f32.xlu0 %v956
    %v958 = vpop.xlane.xlu0 %957
    %v959 = vsel %vm940, %v930, -inf
    %960 = vmax.xlane.f32.xlu0 %v959
    %v961 = vpop.xlane.xlu0 %960
    %v962 = vsel %vm940, %v931, -inf
    %963 = vmax.xlane.f32.xlu0 %v962
    %v964 = vpop.xlane.xlu0 %963
    %v965 = vsel %vm940, %v932, -inf
    %966 = vmax.xlane.f32.xlu0 %v965
    %v967 = vpop.xlane.xlu0 %966
    %v968 = vsel %vm940, %v933, -inf
    %969 = vmax.xlane.f32.xlu0 %v968
    %v970 = vpop.xlane.xlu0 %969
    %v971 = vsel %vm940, %v934, -inf
    %972 = vmax.xlane.f32.xlu0 %v971
    %v973 = vpop.xlane.xlu0 %972
    %v974 = vsel %vm940, %v935, -inf
    %975 = vmax.xlane.f32.xlu0 %v974
    %v976 = vpop.xlane.xlu0 %975
    %v977 = vsel %vm940, %v936, -inf
    %978 = vmax.xlane.f32.xlu0 %v977
    %v979 = vpop.xlane.xlu0 %978
    %v980 = vsel %vm940, %v937, -inf
    %981 = vmax.xlane.f32.xlu0 %v980
    %v982 = vpop.xlane.xlu0 %981
    %v983 = vsel %vm940, %v938, -inf
    %984 = vmax.xlane.f32.xlu0 %v983
    %v985 = vpop.xlane.xlu0 %984
    %v986 = vsel %vm940, %v939, -inf
    %987 = vmax.xlane.f32.xlu0 %v986
    %v988 = vpop.xlane.xlu0 %987
    %v989 = vsub.f32 %v924, %v943
    %v990 = vsub.f32 %v925, %v946
    %v991 = vsub.f32 %v926, %v949
    %v992 = vsub.f32 %v927, %v952
    %v993 = vsub.f32 %v928, %v955
    %v994 = vsub.f32 %v929, %v958
    %v995 = vsub.f32 %v930, %v961
    %v996 = vsub.f32 %v931, %v964
    %v997 = vsub.f32 %v932, %v967
    %v998 = vsub.f32 %v933, %v970
    %v999 = vsub.f32 %v934, %v973
    %v1000 = vsub.f32 %v935, %v976
    %v1001 = vsub.f32 %v936, %v979
    %v1002 = vsub.f32 %v937, %v982
    %v1003 = vsub.f32 %v938, %v985
    %v1004 = vsub.f32 %v939, %v988
    %v1005 = vmul.f32 %v989, 1.442695
    %v1006 = vpow.pop %v1005
    %v1007 = vmul.f32 %v990, 1.442695
    %v1008 = vpow.pop %v1007
    %v1009 = vmul.f32 %v991, 1.442695
    %v1010 = vpow.pop %v1009
    %v1011 = vmul.f32 %v992, 1.442695
    %v1012 = vpow.pop %v1011
    %v1013 = vmul.f32 %v993, 1.442695
    %v1014 = vpow.pop %v1013
    %v1015 = vmul.f32 %v994, 1.442695
    %v1016 = vpow.pop %v1015
    %v1017 = vmul.f32 %v995, 1.442695
    %v1018 = vpow.pop %v1017
    %v1019 = vmul.f32 %v996, 1.442695
    %v1020 = vpow.pop %v1019
    %v1021 = vmul.f32 %v997, 1.442695
    %v1022 = vpow.pop %v1021
    %v1023 = vmul.f32 %v998, 1.442695
    %v1024 = vpow.pop %v1023
    %v1025 = vmul.f32 %v999, 1.442695
    %v1026 = vpow.pop %v1025
    %v1027 = vmul.f32 %v1000, 1.442695
    %v1028 = vpow.pop %v1027
    %v1029 = vmul.f32 %v1001, 1.442695
    %v1030 = vpow.pop %v1029
    %v1031 = vmul.f32 %v1002, 1.442695
    %v1032 = vpow.pop %v1031
    %v1033 = vmul.f32 %v1003, 1.442695
    %v1034 = vpow.pop %v1033
    %v1035 = vmul.f32 %v1004, 1.442695
    %v1036 = vpow.pop %v1035
    %v1037 = vsel %vm940, %v1006, 0.0
    %1038 = vadd.xlane.f32.xlu0 %v1037
    %v1039 = vpop.xlane.xlu0 %1038
    %v1040 = vsel %vm940, %v1008, 0.0
    %1041 = vadd.xlane.f32.xlu0 %v1040
    %v1042 = vpop.xlane.xlu0 %1041
    %v1043 = vsel %vm940, %v1010, 0.0
    %1044 = vadd.xlane.f32.xlu0 %v1043
    %v1045 = vpop.xlane.xlu0 %1044
    %v1046 = vsel %vm940, %v1012, 0.0
    %1047 = vadd.xlane.f32.xlu0 %v1046
    %v1048 = vpop.xlane.xlu0 %1047
    %v1049 = vsel %vm940, %v1014, 0.0
    %1050 = vadd.xlane.f32.xlu0 %v1049
    %v1051 = vpop.xlane.xlu0 %1050
    %v1052 = vsel %vm940, %v1016, 0.0
    %1053 = vadd.xlane.f32.xlu0 %v1052
    %v1054 = vpop.xlane.xlu0 %1053
    %v1055 = vsel %vm940, %v1018, 0.0
    %1056 = vadd.xlane.f32.xlu0 %v1055
    %v1057 = vpop.xlane.xlu0 %1056
    %v1058 = vsel %vm940, %v1020, 0.0
    %1059 = vadd.xlane.f32.xlu0 %v1058
    %v1060 = vpop.xlane.xlu0 %1059
    %v1061 = vsel %vm940, %v1022, 0.0
    %1062 = vadd.xlane.f32.xlu0 %v1061
    %v1063 = vpop.xlane.xlu0 %1062
    %v1064 = vsel %vm940, %v1024, 0.0
    %1065 = vadd.xlane.f32.xlu0 %v1064
    %v1066 = vpop.xlane.xlu0 %1065
    %v1067 = vsel %vm940, %v1026, 0.0
    %1068 = vadd.xlane.f32.xlu0 %v1067
    %v1069 = vpop.xlane.xlu0 %1068
    %v1070 = vsel %vm940, %v1028, 0.0
    %1071 = vadd.xlane.f32.xlu0 %v1070
    %v1072 = vpop.xlane.xlu0 %1071
    %v1073 = vsel %vm940, %v1030, 0.0
    %1074 = vadd.xlane.f32.xlu0 %v1073
    %v1075 = vpop.xlane.xlu0 %1074
    %v1076 = vsel %vm940, %v1032, 0.0
    %1077 = vadd.xlane.f32.xlu0 %v1076
    %v1078 = vpop.xlane.xlu0 %1077
    %v1079 = vsel %vm940, %v1034, 0.0
    %1080 = vadd.xlane.f32.xlu0 %v1079
    %v1081 = vpop.xlane.xlu0 %1080
    %v1082 = vsel %vm940, %v1036, 0.0
    %1083 = vadd.xlane.f32.xlu0 %v1082
    %v1084 = vpop.xlane.xlu0 %1083
    %v1085 = vrcp.pop %v1039
    %v1086 = vmul.f32 %v1039, %v1085
    %v1087 = vsub.f32 1.0, %v1086
    %v1088 = vmul.f32 %v1085, %v1087
    %v1089 = vadd.f32 %v1085, %v1088
    %vm1090 = vweird.f32 %v1039
    %vm1091 = vweird.f32 %v1085
    %vm1092 = vmor %vm1090, %vm1091
    %v1093 = vsel %vm1092, %v1085, %v1089
    %v1094 = vand.u32 2147483647, %v1039
    %vm1095 = vcmp.eq.f32.partialorder %v1094, 8.507059e+37
    %v1096 = vand.u32 %v1039, 2147483648
    %v1097 = vor.u32 1.1754944e-38, %v1096
    %v1098 = vsel %vm1095, %v1097, %v1093
    %v1099 = vmul.f32 1.0, %v1098
    %v1100 = vrcp.pop %v1042
    %v1101 = vmul.f32 %v1042, %v1100
    %v1102 = vsub.f32 1.0, %v1101
    %v1103 = vmul.f32 %v1100, %v1102
    %v1104 = vadd.f32 %v1100, %v1103
    %vm1105 = vweird.f32 %v1042
    %vm1106 = vweird.f32 %v1100
    %vm1107 = vmor %vm1105, %vm1106
    %v1108 = vsel %vm1107, %v1100, %v1104
    %v1109 = vand.u32 2147483647, %v1042
    %vm1110 = vcmp.eq.f32.partialorder %v1109, 8.507059e+37
    %v1111 = vand.u32 %v1042, 2147483648
    %v1112 = vor.u32 1.1754944e-38, %v1111
    %v1113 = vsel %vm1110, %v1112, %v1108
    %v1114 = vmul.f32 1.0, %v1113
    %v1115 = vrcp.pop %v1045
    %v1116 = vmul.f32 %v1045, %v1115
    %v1117 = vsub.f32 1.0, %v1116
    %v1118 = vmul.f32 %v1115, %v1117
    %v1119 = vadd.f32 %v1115, %v1118
    %vm1120 = vweird.f32 %v1045
    %vm1121 = vweird.f32 %v1115
    %vm1122 = vmor %vm1120, %vm1121
    %v1123 = vsel %vm1122, %v1115, %v1119
    %v1124 = vand.u32 2147483647, %v1045
    %vm1125 = vcmp.eq.f32.partialorder %v1124, 8.507059e+37
    %v1126 = vand.u32 %v1045, 2147483648
    %v1127 = vor.u32 1.1754944e-38, %v1126
    %v1128 = vsel %vm1125, %v1127, %v1123
    %v1129 = vmul.f32 1.0, %v1128
    %v1130 = vrcp.pop %v1048
    %v1131 = vmul.f32 %v1048, %v1130
    %v1132 = vsub.f32 1.0, %v1131
    %v1133 = vmul.f32 %v1130, %v1132
    %v1134 = vadd.f32 %v1130, %v1133
    %vm1135 = vweird.f32 %v1048
    %vm1136 = vweird.f32 %v1130
    %vm1137 = vmor %vm1135, %vm1136
    %v1138 = vsel %vm1137, %v1130, %v1134
    %v1139 = vand.u32 2147483647, %v1048
    %vm1140 = vcmp.eq.f32.partialorder %v1139, 8.507059e+37
    %v1141 = vand.u32 %v1048, 2147483648
    %v1142 = vor.u32 1.1754944e-38, %v1141
    %v1143 = vsel %vm1140, %v1142, %v1138
    %v1144 = vmul.f32 1.0, %v1143
    %v1145 = vrcp.pop %v1051
    %v1146 = vmul.f32 %v1051, %v1145
    %v1147 = vsub.f32 1.0, %v1146
    %v1148 = vmul.f32 %v1145, %v1147
    %v1149 = vadd.f32 %v1145, %v1148
    %vm1150 = vweird.f32 %v1051
    %vm1151 = vweird.f32 %v1145
    %vm1152 = vmor %vm1150, %vm1151
    %v1153 = vsel %vm1152, %v1145, %v1149
    %v1154 = vand.u32 2147483647, %v1051
    %vm1155 = vcmp.eq.f32.partialorder %v1154, 8.507059e+37
    %v1156 = vand.u32 %v1051, 2147483648
    %v1157 = vor.u32 1.1754944e-38, %v1156
    %v1158 = vsel %vm1155, %v1157, %v1153
    %v1159 = vmul.f32 1.0, %v1158
    %v1160 = vrcp.pop %v1054
    %v1161 = vmul.f32 %v1054, %v1160
    %v1162 = vsub.f32 1.0, %v1161
    %v1163 = vmul.f32 %v1160, %v1162
    %v1164 = vadd.f32 %v1160, %v1163
    %vm1165 = vweird.f32 %v1054
    %vm1166 = vweird.f32 %v1160
    %vm1167 = vmor %vm1165, %vm1166
    %v1168 = vsel %vm1167, %v1160, %v1164
    %v1169 = vand.u32 2147483647, %v1054
    %vm1170 = vcmp.eq.f32.partialorder %v1169, 8.507059e+37
    %v1171 = vand.u32 %v1054, 2147483648
    %v1172 = vor.u32 1.1754944e-38, %v1171
    %v1173 = vsel %vm1170, %v1172, %v1168
    %v1174 = vmul.f32 1.0, %v1173
    %v1175 = vrcp.pop %v1057
    %v1176 = vmul.f32 %v1057, %v1175
    %v1177 = vsub.f32 1.0, %v1176
    %v1178 = vmul.f32 %v1175, %v1177
    %v1179 = vadd.f32 %v1175, %v1178
    %vm1180 = vweird.f32 %v1057
    %vm1181 = vweird.f32 %v1175
    %vm1182 = vmor %vm1180, %vm1181
    %v1183 = vsel %vm1182, %v1175, %v1179
    %v1184 = vand.u32 2147483647, %v1057
    %vm1185 = vcmp.eq.f32.partialorder %v1184, 8.507059e+37
    %v1186 = vand.u32 %v1057, 2147483648
    %v1187 = vor.u32 1.1754944e-38, %v1186
    %v1188 = vsel %vm1185, %v1187, %v1183
    %v1189 = vmul.f32 1.0, %v1188
    %v1190 = vrcp.pop %v1060
    %v1191 = vmul.f32 %v1060, %v1190
    %v1192 = vsub.f32 1.0, %v1191
    %v1193 = vmul.f32 %v1190, %v1192
    %v1194 = vadd.f32 %v1190, %v1193
    %vm1195 = vweird.f32 %v1060
    %vm1196 = vweird.f32 %v1190
    %vm1197 = vmor %vm1195, %vm1196
    %v1198 = vsel %vm1197, %v1190, %v1194
    %v1199 = vand.u32 2147483647, %v1060
    %vm1200 = vcmp.eq.f32.partialorder %v1199, 8.507059e+37
    %v1201 = vand.u32 %v1060, 2147483648
    %v1202 = vor.u32 1.1754944e-38, %v1201
    %v1203 = vsel %vm1200, %v1202, %v1198
    %v1204 = vmul.f32 1.0, %v1203
    %v1205 = vrcp.pop %v1063
    %v1206 = vmul.f32 %v1063, %v1205
    %v1207 = vsub.f32 1.0, %v1206
    %v1208 = vmul.f32 %v1205, %v1207
    %v1209 = vadd.f32 %v1205, %v1208
    %vm1210 = vweird.f32 %v1063
    %vm1211 = vweird.f32 %v1205
    %vm1212 = vmor %vm1210, %vm1211
    %v1213 = vsel %vm1212, %v1205, %v1209
    %v1214 = vand.u32 2147483647, %v1063
    %vm1215 = vcmp.eq.f32.partialorder %v1214, 8.507059e+37
    %v1216 = vand.u32 %v1063, 2147483648
    %v1217 = vor.u32 1.1754944e-38, %v1216
    %v1218 = vsel %vm1215, %v1217, %v1213
    %v1219 = vmul.f32 1.0, %v1218
    %v1220 = vrcp.pop %v1066
    %v1221 = vmul.f32 %v1066, %v1220
    %v1222 = vsub.f32 1.0, %v1221
    %v1223 = vmul.f32 %v1220, %v1222
    %v1224 = vadd.f32 %v1220, %v1223
    %vm1225 = vweird.f32 %v1066
    %vm1226 = vweird.f32 %v1220
    %vm1227 = vmor %vm1225, %vm1226
    %v1228 = vsel %vm1227, %v1220, %v1224
    %v1229 = vand.u32 2147483647, %v1066
    %vm1230 = vcmp.eq.f32.partialorder %v1229, 8.507059e+37
    %v1231 = vand.u32 %v1066, 2147483648
    %v1232 = vor.u32 1.1754944e-38, %v1231
    %v1233 = vsel %vm1230, %v1232, %v1228
    %v1234 = vmul.f32 1.0, %v1233
    %v1235 = vrcp.pop %v1069
    %v1236 = vmul.f32 %v1069, %v1235
    %v1237 = vsub.f32 1.0, %v1236
    %v1238 = vmul.f32 %v1235, %v1237
    %v1239 = vadd.f32 %v1235, %v1238
    %vm1240 = vweird.f32 %v1069
    %vm1241 = vweird.f32 %v1235
    %vm1242 = vmor %vm1240, %vm1241
    %v1243 = vsel %vm1242, %v1235, %v1239
    %v1244 = vand.u32 2147483647, %v1069
    %vm1245 = vcmp.eq.f32.partialorder %v1244, 8.507059e+37
    %v1246 = vand.u32 %v1069, 2147483648
    %v1247 = vor.u32 1.1754944e-38, %v1246
    %v1248 = vsel %vm1245, %v1247, %v1243
    %v1249 = vmul.f32 1.0, %v1248
    %v1250 = vrcp.pop %v1072
    %v1251 = vmul.f32 %v1072, %v1250
    %v1252 = vsub.f32 1.0, %v1251
    %v1253 = vmul.f32 %v1250, %v1252
    %v1254 = vadd.f32 %v1250, %v1253
    %vm1255 = vweird.f32 %v1072
    %vm1256 = vweird.f32 %v1250
    %vm1257 = vmor %vm1255, %vm1256
    %v1258 = vsel %vm1257, %v1250, %v1254
    %v1259 = vand.u32 2147483647, %v1072
    %vm1260 = vcmp.eq.f32.partialorder %v1259, 8.507059e+37
    %v1261 = vand.u32 %v1072, 2147483648
    %v1262 = vor.u32 1.1754944e-38, %v1261
    %v1263 = vsel %vm1260, %v1262, %v1258
    %v1264 = vmul.f32 1.0, %v1263
    %v1265 = vrcp.pop %v1075
    %v1266 = vmul.f32 %v1075, %v1265
    %v1267 = vsub.f32 1.0, %v1266
    %v1268 = vmul.f32 %v1265, %v1267
    %v1269 = vadd.f32 %v1265, %v1268
    %vm1270 = vweird.f32 %v1075
    %vm1271 = vweird.f32 %v1265
    %vm1272 = vmor %vm1270, %vm1271
    %v1273 = vsel %vm1272, %v1265, %v1269
    %v1274 = vand.u32 2147483647, %v1075
    %vm1275 = vcmp.eq.f32.partialorder %v1274, 8.507059e+37
    %v1276 = vand.u32 %v1075, 2147483648
    %v1277 = vor.u32 1.1754944e-38, %v1276
    %v1278 = vsel %vm1275, %v1277, %v1273
    %v1279 = vmul.f32 1.0, %v1278
    %v1280 = vrcp.pop %v1078
    %v1281 = vmul.f32 %v1078, %v1280
    %v1282 = vsub.f32 1.0, %v1281
    %v1283 = vmul.f32 %v1280, %v1282
    %v1284 = vadd.f32 %v1280, %v1283
    %vm1285 = vweird.f32 %v1078
    %vm1286 = vweird.f32 %v1280
    %vm1287 = vmor %vm1285, %vm1286
    %v1288 = vsel %vm1287, %v1280, %v1284
    %v1289 = vand.u32 2147483647, %v1078
    %vm1290 = vcmp.eq.f32.partialorder %v1289, 8.507059e+37
    %v1291 = vand.u32 %v1078, 2147483648
    %v1292 = vor.u32 1.1754944e-38, %v1291
    %v1293 = vsel %vm1290, %v1292, %v1288
    %v1294 = vmul.f32 1.0, %v1293
    %v1295 = vrcp.pop %v1081
    %v1296 = vmul.f32 %v1081, %v1295
    %v1297 = vsub.f32 1.0, %v1296
    %v1298 = vmul.f32 %v1295, %v1297
    %v1299 = vadd.f32 %v1295, %v1298
    %vm1300 = vweird.f32 %v1081
    %vm1301 = vweird.f32 %v1295
    %vm1302 = vmor %vm1300, %vm1301
    %v1303 = vsel %vm1302, %v1295, %v1299
    %v1304 = vand.u32 2147483647, %v1081
    %vm1305 = vcmp.eq.f32.partialorder %v1304, 8.507059e+37
    %v1306 = vand.u32 %v1081, 2147483648
    %v1307 = vor.u32 1.1754944e-38, %v1306
    %v1308 = vsel %vm1305, %v1307, %v1303
    %v1309 = vmul.f32 1.0, %v1308
    %v1310 = vrcp.pop %v1084
    %v1311 = vmul.f32 %v1084, %v1310
    %v1312 = vsub.f32 1.0, %v1311
    %v1313 = vmul.f32 %v1310, %v1312
    %v1314 = vadd.f32 %v1310, %v1313
    %vm1315 = vweird.f32 %v1084
    %vm1316 = vweird.f32 %v1310
    %vm1317 = vmor %vm1315, %vm1316
    %v1318 = vsel %vm1317, %v1310, %v1314
    %v1319 = vand.u32 2147483647, %v1084
    %vm1320 = vcmp.eq.f32.partialorder %v1319, 8.507059e+37
    %v1321 = vand.u32 %v1084, 2147483648
    %v1322 = vor.u32 1.1754944e-38, %v1321
    %v1323 = vsel %vm1320, %v1322, %v1318
    %v1324 = vmul.f32 1.0, %v1323
    %v1325 = vmul.f32 %v1006, %v1099
    %v1326 = vmul.f32 %v1008, %v1114
    %v1327 = vmul.f32 %v1010, %v1129
    %v1328 = vmul.f32 %v1012, %v1144
    %v1329 = vmul.f32 %v1014, %v1159
    %v1330 = vmul.f32 %v1016, %v1174
    %v1331 = vmul.f32 %v1018, %v1189
    %v1332 = vmul.f32 %v1020, %v1204
    %v1333 = vmul.f32 %v1022, %v1219
    %v1334 = vmul.f32 %v1024, %v1234
    %v1335 = vmul.f32 %v1026, %v1249
    %v1336 = vmul.f32 %v1028, %v1264
    %v1337 = vmul.f32 %v1030, %v1279
    %v1338 = vmul.f32 %v1032, %v1294
    %v1339 = vmul.f32 %v1034, %v1309
    %v1340 = vmul.f32 %v1036, %v1324
    %v1342 = vsel %vm940, %v1325, 0
    %1344 = vmatpush.msra.mxu0 0.0
    %1345 = vmatpush.msra.mxu0 0.0
    %1346 = vmatpush.msra.mxu0 0.0
    %1347 = vmatpush.msra.mxu0 0.0
    %1348 = vmatpush.msra.mxu0 0.0
    %1349 = vmatpush.msra.mxu0 0.0
    %1350 = vmatpush.msra.mxu0 0.0
    %1351 = vmatpush.msra.mxu0 0.0
    %1352 = vmatpush.msra.mxu0 0.0
    %1353 = vmatpush.msra.mxu0 0.0
    %1354 = vmatpush.msra.mxu0 0.0
    %1355 = vmatpush.msra.mxu0 0.0
    %1356 = vmatpush.msra.mxu0 0.0
    %1357 = vmatpush.msra.mxu0 0.0
    %1358 = vmatpush.msra.mxu0 0.0
    %1359 = vmatpush.msra.mxu0 %v430
    %1360 = vmatmul.f32.gmra.mxu0 %v1342
    %v1361 = vpop.f32.mrf.mxu0
    %v1362 = vadd.f32 0.0, %v1361
    %1363 = vdwg.mxu0
    %v1365 = vsel %vm940, %v1326, 0
    %1367 = vmatpush.msra.mxu0 0.0
    %1368 = vmatpush.msra.mxu0 0.0
    %1369 = vmatpush.msra.mxu0 0.0
    %1370 = vmatpush.msra.mxu0 0.0
    %1371 = vmatpush.msra.mxu0 0.0
    %1372 = vmatpush.msra.mxu0 0.0
    %1373 = vmatpush.msra.mxu0 0.0
    %1374 = vmatpush.msra.mxu0 0.0
    %1375 = vmatpush.msra.mxu0 0.0
    %1376 = vmatpush.msra.mxu0 0.0
    %1377 = vmatpush.msra.mxu0 0.0
    %1378 = vmatpush.msra.mxu0 0.0
    %1379 = vmatpush.msra.mxu0 0.0
    %1380 = vmatpush.msra.mxu0 0.0
    %1381 = vmatpush.msra.mxu0 0.0
    %1382 = vmatpush.msra.mxu0 %v498
    %1383 = vmatmul.f32.gmra.mxu0 %v1365
    %v1384 = vpop.f32.mrf.mxu0
    %v1385 = vadd.f32 0.0, %v1384
    %1386 = vdwg.mxu0
    %v1388 = vsel %vm940, %v1327, 0
    %1390 = vmatpush.msra.mxu0 0.0
    %1391 = vmatpush.msra.mxu0 0.0
    %1392 = vmatpush.msra.mxu0 0.0
    %1393 = vmatpush.msra.mxu0 0.0
    %1394 = vmatpush.msra.mxu0 0.0
    %1395 = vmatpush.msra.mxu0 0.0
    %1396 = vmatpush.msra.mxu0 0.0
    %1397 = vmatpush.msra.mxu0 0.0
    %1398 = vmatpush.msra.mxu0 0.0
    %1399 = vmatpush.msra.mxu0 0.0
    %1400 = vmatpush.msra.mxu0 0.0
    %1401 = vmatpush.msra.mxu0 0.0
    %1402 = vmatpush.msra.mxu0 0.0
    %1403 = vmatpush.msra.mxu0 0.0
    %1404 = vmatpush.msra.mxu0 0.0
    %1405 = vmatpush.msra.mxu0 %v504
    %1406 = vmatmul.f32.gmra.mxu0 %v1388
    %v1407 = vpop.f32.mrf.mxu0
    %v1408 = vadd.f32 0.0, %v1407
    %1409 = vdwg.mxu0
    %v1411 = vsel %vm940, %v1328, 0
    %1413 = vmatpush.msra.mxu0 0.0
    %1414 = vmatpush.msra.mxu0 0.0
    %1415 = vmatpush.msra.mxu0 0.0
    %1416 = vmatpush.msra.mxu0 0.0
    %1417 = vmatpush.msra.mxu0 0.0
    %1418 = vmatpush.msra.mxu0 0.0
    %1419 = vmatpush.msra.mxu0 0.0
    %1420 = vmatpush.msra.mxu0 0.0
    %1421 = vmatpush.msra.mxu0 0.0
    %1422 = vmatpush.msra.mxu0 0.0
    %1423 = vmatpush.msra.mxu0 0.0
    %1424 = vmatpush.msra.mxu0 0.0
    %1425 = vmatpush.msra.mxu0 0.0
    %1426 = vmatpush.msra.mxu0 0.0
    %1427 = vmatpush.msra.mxu0 0.0
    %1428 = vmatpush.msra.mxu0 %v510
    %1429 = vmatmul.f32.gmra.mxu0 %v1411
    %v1430 = vpop.f32.mrf.mxu0
    %v1431 = vadd.f32 0.0, %v1430
    %1432 = vdwg.mxu0
    %v1434 = vsel %vm940, %v1329, 0
    %1436 = vmatpush.msra.mxu0 0.0
    %1437 = vmatpush.msra.mxu0 0.0
    %1438 = vmatpush.msra.mxu0 0.0
    %1439 = vmatpush.msra.mxu0 0.0
    %1440 = vmatpush.msra.mxu0 0.0
    %1441 = vmatpush.msra.mxu0 0.0
    %1442 = vmatpush.msra.mxu0 0.0
    %1443 = vmatpush.msra.mxu0 0.0
    %1444 = vmatpush.msra.mxu0 0.0
    %1445 = vmatpush.msra.mxu0 0.0
    %1446 = vmatpush.msra.mxu0 0.0
    %1447 = vmatpush.msra.mxu0 0.0
    %1448 = vmatpush.msra.mxu0 0.0
    %1449 = vmatpush.msra.mxu0 0.0
    %1450 = vmatpush.msra.mxu0 0.0
    %1451 = vmatpush.msra.mxu0 %v516
    %1452 = vmatmul.f32.gmra.mxu0 %v1434
    %v1453 = vpop.f32.mrf.mxu0
    %v1454 = vadd.f32 0.0, %v1453
    %1455 = vdwg.mxu0
    %v1457 = vsel %vm940, %v1330, 0
    %1459 = vmatpush.msra.mxu0 0.0
    %1460 = vmatpush.msra.mxu0 0.0
    %1461 = vmatpush.msra.mxu0 0.0
    %1462 = vmatpush.msra.mxu0 0.0
    %1463 = vmatpush.msra.mxu0 0.0
    %1464 = vmatpush.msra.mxu0 0.0
    %1465 = vmatpush.msra.mxu0 0.0
    %1466 = vmatpush.msra.mxu0 0.0
    %1467 = vmatpush.msra.mxu0 0.0
    %1468 = vmatpush.msra.mxu0 0.0
    %1469 = vmatpush.msra.mxu0 0.0
    %1470 = vmatpush.msra.mxu0 0.0
    %1471 = vmatpush.msra.mxu0 0.0
    %1472 = vmatpush.msra.mxu0 0.0
    %1473 = vmatpush.msra.mxu0 0.0
    %1474 = vmatpush.msra.mxu0 %v522
    %1475 = vmatmul.f32.gmra.mxu0 %v1457
    %v1476 = vpop.f32.mrf.mxu0
    %v1477 = vadd.f32 0.0, %v1476
    %1478 = vdwg.mxu0
    %v1480 = vsel %vm940, %v1331, 0
    %1482 = vmatpush.msra.mxu0 0.0
    %1483 = vmatpush.msra.mxu0 0.0
    %1484 = vmatpush.msra.mxu0 0.0
    %1485 = vmatpush.msra.mxu0 0.0
    %1486 = vmatpush.msra.mxu0 0.0
    %1487 = vmatpush.msra.mxu0 0.0
    %1488 = vmatpush.msra.mxu0 0.0
    %1489 = vmatpush.msra.mxu0 0.0
    %1490 = vmatpush.msra.mxu0 0.0
    %1491 = vmatpush.msra.mxu0 0.0
    %1492 = vmatpush.msra.mxu0 0.0
    %1493 = vmatpush.msra.mxu0 0.0
    %1494 = vmatpush.msra.mxu0 0.0
    %1495 = vmatpush.msra.mxu0 0.0
    %1496 = vmatpush.msra.mxu0 0.0
    %1497 = vmatpush.msra.mxu0 %v528
    %1498 = vmatmul.f32.gmra.mxu0 %v1480
    %v1499 = vpop.f32.mrf.mxu0
    %v1500 = vadd.f32 0.0, %v1499
    %1501 = vdwg.mxu0
    %v1503 = vsel %vm940, %v1332, 0
    %1505 = vmatpush.msra.mxu0 0.0
    %1506 = vmatpush.msra.mxu0 0.0
    %1507 = vmatpush.msra.mxu0 0.0
    %1508 = vmatpush.msra.mxu0 0.0
    %1509 = vmatpush.msra.mxu0 0.0
    %1510 = vmatpush.msra.mxu0 0.0
    %1511 = vmatpush.msra.mxu0 0.0
    %1512 = vmatpush.msra.mxu0 0.0
    %1513 = vmatpush.msra.mxu0 0.0
    %1514 = vmatpush.msra.mxu0 0.0
    %1515 = vmatpush.msra.mxu0 0.0
    %1516 = vmatpush.msra.mxu0 0.0
    %1517 = vmatpush.msra.mxu0 0.0
    %1518 = vmatpush.msra.mxu0 0.0
    %1519 = vmatpush.msra.mxu0 0.0
    %1520 = vmatpush.msra.mxu0 %v534
    %1521 = vmatmul.f32.gmra.mxu0 %v1503
    %v1522 = vpop.f32.mrf.mxu0
    %v1523 = vadd.f32 0.0, %v1522
    %1524 = vdwg.mxu0
    %v1526 = vsel %vm940, %v1333, 0
    %1528 = vmatpush.msra.mxu0 0.0
    %1529 = vmatpush.msra.mxu0 0.0
    %1530 = vmatpush.msra.mxu0 0.0
    %1531 = vmatpush.msra.mxu0 0.0
    %1532 = vmatpush.msra.mxu0 0.0
    %1533 = vmatpush.msra.mxu0 0.0
    %1534 = vmatpush.msra.mxu0 0.0
    %1535 = vmatpush.msra.mxu0 0.0
    %1536 = vmatpush.msra.mxu0 0.0
    %1537 = vmatpush.msra.mxu0 0.0
    %1538 = vmatpush.msra.mxu0 0.0
    %1539 = vmatpush.msra.mxu0 0.0
    %1540 = vmatpush.msra.mxu0 0.0
    %1541 = vmatpush.msra.mxu0 0.0
    %1542 = vmatpush.msra.mxu0 0.0
    %1543 = vmatpush.msra.mxu0 %v433
    %1544 = vmatmul.f32.gmra.mxu0 %v1526
    %v1545 = vpop.f32.mrf.mxu0
    %v1546 = vadd.f32 0.0, %v1545
    %1547 = vdwg.mxu0
    %v1549 = vsel %vm940, %v1334, 0
    %1551 = vmatpush.msra.mxu0 0.0
    %1552 = vmatpush.msra.mxu0 0.0
    %1553 = vmatpush.msra.mxu0 0.0
    %1554 = vmatpush.msra.mxu0 0.0
    %1555 = vmatpush.msra.mxu0 0.0
    %1556 = vmatpush.msra.mxu0 0.0
    %1557 = vmatpush.msra.mxu0 0.0
    %1558 = vmatpush.msra.mxu0 0.0
    %1559 = vmatpush.msra.mxu0 0.0
    %1560 = vmatpush.msra.mxu0 0.0
    %1561 = vmatpush.msra.mxu0 0.0
    %1562 = vmatpush.msra.mxu0 0.0
    %1563 = vmatpush.msra.mxu0 0.0
    %1564 = vmatpush.msra.mxu0 0.0
    %1565 = vmatpush.msra.mxu0 0.0
    %1566 = vmatpush.msra.mxu0 %v500
    %1567 = vmatmul.f32.gmra.mxu0 %v1549
    %v1568 = vpop.f32.mrf.mxu0
    %v1569 = vadd.f32 0.0, %v1568
    %1570 = vdwg.mxu0
    %v1572 = vsel %vm940, %v1335, 0
    %1574 = vmatpush.msra.mxu0 0.0
    %1575 = vmatpush.msra.mxu0 0.0
    %1576 = vmatpush.msra.mxu0 0.0
    %1577 = vmatpush.msra.mxu0 0.0
    %1578 = vmatpush.msra.mxu0 0.0
    %1579 = vmatpush.msra.mxu0 0.0
    %1580 = vmatpush.msra.mxu0 0.0
    %1581 = vmatpush.msra.mxu0 0.0
    %1582 = vmatpush.msra.mxu0 0.0
    %1583 = vmatpush.msra.mxu0 0.0
    %1584 = vmatpush.msra.mxu0 0.0
    %1585 = vmatpush.msra.mxu0 0.0
    %1586 = vmatpush.msra.mxu0 0.0
    %1587 = vmatpush.msra.mxu0 0.0
    %1588 = vmatpush.msra.mxu0 0.0
    %1589 = vmatpush.msra.mxu0 %v506
    %1590 = vmatmul.f32.gmra.mxu0 %v1572
    %v1591 = vpop.f32.mrf.mxu0
    %v1592 = vadd.f32 0.0, %v1591
    %1593 = vdwg.mxu0
    %v1595 = vsel %vm940, %v1336, 0
    %1597 = vmatpush.msra.mxu0 0.0
    %1598 = vmatpush.msra.mxu0 0.0
    %1599 = vmatpush.msra.mxu0 0.0
    %1600 = vmatpush.msra.mxu0 0.0
    %1601 = vmatpush.msra.mxu0 0.0
    %1602 = vmatpush.msra.mxu0 0.0
    %1603 = vmatpush.msra.mxu0 0.0
    %1604 = vmatpush.msra.mxu0 0.0
    %1605 = vmatpush.msra.mxu0 0.0
    %1606 = vmatpush.msra.mxu0 0.0
    %1607 = vmatpush.msra.mxu0 0.0
    %1608 = vmatpush.msra.mxu0 0.0
    %1609 = vmatpush.msra.mxu0 0.0
    %1610 = vmatpush.msra.mxu0 0.0
    %1611 = vmatpush.msra.mxu0 0.0
    %1612 = vmatpush.msra.mxu0 %v512
    %1613 = vmatmul.f32.gmra.mxu0 %v1595
    %v1614 = vpop.f32.mrf.mxu0
    %v1615 = vadd.f32 0.0, %v1614
    %1616 = vdwg.mxu0
    %v1618 = vsel %vm940, %v1337, 0
    %1620 = vmatpush.msra.mxu0 0.0
    %1621 = vmatpush.msra.mxu0 0.0
    %1622 = vmatpush.msra.mxu0 0.0
    %1623 = vmatpush.msra.mxu0 0.0
    %1624 = vmatpush.msra.mxu0 0.0
    %1625 = vmatpush.msra.mxu0 0.0
    %1626 = vmatpush.msra.mxu0 0.0
    %1627 = vmatpush.msra.mxu0 0.0
    %1628 = vmatpush.msra.mxu0 0.0
    %1629 = vmatpush.msra.mxu0 0.0
    %1630 = vmatpush.msra.mxu0 0.0
    %1631 = vmatpush.msra.mxu0 0.0
    %1632 = vmatpush.msra.mxu0 0.0
    %1633 = vmatpush.msra.mxu0 0.0
    %1634 = vmatpush.msra.mxu0 0.0
    %1635 = vmatpush.msra.mxu0 %v518
    %1636 = vmatmul.f32.gmra.mxu0 %v1618
    %v1637 = vpop.f32.mrf.mxu0
    %v1638 = vadd.f32 0.0, %v1637
    %1639 = vdwg.mxu0
    %v1641 = vsel %vm940, %v1338, 0
    %1643 = vmatpush.msra.mxu0 0.0
    %1644 = vmatpush.msra.mxu0 0.0
    %1645 = vmatpush.msra.mxu0 0.0
    %1646 = vmatpush.msra.mxu0 0.0
    %1647 = vmatpush.msra.mxu0 0.0
    %1648 = vmatpush.msra.mxu0 0.0
    %1649 = vmatpush.msra.mxu0 0.0
    %1650 = vmatpush.msra.mxu0 0.0
    %1651 = vmatpush.msra.mxu0 0.0
    %1652 = vmatpush.msra.mxu0 0.0
    %1653 = vmatpush.msra.mxu0 0.0
    %1654 = vmatpush.msra.mxu0 0.0
    %1655 = vmatpush.msra.mxu0 0.0
    %1656 = vmatpush.msra.mxu0 0.0
    %1657 = vmatpush.msra.mxu0 0.0
    %1658 = vmatpush.msra.mxu0 %v524
    %1659 = vmatmul.f32.gmra.mxu0 %v1641
    %v1660 = vpop.f32.mrf.mxu0
    %v1661 = vadd.f32 0.0, %v1660
    %1662 = vdwg.mxu0
    %v1664 = vsel %vm940, %v1339, 0
    %1666 = vmatpush.msra.mxu0 0.0
    %1667 = vmatpush.msra.mxu0 0.0
    %1668 = vmatpush.msra.mxu0 0.0
    %1669 = vmatpush.msra.mxu0 0.0
    %1670 = vmatpush.msra.mxu0 0.0
    %1671 = vmatpush.msra.mxu0 0.0
    %1672 = vmatpush.msra.mxu0 0.0
    %1673 = vmatpush.msra.mxu0 0.0
    %1674 = vmatpush.msra.mxu0 0.0
    %1675 = vmatpush.msra.mxu0 0.0
    %1676 = vmatpush.msra.mxu0 0.0
    %1677 = vmatpush.msra.mxu0 0.0
    %1678 = vmatpush.msra.mxu0 0.0
    %1679 = vmatpush.msra.mxu0 0.0
    %1680 = vmatpush.msra.mxu0 0.0
    %1681 = vmatpush.msra.mxu0 %v530
    %1682 = vmatmul.f32.gmra.mxu0 %v1664
    %v1683 = vpop.f32.mrf.mxu0
    %v1684 = vadd.f32 0.0, %v1683
    %1685 = vdwg.mxu0
    %v1687 = vsel %vm940, %v1340, 0
    %1689 = vmatpush.msra.mxu0 0.0
    %1690 = vmatpush.msra.mxu0 0.0
    %1691 = vmatpush.msra.mxu0 0.0
    %1692 = vmatpush.msra.mxu0 0.0
    %1693 = vmatpush.msra.mxu0 0.0
    %1694 = vmatpush.msra.mxu0 0.0
    %1695 = vmatpush.msra.mxu0 0.0
    %1696 = vmatpush.msra.mxu0 0.0
    %1697 = vmatpush.msra.mxu0 0.0
    %1698 = vmatpush.msra.mxu0 0.0
    %1699 = vmatpush.msra.mxu0 0.0
    %1700 = vmatpush.msra.mxu0 0.0
    %1701 = vmatpush.msra.mxu0 0.0
    %1702 = vmatpush.msra.mxu0 0.0
    %1703 = vmatpush.msra.mxu0 0.0
    %1704 = vmatpush.msra.mxu0 %v536
    %1705 = vmatmul.f32.gmra.mxu0 %v1687
    %v1706 = vpop.f32.mrf.mxu0
    %v1707 = vadd.f32 0.0, %v1706
    %1708 = vdwg.mxu0
    %1711 = vrot.lane.b32.xlu0 %v1385, 16
    %v1712 = vpop.permute.xlu0 %1711
    %1713 = vrot.lane.b32.xlu0 %v1569, 16
    %v1714 = vpop.permute.xlu0 %1713
    %1719 = vrot.lane.b32.xlu0 %v1408, 32
    %v1720 = vpop.permute.xlu0 %1719
    %1721 = vrot.lane.b32.xlu0 %v1592, 32
    %v1722 = vpop.permute.xlu0 %1721
    %1727 = vrot.lane.b32.xlu0 %v1431, 48
    %v1728 = vpop.permute.xlu0 %1727
    %1729 = vrot.lane.b32.xlu0 %v1615, 48
    %v1730 = vpop.permute.xlu0 %1729
    %1735 = vrot.lane.b32.xlu0 %v1454, 64
    %v1736 = vpop.permute.xlu0 %1735
    %1737 = vrot.lane.b32.xlu0 %v1638, 64
    %v1738 = vpop.permute.xlu0 %1737
    %1743 = vrot.lane.b32.xlu0 %v1477, 80
    %v1744 = vpop.permute.xlu0 %1743
    %1745 = vrot.lane.b32.xlu0 %v1661, 80
    %v1746 = vpop.permute.xlu0 %1745
    %1751 = vrot.lane.b32.xlu0 %v1500, 96
    %v1752 = vpop.permute.xlu0 %1751
    %1753 = vrot.lane.b32.xlu0 %v1684, 96
    %v1754 = vpop.permute.xlu0 %1753
    %1759 = vrot.lane.b32.xlu0 %v1523, 112
    %v1760 = vpop.permute.xlu0 %1759
    %1761 = vrot.lane.b32.xlu0 %v1707, 112
    %v1762 = vpop.permute.xlu0 %1761
    %v1765 = vsel %vm539, %v1362, %v1712
    %v1766 = vsel %vm539, %v1546, %v1714
    %v1767 = vsel %vm276, %v1765, %v1720
    %v1768 = vsel %vm276, %v1766, %v1722
    %vm1769 = vcmask 392192
    %v1770 = vsel %vm1769, %v1767, %v1728
    %v1771 = vsel %vm1769, %v1768, %v1730
    %vm1772 = vcmask 523264
    %v1773 = vsel %vm1772, %v1770, %v1736
    %v1774 = vsel %vm1772, %v1771, %v1738
    %vm1775 = vcmask 654336
    %v1776 = vsel %vm1775, %v1773, %v1744
    %v1777 = vsel %vm1775, %v1774, %v1746
    %vm1778 = vcmask 785408
    %v1779 = vsel %vm1778, %v1776, %v1752
    %v1780 = vsel %vm1778, %v1777, %v1754
    %vm1781 = vcmask 916480
    %v1782 = vsel %vm1781, %v1779, %v1760
    %v1783 = vsel %vm1781, %v1780, %v1762
    %v1784 = vld [vmem:[#allocation10] sm:$0xff]
    %v1785 = vld [vmem:[#allocation10 + $0x8] sm:$0xff]
    %v1786 = vld [vmem:[#allocation10 + $0x10] sm:$0xff]
    %v1787 = vld [vmem:[#allocation10 + $0x18] sm:$0xff]
    %v1788 = vld [vmem:[#allocation10 + $0x20] sm:$0xff]
    %v1789 = vld [vmem:[#allocation10 + $0x28] sm:$0xff]
    %v1790 = vld [vmem:[#allocation10 + $0x30] sm:$0xff]
    %v1791 = vld [vmem:[#allocation10 + $0x38] sm:$0xff]
    %v1792 = vld [vmem:[#allocation10 + $0x40] sm:$0xff]
    %v1793 = vld [vmem:[#allocation10 + $0x48] sm:$0xff]
    %v1794 = vld [vmem:[#allocation10 + $0x50] sm:$0xff]
    %v1795 = vld [vmem:[#allocation10 + $0x58] sm:$0xff]
    %v1796 = vld [vmem:[#allocation10 + $0x60] sm:$0xff]
    %v1797 = vld [vmem:[#allocation10 + $0x68] sm:$0xff]
    %v1798 = vld [vmem:[#allocation10 + $0x70] sm:$0xff]
    %v1799 = vld [vmem:[#allocation10 + $0x78] sm:$0xff]
    %v1800 = vld [vmem:[%s7] sm:$0x1]
    %v1802 = vperm.slane %v1800, 0
    %1804 = vmatpush.msra.mxu0 %v1799
    %1805 = vmatpush.msra.mxu0 %v1798
    %1806 = vmatpush.msra.mxu0 %v1797
    %1807 = vmatpush.msra.mxu0 %v1796
    %1808 = vmatpush.msra.mxu0 %v1795
    %1809 = vmatpush.msra.mxu0 %v1794
    %1810 = vmatpush.msra.mxu0 %v1793
    %1811 = vmatpush.msra.mxu0 %v1792
    %1812 = vmatpush.msra.mxu0 %v1791
    %1813 = vmatpush.msra.mxu0 %v1790
    %1814 = vmatpush.msra.mxu0 %v1789
    %1815 = vmatpush.msra.mxu0 %v1788
    %1816 = vmatpush.msra.mxu0 %v1787
    %1817 = vmatpush.msra.mxu0 %v1786
    %1818 = vmatpush.msra.mxu0 %v1785
    %1819 = vmatpush.msra.mxu0 %v1784
    %1820 = vmatmul.f32.gmra.mxu0 %v1782
    %v1821 = vpop.f32.mrf.mxu0
    %v1822 = vadd.f32 %v1802, %v1821
    %1823 = vmatmul.f32.gmra.mxu0 %v1783
    %v1824 = vpop.f32.mrf.mxu0
    %v1825 = vadd.f32 %v1802, %v1824
    %1826 = vdwg.mxu0
    %v1827 = vadd.f32 %v308, %v1822
    %v1828 = vadd.f32 %v309, %v1825
    %v1829 = vld [vmem:[%s8] sm:$0x1]
    %v1830 = vld [vmem:[#allocation11] sm:$0x1]
    %1831 = vadd.xlane.f32.xlu0 %v1827
    %v1832 = vpop.xlane.xlu0 %1831
    %1833 = vadd.xlane.f32.xlu0 %v1828
    %v1834 = vpop.xlane.xlu0 %1833
    %v1835 = vrcp.pop 128.0
    %v1836 = vmul.f32 128.0, %v1835
    %v1837 = vsub.f32 1.0, %v1836
    %v1838 = vmul.f32 %v1835, %v1837
    %v1839 = vadd.f32 %v1835, %v1838
    %vm1840 = vweird.f32 %v1835
    %v1841 = vsel %vm1840, %v1835, %v1839
    %v1842 = vmul.f32 %v1832, %v1841
    %v1843 = vmul.f32 %v1834, %v1841
    %v1844 = vsub.f32 %v1827, %v1842
    %v1845 = vsub.f32 %v1828, %v1843
    %v1846 = vmul.f32 %v1844, %v1844
    %v1847 = vmul.f32 %v1845, %v1845
    %1848 = vadd.xlane.f32.xlu0 %v1846
    %v1849 = vpop.xlane.xlu0 %1848
    %1850 = vadd.xlane.f32.xlu0 %v1847
    %v1851 = vpop.xlane.xlu0 %1850
    %v1852 = vmul.f32 %v1849, %v1841
    %v1853 = vmul.f32 %v1851, %v1841
    %v1854 = vadd.f32 %v1852, 1e-05
    %v1855 = vadd.f32 %v1853, 1e-05
    %v1856 = vrsqrt.pop %v1854
    %v1857 = vmul.f32 %v1856, %v1854
    %v1858 = vmul.f32 %v1857, %v1856
    %v1859 = vmul.f32 0.5, %v1858
    %v1860 = vsub.f32 1.5, %v1859
    %v1861 = vmul.f32 %v1856, %v1860
    %vm1862 = vweird.f32 %v1854
    %vm1863 = vweird.f32 %v1856
    %vm1864 = vmor %vm1862, %vm1863
    %v1865 = vsel %vm1864, %v1856, %v1861
    %v1866 = vrsqrt.pop %v1855
    %v1867 = vmul.f32 %v1866, %v1855
    %v1868 = vmul.f32 %v1867, %v1866
    %v1869 = vmul.f32 0.5, %v1868
    %v1870 = vsub.f32 1.5, %v1869
    %v1871 = vmul.f32 %v1866, %v1870
    %vm1872 = vweird.f32 %v1855
    %vm1873 = vweird.f32 %v1866
    %vm1874 = vmor %vm1872, %vm1873
    %v1875 = vsel %vm1874, %v1866, %v1871
    %v1876 = vmul.f32 %v1844, %v1865
    %v1877 = vmul.f32 %v1845, %v1875
    %v1879 = vperm.slane %v1829, 0
    %v1881 = vmul.f32 %v1876, %v1879
    %v1882 = vmul.f32 %v1877, %v1879
    %v1884 = vperm.slane %v1830, 0
    %v1886 = vadd.f32 %v1881, %v1884
    %v1887 = vadd.f32 %v1882, %v1884
    %v1888 = vld [vmem:[#allocation13] sm:$0xff]
    %v1889 = vld [vmem:[#allocation13 + $0x8] sm:$0xff]
    %v1890 = vld [vmem:[#allocation13 + $0x10] sm:$0xff]
    %v1891 = vld [vmem:[#allocation13 + $0x18] sm:$0xff]
    %v1892 = vld [vmem:[#allocation13 + $0x20] sm:$0xff]
    %v1893 = vld [vmem:[#allocation13 + $0x28] sm:$0xff]
    %v1894 = vld [vmem:[#allocation13 + $0x30] sm:$0xff]
    %v1895 = vld [vmem:[#allocation13 + $0x38] sm:$0xff]
    %v1896 = vld [vmem:[#allocation13 + $0x40] sm:$0xff]
    %v1897 = vld [vmem:[#allocation13 + $0x48] sm:$0xff]
    %v1898 = vld [vmem:[#allocation13 + $0x50] sm:$0xff]
    %v1899 = vld [vmem:[#allocation13 + $0x58] sm:$0xff]
    %v1900 = vld [vmem:[#allocation13 + $0x60] sm:$0xff]
    %v1901 = vld [vmem:[#allocation13 + $0x68] sm:$0xff]
    %v1902 = vld [vmem:[#allocation13 + $0x70] sm:$0xff]
    %v1903 = vld [vmem:[#allocation13 + $0x78] sm:$0xff]
    %v1904 = vld [vmem:[#allocation13 + $0x80] sm:$0xff]
    %v1905 = vld [vmem:[#allocation13 + $0x88] sm:$0xff]
    %v1906 = vld [vmem:[#allocation13 + $0x90] sm:$0xff]
    %v1907 = vld [vmem:[#allocation13 + $0x98] sm:$0xff]
    %v1908 = vld [vmem:[#allocation13 + $0xa0] sm:$0xff]
    %v1909 = vld [vmem:[#allocation13 + $0xa8] sm:$0xff]
    %v1910 = vld [vmem:[#allocation13 + $0xb0] sm:$0xff]
    %v1911 = vld [vmem:[#allocation13 + $0xb8] sm:$0xff]
    %v1912 = vld [vmem:[#allocation13 + $0xc0] sm:$0xff]
    %v1913 = vld [vmem:[#allocation13 + $0xc8] sm:$0xff]
    %v1914 = vld [vmem:[#allocation13 + $0xd0] sm:$0xff]
    %v1915 = vld [vmem:[#allocation13 + $0xd8] sm:$0xff]
    %v1916 = vld [vmem:[#allocation13 + $0xe0] sm:$0xff]
    %v1917 = vld [vmem:[#allocation13 + $0xe8] sm:$0xff]
    %v1918 = vld [vmem:[#allocation13 + $0xf0] sm:$0xff]
    %v1919 = vld [vmem:[#allocation13 + $0xf8] sm:$0xff]
    %v1920 = vld [vmem:[%s11] sm:$0x3]
    %v1922 = vperm.slane %v1920, 0
    %v1923 = vperm.slane %v1920, 1
    %1926 = vmatpush.msra.mxu0 %v1918
    %1927 = vmatpush.msra.mxu0 %v1916
    %1928 = vmatpush.msra.mxu0 %v1914
    %1929 = vmatpush.msra.mxu0 %v1912
    %1930 = vmatpush.msra.mxu0 %v1910
    %1931 = vmatpush.msra.mxu0 %v1908
    %1932 = vmatpush.msra.mxu0 %v1906
    %1933 = vmatpush.msra.mxu0 %v1904
    %1934 = vmatpush.msra.mxu0 %v1902
    %1935 = vmatpush.msra.mxu0 %v1900
    %1936 = vmatpush.msra.mxu0 %v1898
    %1937 = vmatpush.msra.mxu0 %v1896
    %1938 = vmatpush.msra.mxu0 %v1894
    %1939 = vmatpush.msra.mxu0 %v1892
    %1940 = vmatpush.msra.mxu0 %v1890
    %1941 = vmatpush.msra.mxu0 %v1888
    %1942 = vmatmul.f32.gmra.mxu0 %v1886
    %v1943 = vpop.f32.mrf.mxu0
    %v1944 = vadd.f32 %v1922, %v1943
    %1945 = vmatmul.f32.gmra.mxu0 %v1887
    %v1946 = vpop.f32.mrf.mxu0
    %v1947 = vadd.f32 %v1922, %v1946
    %1948 = vdwg.mxu0
    %1949 = vmatpush.msra.mxu0 %v1919
    %1950 = vmatpush.msra.mxu0 %v1917
    %1951 = vmatpush.msra.mxu0 %v1915
    %1952 = vmatpush.msra.mxu0 %v1913
    %1953 = vmatpush.msra.mxu0 %v1911
    %1954 = vmatpush.msra.mxu0 %v1909
    %1955 = vmatpush.msra.mxu0 %v1907
    %1956 = vmatpush.msra.mxu0 %v1905
    %1957 = vmatpush.msra.mxu0 %v1903
    %1958 = vmatpush.msra.mxu0 %v1901
    %1959 = vmatpush.msra.mxu0 %v1899
    %1960 = vmatpush.msra.mxu0 %v1897
    %1961 = vmatpush.msra.mxu0 %v1895
    %1962 = vmatpush.msra.mxu0 %v1893
    %1963 = vmatpush.msra.mxu0 %v1891
    %1964 = vmatpush.msra.mxu0 %v1889
    %1965 = vmatmul.f32.gmra.mxu0 %v1886
    %v1966 = vpop.f32.mrf.mxu0
    %v1967 = vadd.f32 %v1923, %v1966
    %1968 = vmatmul.f32.gmra.mxu0 %v1887
    %v1969 = vpop.f32.mrf.mxu0
    %v1970 = vadd.f32 %v1923, %v1969
    %1971 = vdwg.mxu0
    %v1972 = vmax.f32 %v1944, 0.0
    %v1973 = vmax.f32 %v1967, 0.0
    %v1974 = vmax.f32 %v1947, 0.0
    %v1975 = vmax.f32 %v1970, 0.0
    %v1976 = vld [vmem:[#allocation14] sm:$0xff]
    %v1977 = vld [vmem:[#allocation14 + $0x8] sm:$0xff]
    %v1978 = vld [vmem:[#allocation14 + $0x10] sm:$0xff]
    %v1979 = vld [vmem:[#allocation14 + $0x18] sm:$0xff]
    %v1980 = vld [vmem:[#allocation14 + $0x20] sm:$0xff]
    %v1981 = vld [vmem:[#allocation14 + $0x28] sm:$0xff]
    %v1982 = vld [vmem:[#allocation14 + $0x30] sm:$0xff]
    %v1983 = vld [vmem:[#allocation14 + $0x38] sm:$0xff]
    %v1984 = vld [vmem:[#allocation14 + $0x40] sm:$0xff]
    %v1985 = vld [vmem:[#allocation14 + $0x48] sm:$0xff]
    %v1986 = vld [vmem:[#allocation14 + $0x50] sm:$0xff]
    %v1987 = vld [vmem:[#allocation14 + $0x58] sm:$0xff]
    %v1988 = vld [vmem:[#allocation14 + $0x60] sm:$0xff]
    %v1989 = vld [vmem:[#allocation14 + $0x68] sm:$0xff]
    %v1990 = vld [vmem:[#allocation14 + $0x70] sm:$0xff]
    %v1991 = vld [vmem:[#allocation14 + $0x78] sm:$0xff]
    %v1992 = vld [vmem:[#allocation14 + $0x80] sm:$0xff]
    %v1993 = vld [vmem:[#allocation14 + $0x88] sm:$0xff]
    %v1994 = vld [vmem:[#allocation14 + $0x90] sm:$0xff]
    %v1995 = vld [vmem:[#allocation14 + $0x98] sm:$0xff]
    %v1996 = vld [vmem:[#allocation14 + $0xa0] sm:$0xff]
    %v1997 = vld [vmem:[#allocation14 + $0xa8] sm:$0xff]
    %v1998 = vld [vmem:[#allocation14 + $0xb0] sm:$0xff]
    %v1999 = vld [vmem:[#allocation14 + $0xb8] sm:$0xff]
    %v2000 = vld [vmem:[#allocation14 + $0xc0] sm:$0xff]
    %v2001 = vld [vmem:[#allocation14 + $0xc8] sm:$0xff]
    %v2002 = vld [vmem:[#allocation14 + $0xd0] sm:$0xff]
    %v2003 = vld [vmem:[#allocation14 + $0xd8] sm:$0xff]
    %v2004 = vld [vmem:[#allocation14 + $0xe0] sm:$0xff]
    %v2005 = vld [vmem:[#allocation14 + $0xe8] sm:$0xff]
    %v2006 = vld [vmem:[#allocation14 + $0xf0] sm:$0xff]
    %v2007 = vld [vmem:[#allocation14 + $0xf8] sm:$0xff]
    %v2008 = vld [vmem:[#allocation16] sm:$0x1]
    %v2010 = vperm.slane %v2008, 0
    %2012 = vmatpush.msra.mxu0 %v1991
    %2013 = vmatpush.msra.mxu0 %v1990
    %2014 = vmatpush.msra.mxu0 %v1989
    %2015 = vmatpush.msra.mxu0 %v1988
    %2016 = vmatpush.msra.mxu0 %v1987
    %2017 = vmatpush.msra.mxu0 %v1986
    %2018 = vmatpush.msra.mxu0 %v1985
    %2019 = vmatpush.msra.mxu0 %v1984
    %2020 = vmatpush.msra.mxu0 %v1983
    %2021 = vmatpush.msra.mxu0 %v1982
    %2022 = vmatpush.msra.mxu0 %v1981
    %2023 = vmatpush.msra.mxu0 %v1980
    %2024 = vmatpush.msra.mxu0 %v1979
    %2025 = vmatpush.msra.mxu0 %v1978
    %2026 = vmatpush.msra.mxu0 %v1977
    %2027 = vmatpush.msra.mxu0 %v1976
    %2028 = vmatmul.f32.gmra.mxu0 %v1972
    %v2029 = vpop.f32.mrf.mxu0
    %v2030 = vadd.f32 %v2010, %v2029
    %2031 = vmatmul.f32.gmra.mxu0 %v1974
    %v2032 = vpop.f32.mrf.mxu0
    %v2033 = vadd.f32 %v2010, %v2032
    %2034 = vdwg.mxu0
    %2035 = vmatpush.msra.mxu0 %v2007
    %2036 = vmatpush.msra.mxu0 %v2006
    %2037 = vmatpush.msra.mxu0 %v2005
    %2038 = vmatpush.msra.mxu0 %v2004
    %2039 = vmatpush.msra.mxu0 %v2003
    %2040 = vmatpush.msra.mxu0 %v2002
    %2041 = vmatpush.msra.mxu0 %v2001
    %2042 = vmatpush.msra.mxu0 %v2000
    %2043 = vmatpush.msra.mxu0 %v1999
    %2044 = vmatpush.msra.mxu0 %v1998
    %2045 = vmatpush.msra.mxu0 %v1997
    %2046 = vmatpush.msra.mxu0 %v1996
    %2047 = vmatpush.msra.mxu0 %v1995
    %2048 = vmatpush.msra.mxu0 %v1994
    %2049 = vmatpush.msra.mxu0 %v1993
    %2050 = vmatpush.msra.mxu0 %v1992
    %2051 = vmatmul.f32.gmra.mxu0 %v1973
    %v2052 = vpop.f32.mrf.mxu0
    %v2053 = vadd.f32 %v2030, %v2052
    %2054 = vmatmul.f32.gmra.mxu0 %v1975
    %v2055 = vpop.f32.mrf.mxu0
    %v2056 = vadd.f32 %v2033, %v2055
    %2057 = vdwg.mxu0
    %v2058 = vadd.f32 %v1886, %v2053
    %v2059 = vadd.f32 %v1887, %v2056
    %v2060 = vld [vmem:[#allocation17] sm:$0x1]
    %v2061 = vld [vmem:[#allocation19] sm:$0x1]
    %2062 = vadd.xlane.f32.xlu0 %v2058
    %v2063 = vpop.xlane.xlu0 %2062
    %2064 = vadd.xlane.f32.xlu0 %v2059
    %v2065 = vpop.xlane.xlu0 %2064
    %v2066 = vmul.f32 %v2063, %v1841
    %v2067 = vmul.f32 %v2065, %v1841
    %v2068 = vsub.f32 %v2058, %v2066
    %v2069 = vsub.f32 %v2059, %v2067
    %v2070 = vmul.f32 %v2068, %v2068
    %v2071 = vmul.f32 %v2069, %v2069
    %2072 = vadd.xlane.f32.xlu0 %v2070
    %v2073 = vpop.xlane.xlu0 %2072
    %2074 = vadd.xlane.f32.xlu0 %v2071
    %v2075 = vpop.xlane.xlu0 %2074
    %v2076 = vmul.f32 %v2073, %v1841
    %v2077 = vmul.f32 %v2075, %v1841
    %v2078 = vadd.f32 %v2076, 1e-05
    %v2079 = vadd.f32 %v2077, 1e-05
    %v2080 = vrsqrt.pop %v2078
    %v2081 = vmul.f32 %v2080, %v2078
    %v2082 = vmul.f32 %v2081, %v2080
    %v2083 = vmul.f32 0.5, %v2082
    %v2084 = vsub.f32 1.5, %v2083
    %v2085 = vmul.f32 %v2080, %v2084
    %vm2086 = vweird.f32 %v2078
    %vm2087 = vweird.f32 %v2080
    %vm2088 = vmor %vm2086, %vm2087
    %v2089 = vsel %vm2088, %v2080, %v2085
    %v2090 = vrsqrt.pop %v2079
    %v2091 = vmul.f32 %v2090, %v2079
    %v2092 = vmul.f32 %v2091, %v2090
    %v2093 = vmul.f32 0.5, %v2092
    %v2094 = vsub.f32 1.5, %v2093
    %v2095 = vmul.f32 %v2090, %v2094
    %vm2096 = vweird.f32 %v2079
    %vm2097 = vweird.f32 %v2090
    %vm2098 = vmor %vm2096, %vm2097
    %v2099 = vsel %vm2098, %v2090, %v2095
    %v2100 = vmul.f32 %v2068, %v2089
    %v2101 = vmul.f32 %v2069, %v2099
    %v2103 = vperm.slane %v2060, 0
    %v2105 = vmul.f32 %v2100, %v2103
    %v2106 = vmul.f32 %v2101, %v2103
    %v2108 = vperm.slane %v2061, 0
    %v2110 = vadd.f32 %v2105, %v2108
    %v2111 = vadd.f32 %v2106, %v2108
    %s2112 = scalar_lea.vmem [#allocation8], 384
    %v2113 = vld [vmem:[%s2112] sm:$0xff]
    %v2114 = vld [vmem:[%s2112 + $0x8] sm:$0xff]
    %v2115 = vld [vmem:[%s2112 + $0x10] sm:$0xff]
    %v2116 = vld [vmem:[%s2112 + $0x18] sm:$0xff]
    %v2117 = vld [vmem:[%s2112 + $0x20] sm:$0xff]
    %v2118 = vld [vmem:[%s2112 + $0x28] sm:$0xff]
    %v2119 = vld [vmem:[%s2112 + $0x30] sm:$0xff]
    %v2120 = vld [vmem:[%s2112 + $0x38] sm:$0xff]
    %v2121 = vld [vmem:[%s2112 + $0x40] sm:$0xff]
    %v2122 = vld [vmem:[%s2112 + $0x48] sm:$0xff]
    %v2123 = vld [vmem:[%s2112 + $0x50] sm:$0xff]
    %v2124 = vld [vmem:[%s2112 + $0x58] sm:$0xff]
    %v2125 = vld [vmem:[%s2112 + $0x60] sm:$0xff]
    %v2126 = vld [vmem:[%s2112 + $0x68] sm:$0xff]
    %v2127 = vld [vmem:[%s2112 + $0x70] sm:$0xff]
    %v2128 = vld [vmem:[%s2112 + $0x78] sm:$0xff]
    %v2129 = vld [vmem:[%s2112 + $0x80] sm:$0xff]
    %v2130 = vld [vmem:[%s2112 + $0x88] sm:$0xff]
    %v2131 = vld [vmem:[%s2112 + $0x90] sm:$0xff]
    %v2132 = vld [vmem:[%s2112 + $0x98] sm:$0xff]
    %v2133 = vld [vmem:[%s2112 + $0xa0] sm:$0xff]
    %v2134 = vld [vmem:[%s2112 + $0xa8] sm:$0xff]
    %v2135 = vld [vmem:[%s2112 + $0xb0] sm:$0xff]
    %v2136 = vld [vmem:[%s2112 + $0xb8] sm:$0xff]
    %v2137 = vld [vmem:[%s2112 + $0xc0] sm:$0xff]
    %v2138 = vld [vmem:[%s2112 + $0xc8] sm:$0xff]
    %v2139 = vld [vmem:[%s2112 + $0xd0] sm:$0xff]
    %v2140 = vld [vmem:[%s2112 + $0xd8] sm:$0xff]
    %v2141 = vld [vmem:[%s2112 + $0xe0] sm:$0xff]
    %v2142 = vld [vmem:[%s2112 + $0xe8] sm:$0xff]
    %v2143 = vld [vmem:[%s2112 + $0xf0] sm:$0xff]
    %v2144 = vld [vmem:[%s2112 + $0xf8] sm:$0xff]
    %v2145 = vld [vmem:[%s2112 + $0x100] sm:$0xff]
    %v2146 = vld [vmem:[%s2112 + $0x108] sm:$0xff]
    %v2147 = vld [vmem:[%s2112 + $0x110] sm:$0xff]
    %v2148 = vld [vmem:[%s2112 + $0x118] sm:$0xff]
    %v2149 = vld [vmem:[%s2112 + $0x120] sm:$0xff]
    %v2150 = vld [vmem:[%s2112 + $0x128] sm:$0xff]
    %v2151 = vld [vmem:[%s2112 + $0x130] sm:$0xff]
    %v2152 = vld [vmem:[%s2112 + $0x138] sm:$0xff]
    %v2153 = vld [vmem:[%s2112 + $0x140] sm:$0xff]
    %v2154 = vld [vmem:[%s2112 + $0x148] sm:$0xff]
    %v2155 = vld [vmem:[%s2112 + $0x150] sm:$0xff]
    %v2156 = vld [vmem:[%s2112 + $0x158] sm:$0xff]
    %v2157 = vld [vmem:[%s2112 + $0x160] sm:$0xff]
    %v2158 = vld [vmem:[%s2112 + $0x168] sm:$0xff]
    %v2159 = vld [vmem:[%s2112 + $0x170] sm:$0xff]
    %v2160 = vld [vmem:[%s2112 + $0x178] sm:$0xff]
    %s2161 = scalar_lea.vmem %s5, 3
    %v2162 = vld [vmem:[%s2161] sm:$0x7]
    %v2164 = vperm.slane %v2162, 0
    %v2165 = vperm.slane %v2162, 1
    %v2166 = vperm.slane %v2162, 2
    %2170 = vmatpush.msra.mxu0 %v2158
    %2171 = vmatpush.msra.mxu0 %v2155
    %2172 = vmatpush.msra.mxu0 %v2152
    %2173 = vmatpush.msra.mxu0 %v2149
    %2174 = vmatpush.msra.mxu0 %v2146
    %2175 = vmatpush.msra.mxu0 %v2143
    %2176 = vmatpush.msra.mxu0 %v2140
    %2177 = vmatpush.msra.mxu0 %v2137
    %2178 = vmatpush.msra.mxu0 %v2134
    %2179 = vmatpush.msra.mxu0 %v2131
    %2180 = vmatpush.msra.mxu0 %v2128
    %2181 = vmatpush.msra.mxu0 %v2125
    %2182 = vmatpush.msra.mxu0 %v2122
    %2183 = vmatpush.msra.mxu0 %v2119
    %2184 = vmatpush.msra.mxu0 %v2116
    %2185 = vmatpush.msra.mxu0 %v2113
    %2186 = vmatmul.f32.gmra.mxu0 %v2110
    %v2187 = vpop.f32.mrf.mxu0
    %v2188 = vadd.f32 %v2164, %v2187
    %2189 = vmatmul.f32.gmra.mxu0 %v2111
    %v2190 = vpop.f32.mrf.mxu0
    %v2191 = vadd.f32 %v2164, %v2190
    %2192 = vdwg.mxu0
    %2193 = vmatpush.msra.mxu0 %v2159
    %2194 = vmatpush.msra.mxu0 %v2156
    %2195 = vmatpush.msra.mxu0 %v2153
    %2196 = vmatpush.msra.mxu0 %v2150
    %2197 = vmatpush.msra.mxu0 %v2147
    %2198 = vmatpush.msra.mxu0 %v2144
    %2199 = vmatpush.msra.mxu0 %v2141
    %2200 = vmatpush.msra.mxu0 %v2138
    %2201 = vmatpush.msra.mxu0 %v2135
    %2202 = vmatpush.msra.mxu0 %v2132
    %2203 = vmatpush.msra.mxu0 %v2129
    %2204 = vmatpush.msra.mxu0 %v2126
    %2205 = vmatpush.msra.mxu0 %v2123
    %2206 = vmatpush.msra.mxu0 %v2120
    %2207 = vmatpush.msra.mxu0 %v2117
    %2208 = vmatpush.msra.mxu0 %v2114
    %2209 = vmatmul.f32.gmra.mxu0 %v2110
    %v2210 = vpop.f32.mrf.mxu0
    %v2211 = vadd.f32 %v2165, %v2210
    %2212 = vmatmul.f32.gmra.mxu0 %v2111
    %v2213 = vpop.f32.mrf.mxu0
    %v2214 = vadd.f32 %v2165, %v2213
    %2215 = vdwg.mxu0
    %2216 = vmatpush.msra.mxu0 %v2160
    %2217 = vmatpush.msra.mxu0 %v2157
    %2218 = vmatpush.msra.mxu0 %v2154
    %2219 = vmatpush.msra.mxu0 %v2151
    %2220 = vmatpush.msra.mxu0 %v2148
    %2221 = vmatpush.msra.mxu0 %v2145
    %2222 = vmatpush.msra.mxu0 %v2142
    %2223 = vmatpush.msra.mxu0 %v2139
    %2224 = vmatpush.msra.mxu0 %v2136
    %2225 = vmatpush.msra.mxu0 %v2133
    %2226 = vmatpush.msra.mxu0 %v2130
    %2227 = vmatpush.msra.mxu0 %v2127
    %2228 = vmatpush.msra.mxu0 %v2124
    %2229 = vmatpush.msra.mxu0 %v2121
    %2230 = vmatpush.msra.mxu0 %v2118
    %2231 = vmatpush.msra.mxu0 %v2115
    %2232 = vmatmul.f32.gmra.mxu0 %v2110
    %v2233 = vpop.f32.mrf.mxu0
    %v2234 = vadd.f32 %v2166, %v2233
    %2235 = vmatmul.f32.gmra.mxu0 %v2111
    %v2236 = vpop.f32.mrf.mxu0
    %v2237 = vadd.f32 %v2166, %v2236
    %2238 = vdwg.mxu0
    %2241 = vrot.lane.b32.xlu0 %v2188, 112
    %v2242 = vpop.permute.xlu0 %2241
    %2243 = vrot.lane.b32.xlu0 %v2191, 112
    %v2244 = vpop.permute.xlu0 %2243
    %2245 = vrot.lane.b32.xlu0 %v2188, 96
    %v2246 = vpop.permute.xlu0 %2245
    %2247 = vrot.lane.b32.xlu0 %v2191, 96
    %v2248 = vpop.permute.xlu0 %2247
    %2249 = vrot.lane.b32.xlu0 %v2188, 80
    %v2250 = vpop.permute.xlu0 %2249
    %2251 = vrot.lane.b32.xlu0 %v2191, 80
    %v2252 = vpop.permute.xlu0 %2251
    %2253 = vrot.lane.b32.xlu0 %v2188, 64
    %v2254 = vpop.permute.xlu0 %2253
    %2255 = vrot.lane.b32.xlu0 %v2191, 64
    %v2256 = vpop.permute.xlu0 %2255
    %2257 = vrot.lane.b32.xlu0 %v2188, 48
    %v2258 = vpop.permute.xlu0 %2257
    %2259 = vrot.lane.b32.xlu0 %v2191, 48
    %v2260 = vpop.permute.xlu0 %2259
    %2261 = vrot.lane.b32.xlu0 %v2188, 32
    %v2262 = vpop.permute.xlu0 %2261
    %2263 = vrot.lane.b32.xlu0 %v2191, 32
    %v2264 = vpop.permute.xlu0 %2263
    %2265 = vrot.lane.b32.xlu0 %v2188, 16
    %v2266 = vpop.permute.xlu0 %2265
    %2267 = vrot.lane.b32.xlu0 %v2191, 16
    %v2268 = vpop.permute.xlu0 %2267
    %2271 = vrot.lane.b32.xlu0 %v2211, 112
    %v2272 = vpop.permute.xlu0 %2271
    %2273 = vrot.lane.b32.xlu0 %v2214, 112
    %v2274 = vpop.permute.xlu0 %2273
    %2275 = vrot.lane.b32.xlu0 %v2211, 96
    %v2276 = vpop.permute.xlu0 %2275
    %2277 = vrot.lane.b32.xlu0 %v2214, 96
    %v2278 = vpop.permute.xlu0 %2277
    %2279 = vrot.lane.b32.xlu0 %v2211, 80
    %v2280 = vpop.permute.xlu0 %2279
    %2281 = vrot.lane.b32.xlu0 %v2214, 80
    %v2282 = vpop.permute.xlu0 %2281
    %2283 = vrot.lane.b32.xlu0 %v2211, 64
    %v2284 = vpop.permute.xlu0 %2283
    %2285 = vrot.lane.b32.xlu0 %v2214, 64
    %v2286 = vpop.permute.xlu0 %2285
    %2287 = vrot.lane.b32.xlu0 %v2211, 48
    %v2288 = vpop.permute.xlu0 %2287
    %2289 = vrot.lane.b32.xlu0 %v2214, 48
    %v2290 = vpop.permute.xlu0 %2289
    %2291 = vrot.lane.b32.xlu0 %v2211, 32
    %v2292 = vpop.permute.xlu0 %2291
    %2293 = vrot.lane.b32.xlu0 %v2214, 32
    %v2294 = vpop.permute.xlu0 %2293
    %2295 = vrot.lane.b32.xlu0 %v2211, 16
    %v2296 = vpop.permute.xlu0 %2295
    %2297 = vrot.lane.b32.xlu0 %v2214, 16
    %v2298 = vpop.permute.xlu0 %2297
    %2301 = vrot.lane.b32.xlu0 %v2234, 112
    %v2302 = vpop.permute.xlu0 %2301
    %2303 = vrot.lane.b32.xlu0 %v2237, 112
    %v2304 = vpop.permute.xlu0 %2303
    %2307 = vrot.lane.b32.xlu0 %v2234, 96
    %v2308 = vpop.permute.xlu0 %2307
    %2309 = vrot.lane.b32.xlu0 %v2237, 96
    %v2310 = vpop.permute.xlu0 %2309
    %2313 = vrot.lane.b32.xlu0 %v2234, 80
    %v2314 = vpop.permute.xlu0 %2313
    %2315 = vrot.lane.b32.xlu0 %v2237, 80
    %v2316 = vpop.permute.xlu0 %2315
    %2319 = vrot.lane.b32.xlu0 %v2234, 64
    %v2320 = vpop.permute.xlu0 %2319
    %2321 = vrot.lane.b32.xlu0 %v2237, 64
    %v2322 = vpop.permute.xlu0 %2321
    %2325 = vrot.lane.b32.xlu0 %v2234, 48
    %v2326 = vpop.permute.xlu0 %2325
    %2327 = vrot.lane.b32.xlu0 %v2237, 48
    %v2328 = vpop.permute.xlu0 %2327
    %2331 = vrot.lane.b32.xlu0 %v2234, 32
    %v2332 = vpop.permute.xlu0 %2331
    %2333 = vrot.lane.b32.xlu0 %v2237, 32
    %v2334 = vpop.permute.xlu0 %2333
    %2337 = vrot.lane.b32.xlu0 %v2234, 16
    %v2338 = vpop.permute.xlu0 %2337
    %2339 = vrot.lane.b32.xlu0 %v2237, 16
    %v2340 = vpop.permute.xlu0 %2339
    %v2343 = vsel %vm539, %v2188, 0
    %v2345 = vsel %vm539, %v2211, 0
    %2347 = vmatpush.xpose.msra.mxu0 0.0
    %2348 = vmatpush.xpose.msra.mxu0 0.0
    %2349 = vmatpush.xpose.msra.mxu0 0.0
    %2350 = vmatpush.xpose.msra.mxu0 0.0
    %2351 = vmatpush.xpose.msra.mxu0 0.0
    %2352 = vmatpush.xpose.msra.mxu0 0.0
    %2353 = vmatpush.xpose.msra.mxu0 0.0
    %2354 = vmatpush.xpose.msra.mxu0 0.0
    %2355 = vmatpush.xpose.msra.mxu0 0.0
    %2356 = vmatpush.xpose.msra.mxu0 0.0
    %2357 = vmatpush.xpose.msra.mxu0 0.0
    %2358 = vmatpush.xpose.msra.mxu0 0.0
    %2359 = vmatpush.xpose.msra.mxu0 0.0
    %2360 = vmatpush.xpose.msra.mxu0 0.0
    %2361 = vmatpush.xpose.msra.mxu0 0.0
    %2362 = vmatpush.xpose.msra.mxu0 %v2345
    %2363 = vmatmul.f32.gmra.mxu0 %v2343
    %v2364 = vpop.f32.mrf.mxu0
    %v2365 = vadd.f32 0.0, %v2364
    %2366 = vdwg.mxu0
    %v2367 = vsel %vm539, %v2242, 0
    %v2369 = vsel %vm539, %v2272, 0
    %2371 = vmatpush.xpose.msra.mxu0 0.0
    %2372 = vmatpush.xpose.msra.mxu0 0.0
    %2373 = vmatpush.xpose.msra.mxu0 0.0
    %2374 = vmatpush.xpose.msra.mxu0 0.0
    %2375 = vmatpush.xpose.msra.mxu0 0.0
    %2376 = vmatpush.xpose.msra.mxu0 0.0
    %2377 = vmatpush.xpose.msra.mxu0 0.0
    %2378 = vmatpush.xpose.msra.mxu0 0.0
    %2379 = vmatpush.xpose.msra.mxu0 0.0
    %2380 = vmatpush.xpose.msra.mxu0 0.0
    %2381 = vmatpush.xpose.msra.mxu0 0.0
    %2382 = vmatpush.xpose.msra.mxu0 0.0
    %2383 = vmatpush.xpose.msra.mxu0 0.0
    %2384 = vmatpush.xpose.msra.mxu0 0.0
    %2385 = vmatpush.xpose.msra.mxu0 0.0
    %2386 = vmatpush.xpose.msra.mxu0 %v2369
    %2387 = vmatmul.f32.gmra.mxu0 %v2367
    %v2388 = vpop.f32.mrf.mxu0
    %v2389 = vadd.f32 0.0, %v2388
    %2390 = vdwg.mxu0
    %v2391 = vsel %vm539, %v2246, 0
    %v2393 = vsel %vm539, %v2276, 0
    %2395 = vmatpush.xpose.msra.mxu0 0.0
    %2396 = vmatpush.xpose.msra.mxu0 0.0
    %2397 = vmatpush.xpose.msra.mxu0 0.0
    %2398 = vmatpush.xpose.msra.mxu0 0.0
    %2399 = vmatpush.xpose.msra.mxu0 0.0
    %2400 = vmatpush.xpose.msra.mxu0 0.0
    %2401 = vmatpush.xpose.msra.mxu0 0.0
    %2402 = vmatpush.xpose.msra.mxu0 0.0
    %2403 = vmatpush.xpose.msra.mxu0 0.0
    %2404 = vmatpush.xpose.msra.mxu0 0.0
    %2405 = vmatpush.xpose.msra.mxu0 0.0
    %2406 = vmatpush.xpose.msra.mxu0 0.0
    %2407 = vmatpush.xpose.msra.mxu0 0.0
    %2408 = vmatpush.xpose.msra.mxu0 0.0
    %2409 = vmatpush.xpose.msra.mxu0 0.0
    %2410 = vmatpush.xpose.msra.mxu0 %v2393
    %2411 = vmatmul.f32.gmra.mxu0 %v2391
    %v2412 = vpop.f32.mrf.mxu0
    %v2413 = vadd.f32 0.0, %v2412
    %2414 = vdwg.mxu0
    %v2415 = vsel %vm539, %v2250, 0
    %v2417 = vsel %vm539, %v2280, 0
    %2419 = vmatpush.xpose.msra.mxu0 0.0
    %2420 = vmatpush.xpose.msra.mxu0 0.0
    %2421 = vmatpush.xpose.msra.mxu0 0.0
    %2422 = vmatpush.xpose.msra.mxu0 0.0
    %2423 = vmatpush.xpose.msra.mxu0 0.0
    %2424 = vmatpush.xpose.msra.mxu0 0.0
    %2425 = vmatpush.xpose.msra.mxu0 0.0
    %2426 = vmatpush.xpose.msra.mxu0 0.0
    %2427 = vmatpush.xpose.msra.mxu0 0.0
    %2428 = vmatpush.xpose.msra.mxu0 0.0
    %2429 = vmatpush.xpose.msra.mxu0 0.0
    %2430 = vmatpush.xpose.msra.mxu0 0.0
    %2431 = vmatpush.xpose.msra.mxu0 0.0
    %2432 = vmatpush.xpose.msra.mxu0 0.0
    %2433 = vmatpush.xpose.msra.mxu0 0.0
    %2434 = vmatpush.xpose.msra.mxu0 %v2417
    %2435 = vmatmul.f32.gmra.mxu0 %v2415
    %v2436 = vpop.f32.mrf.mxu0
    %v2437 = vadd.f32 0.0, %v2436
    %2438 = vdwg.mxu0
    %v2439 = vsel %vm539, %v2254, 0
    %v2441 = vsel %vm539, %v2284, 0
    %2443 = vmatpush.xpose.msra.mxu0 0.0
    %2444 = vmatpush.xpose.msra.mxu0 0.0
    %2445 = vmatpush.xpose.msra.mxu0 0.0
    %2446 = vmatpush.xpose.msra.mxu0 0.0
    %2447 = vmatpush.xpose.msra.mxu0 0.0
    %2448 = vmatpush.xpose.msra.mxu0 0.0
    %2449 = vmatpush.xpose.msra.mxu0 0.0
    %2450 = vmatpush.xpose.msra.mxu0 0.0
    %2451 = vmatpush.xpose.msra.mxu0 0.0
    %2452 = vmatpush.xpose.msra.mxu0 0.0
    %2453 = vmatpush.xpose.msra.mxu0 0.0
    %2454 = vmatpush.xpose.msra.mxu0 0.0
    %2455 = vmatpush.xpose.msra.mxu0 0.0
    %2456 = vmatpush.xpose.msra.mxu0 0.0
    %2457 = vmatpush.xpose.msra.mxu0 0.0
    %2458 = vmatpush.xpose.msra.mxu0 %v2441
    %2459 = vmatmul.f32.gmra.mxu0 %v2439
    %v2460 = vpop.f32.mrf.mxu0
    %v2461 = vadd.f32 0.0, %v2460
    %2462 = vdwg.mxu0
    %v2463 = vsel %vm539, %v2258, 0
    %v2465 = vsel %vm539, %v2288, 0
    %2467 = vmatpush.xpose.msra.mxu0 0.0
    %2468 = vmatpush.xpose.msra.mxu0 0.0
    %2469 = vmatpush.xpose.msra.mxu0 0.0
    %2470 = vmatpush.xpose.msra.mxu0 0.0
    %2471 = vmatpush.xpose.msra.mxu0 0.0
    %2472 = vmatpush.xpose.msra.mxu0 0.0
    %2473 = vmatpush.xpose.msra.mxu0 0.0
    %2474 = vmatpush.xpose.msra.mxu0 0.0
    %2475 = vmatpush.xpose.msra.mxu0 0.0
    %2476 = vmatpush.xpose.msra.mxu0 0.0
    %2477 = vmatpush.xpose.msra.mxu0 0.0
    %2478 = vmatpush.xpose.msra.mxu0 0.0
    %2479 = vmatpush.xpose.msra.mxu0 0.0
    %2480 = vmatpush.xpose.msra.mxu0 0.0
    %2481 = vmatpush.xpose.msra.mxu0 0.0
    %2482 = vmatpush.xpose.msra.mxu0 %v2465
    %2483 = vmatmul.f32.gmra.mxu0 %v2463
    %v2484 = vpop.f32.mrf.mxu0
    %v2485 = vadd.f32 0.0, %v2484
    %2486 = vdwg.mxu0
    %v2487 = vsel %vm539, %v2262, 0
    %v2489 = vsel %vm539, %v2292, 0
    %2491 = vmatpush.xpose.msra.mxu0 0.0
    %2492 = vmatpush.xpose.msra.mxu0 0.0
    %2493 = vmatpush.xpose.msra.mxu0 0.0
    %2494 = vmatpush.xpose.msra.mxu0 0.0
    %2495 = vmatpush.xpose.msra.mxu0 0.0
    %2496 = vmatpush.xpose.msra.mxu0 0.0
    %2497 = vmatpush.xpose.msra.mxu0 0.0
    %2498 = vmatpush.xpose.msra.mxu0 0.0
    %2499 = vmatpush.xpose.msra.mxu0 0.0
    %2500 = vmatpush.xpose.msra.mxu0 0.0
    %2501 = vmatpush.xpose.msra.mxu0 0.0
    %2502 = vmatpush.xpose.msra.mxu0 0.0
    %2503 = vmatpush.xpose.msra.mxu0 0.0
    %2504 = vmatpush.xpose.msra.mxu0 0.0
    %2505 = vmatpush.xpose.msra.mxu0 0.0
    %2506 = vmatpush.xpose.msra.mxu0 %v2489
    %2507 = vmatmul.f32.gmra.mxu0 %v2487
    %v2508 = vpop.f32.mrf.mxu0
    %v2509 = vadd.f32 0.0, %v2508
    %2510 = vdwg.mxu0
    %v2511 = vsel %vm539, %v2266, 0
    %v2513 = vsel %vm539, %v2296, 0
    %2515 = vmatpush.xpose.msra.mxu0 0.0
    %2516 = vmatpush.xpose.msra.mxu0 0.0
    %2517 = vmatpush.xpose.msra.mxu0 0.0
    %2518 = vmatpush.xpose.msra.mxu0 0.0
    %2519 = vmatpush.xpose.msra.mxu0 0.0
    %2520 = vmatpush.xpose.msra.mxu0 0.0
    %2521 = vmatpush.xpose.msra.mxu0 0.0
    %2522 = vmatpush.xpose.msra.mxu0 0.0
    %2523 = vmatpush.xpose.msra.mxu0 0.0
    %2524 = vmatpush.xpose.msra.mxu0 0.0
    %2525 = vmatpush.xpose.msra.mxu0 0.0
    %2526 = vmatpush.xpose.msra.mxu0 0.0
    %2527 = vmatpush.xpose.msra.mxu0 0.0
    %2528 = vmatpush.xpose.msra.mxu0 0.0
    %2529 = vmatpush.xpose.msra.mxu0 0.0
    %2530 = vmatpush.xpose.msra.mxu0 %v2513
    %2531 = vmatmul.f32.gmra.mxu0 %v2511
    %v2532 = vpop.f32.mrf.mxu0
    %v2533 = vadd.f32 0.0, %v2532
    %2534 = vdwg.mxu0
    %v2535 = vsel %vm539, %v2191, 0
    %v2537 = vsel %vm539, %v2214, 0
    %2539 = vmatpush.xpose.msra.mxu0 0.0
    %2540 = vmatpush.xpose.msra.mxu0 0.0
    %2541 = vmatpush.xpose.msra.mxu0 0.0
    %2542 = vmatpush.xpose.msra.mxu0 0.0
    %2543 = vmatpush.xpose.msra.mxu0 0.0
    %2544 = vmatpush.xpose.msra.mxu0 0.0
    %2545 = vmatpush.xpose.msra.mxu0 0.0
    %2546 = vmatpush.xpose.msra.mxu0 0.0
    %2547 = vmatpush.xpose.msra.mxu0 0.0
    %2548 = vmatpush.xpose.msra.mxu0 0.0
    %2549 = vmatpush.xpose.msra.mxu0 0.0
    %2550 = vmatpush.xpose.msra.mxu0 0.0
    %2551 = vmatpush.xpose.msra.mxu0 0.0
    %2552 = vmatpush.xpose.msra.mxu0 0.0
    %2553 = vmatpush.xpose.msra.mxu0 0.0
    %2554 = vmatpush.xpose.msra.mxu0 %v2537
    %2555 = vmatmul.f32.gmra.mxu0 %v2535
    %v2556 = vpop.f32.mrf.mxu0
    %v2557 = vadd.f32 0.0, %v2556
    %2558 = vdwg.mxu0
    %v2559 = vsel %vm539, %v2244, 0
    %v2561 = vsel %vm539, %v2274, 0
    %2563 = vmatpush.xpose.msra.mxu0 0.0
    %2564 = vmatpush.xpose.msra.mxu0 0.0
    %2565 = vmatpush.xpose.msra.mxu0 0.0
    %2566 = vmatpush.xpose.msra.mxu0 0.0
    %2567 = vmatpush.xpose.msra.mxu0 0.0
    %2568 = vmatpush.xpose.msra.mxu0 0.0
    %2569 = vmatpush.xpose.msra.mxu0 0.0
    %2570 = vmatpush.xpose.msra.mxu0 0.0
    %2571 = vmatpush.xpose.msra.mxu0 0.0
    %2572 = vmatpush.xpose.msra.mxu0 0.0
    %2573 = vmatpush.xpose.msra.mxu0 0.0
    %2574 = vmatpush.xpose.msra.mxu0 0.0
    %2575 = vmatpush.xpose.msra.mxu0 0.0
    %2576 = vmatpush.xpose.msra.mxu0 0.0
    %2577 = vmatpush.xpose.msra.mxu0 0.0
    %2578 = vmatpush.xpose.msra.mxu0 %v2561
    %2579 = vmatmul.f32.gmra.mxu0 %v2559
    %v2580 = vpop.f32.mrf.mxu0
    %v2581 = vadd.f32 0.0, %v2580
    %2582 = vdwg.mxu0
    %v2583 = vsel %vm539, %v2248, 0
    %v2585 = vsel %vm539, %v2278, 0
    %2587 = vmatpush.xpose.msra.mxu0 0.0
    %2588 = vmatpush.xpose.msra.mxu0 0.0
    %2589 = vmatpush.xpose.msra.mxu0 0.0
    %2590 = vmatpush.xpose.msra.mxu0 0.0
    %2591 = vmatpush.xpose.msra.mxu0 0.0
    %2592 = vmatpush.xpose.msra.mxu0 0.0
    %2593 = vmatpush.xpose.msra.mxu0 0.0
    %2594 = vmatpush.xpose.msra.mxu0 0.0
    %2595 = vmatpush.xpose.msra.mxu0 0.0
    %2596 = vmatpush.xpose.msra.mxu0 0.0
    %2597 = vmatpush.xpose.msra.mxu0 0.0
    %2598 = vmatpush.xpose.msra.mxu0 0.0
    %2599 = vmatpush.xpose.msra.mxu0 0.0
    %2600 = vmatpush.xpose.msra.mxu0 0.0
    %2601 = vmatpush.xpose.msra.mxu0 0.0
    %2602 = vmatpush.xpose.msra.mxu0 %v2585
    %2603 = vmatmul.f32.gmra.mxu0 %v2583
    %v2604 = vpop.f32.mrf.mxu0
    %v2605 = vadd.f32 0.0, %v2604
    %2606 = vdwg.mxu0
    %v2607 = vsel %vm539, %v2252, 0
    %v2609 = vsel %vm539, %v2282, 0
    %2611 = vmatpush.xpose.msra.mxu0 0.0
    %2612 = vmatpush.xpose.msra.mxu0 0.0
    %2613 = vmatpush.xpose.msra.mxu0 0.0
    %2614 = vmatpush.xpose.msra.mxu0 0.0
    %2615 = vmatpush.xpose.msra.mxu0 0.0
    %2616 = vmatpush.xpose.msra.mxu0 0.0
    %2617 = vmatpush.xpose.msra.mxu0 0.0
    %2618 = vmatpush.xpose.msra.mxu0 0.0
    %2619 = vmatpush.xpose.msra.mxu0 0.0
    %2620 = vmatpush.xpose.msra.mxu0 0.0
    %2621 = vmatpush.xpose.msra.mxu0 0.0
    %2622 = vmatpush.xpose.msra.mxu0 0.0
    %2623 = vmatpush.xpose.msra.mxu0 0.0
    %2624 = vmatpush.xpose.msra.mxu0 0.0
    %2625 = vmatpush.xpose.msra.mxu0 0.0
    %2626 = vmatpush.xpose.msra.mxu0 %v2609
    %2627 = vmatmul.f32.gmra.mxu0 %v2607
    %v2628 = vpop.f32.mrf.mxu0
    %v2629 = vadd.f32 0.0, %v2628
    %2630 = vdwg.mxu0
    %v2631 = vsel %vm539, %v2256, 0
    %v2633 = vsel %vm539, %v2286, 0
    %2635 = vmatpush.xpose.msra.mxu0 0.0
    %2636 = vmatpush.xpose.msra.mxu0 0.0
    %2637 = vmatpush.xpose.msra.mxu0 0.0
    %2638 = vmatpush.xpose.msra.mxu0 0.0
    %2639 = vmatpush.xpose.msra.mxu0 0.0
    %2640 = vmatpush.xpose.msra.mxu0 0.0
    %2641 = vmatpush.xpose.msra.mxu0 0.0
    %2642 = vmatpush.xpose.msra.mxu0 0.0
    %2643 = vmatpush.xpose.msra.mxu0 0.0
    %2644 = vmatpush.xpose.msra.mxu0 0.0
    %2645 = vmatpush.xpose.msra.mxu0 0.0
    %2646 = vmatpush.xpose.msra.mxu0 0.0
    %2647 = vmatpush.xpose.msra.mxu0 0.0
    %2648 = vmatpush.xpose.msra.mxu0 0.0
    %2649 = vmatpush.xpose.msra.mxu0 0.0
    %2650 = vmatpush.xpose.msra.mxu0 %v2633
    %2651 = vmatmul.f32.gmra.mxu0 %v2631
    %v2652 = vpop.f32.mrf.mxu0
    %v2653 = vadd.f32 0.0, %v2652
    %2654 = vdwg.mxu0
    %v2655 = vsel %vm539, %v2260, 0
    %v2657 = vsel %vm539, %v2290, 0
    %2659 = vmatpush.xpose.msra.mxu0 0.0
    %2660 = vmatpush.xpose.msra.mxu0 0.0
    %2661 = vmatpush.xpose.msra.mxu0 0.0
    %2662 = vmatpush.xpose.msra.mxu0 0.0
    %2663 = vmatpush.xpose.msra.mxu0 0.0
    %2664 = vmatpush.xpose.msra.mxu0 0.0
    %2665 = vmatpush.xpose.msra.mxu0 0.0
    %2666 = vmatpush.xpose.msra.mxu0 0.0
    %2667 = vmatpush.xpose.msra.mxu0 0.0
    %2668 = vmatpush.xpose.msra.mxu0 0.0
    %2669 = vmatpush.xpose.msra.mxu0 0.0
    %2670 = vmatpush.xpose.msra.mxu0 0.0
    %2671 = vmatpush.xpose.msra.mxu0 0.0
    %2672 = vmatpush.xpose.msra.mxu0 0.0
    %2673 = vmatpush.xpose.msra.mxu0 0.0
    %2674 = vmatpush.xpose.msra.mxu0 %v2657
    %2675 = vmatmul.f32.gmra.mxu0 %v2655
    %v2676 = vpop.f32.mrf.mxu0
    %v2677 = vadd.f32 0.0, %v2676
    %2678 = vdwg.mxu0
    %v2679 = vsel %vm539, %v2264, 0
    %v2681 = vsel %vm539, %v2294, 0
    %2683 = vmatpush.xpose.msra.mxu0 0.0
    %2684 = vmatpush.xpose.msra.mxu0 0.0
    %2685 = vmatpush.xpose.msra.mxu0 0.0
    %2686 = vmatpush.xpose.msra.mxu0 0.0
    %2687 = vmatpush.xpose.msra.mxu0 0.0
    %2688 = vmatpush.xpose.msra.mxu0 0.0
    %2689 = vmatpush.xpose.msra.mxu0 0.0
    %2690 = vmatpush.xpose.msra.mxu0 0.0
    %2691 = vmatpush.xpose.msra.mxu0 0.0
    %2692 = vmatpush.xpose.msra.mxu0 0.0
    %2693 = vmatpush.xpose.msra.mxu0 0.0
    %2694 = vmatpush.xpose.msra.mxu0 0.0
    %2695 = vmatpush.xpose.msra.mxu0 0.0
    %2696 = vmatpush.xpose.msra.mxu0 0.0
    %2697 = vmatpush.xpose.msra.mxu0 0.0
    %2698 = vmatpush.xpose.msra.mxu0 %v2681
    %2699 = vmatmul.f32.gmra.mxu0 %v2679
    %v2700 = vpop.f32.mrf.mxu0
    %v2701 = vadd.f32 0.0, %v2700
    %2702 = vdwg.mxu0
    %v2703 = vsel %vm539, %v2268, 0
    %v2705 = vsel %vm539, %v2298, 0
    %2707 = vmatpush.xpose.msra.mxu0 0.0
    %2708 = vmatpush.xpose.msra.mxu0 0.0
    %2709 = vmatpush.xpose.msra.mxu0 0.0
    %2710 = vmatpush.xpose.msra.mxu0 0.0
    %2711 = vmatpush.xpose.msra.mxu0 0.0
    %2712 = vmatpush.xpose.msra.mxu0 0.0
    %2713 = vmatpush.xpose.msra.mxu0 0.0
    %2714 = vmatpush.xpose.msra.mxu0 0.0
    %2715 = vmatpush.xpose.msra.mxu0 0.0
    %2716 = vmatpush.xpose.msra.mxu0 0.0
    %2717 = vmatpush.xpose.msra.mxu0 0.0
    %2718 = vmatpush.xpose.msra.mxu0 0.0
    %2719 = vmatpush.xpose.msra.mxu0 0.0
    %2720 = vmatpush.xpose.msra.mxu0 0.0
    %2721 = vmatpush.xpose.msra.mxu0 0.0
    %2722 = vmatpush.xpose.msra.mxu0 %v2705
    %2723 = vmatmul.f32.gmra.mxu0 %v2703
    %v2724 = vpop.f32.mrf.mxu0
    %v2725 = vadd.f32 0.0, %v2724
    %2726 = vdwg.mxu0
    %v2727 = vmul.f32 %v2365, 0.25
    %v2728 = vmul.f32 %v2389, 0.25
    %v2729 = vmul.f32 %v2413, 0.25
    %v2730 = vmul.f32 %v2437, 0.25
    %v2731 = vmul.f32 %v2461, 0.25
    %v2732 = vmul.f32 %v2485, 0.25
    %v2733 = vmul.f32 %v2509, 0.25
    %v2734 = vmul.f32 %v2533, 0.25
    %v2735 = vmul.f32 %v2557, 0.25
    %v2736 = vmul.f32 %v2581, 0.25
    %v2737 = vmul.f32 %v2605, 0.25
    %v2738 = vmul.f32 %v2629, 0.25
    %v2739 = vmul.f32 %v2653, 0.25
    %v2740 = vmul.f32 %v2677, 0.25
    %v2741 = vmul.f32 %v2701, 0.25
    %v2742 = vmul.f32 %v2725, 0.25
    %v2743 = vsel %vm940, %v2727, -inf
    %2744 = vmax.xlane.f32.xlu0 %v2743
    %v2745 = vpop.xlane.xlu0 %2744
    %v2746 = vsel %vm940, %v2728, -inf
    %2747 = vmax.xlane.f32.xlu0 %v2746
    %v2748 = vpop.xlane.xlu0 %2747
    %v2749 = vsel %vm940, %v2729, -inf
    %2750 = vmax.xlane.f32.xlu0 %v2749
    %v2751 = vpop.xlane.xlu0 %2750
    %v2752 = vsel %vm940, %v2730, -inf
    %2753 = vmax.xlane.f32.xlu0 %v2752
    %v2754 = vpop.xlane.xlu0 %2753
    %v2755 = vsel %vm940, %v2731, -inf
    %2756 = vmax.xlane.f32.xlu0 %v2755
    %v2757 = vpop.xlane.xlu0 %2756
    %v2758 = vsel %vm940, %v2732, -inf
    %2759 = vmax.xlane.f32.xlu0 %v2758
    %v2760 = vpop.xlane.xlu0 %2759
    %v2761 = vsel %vm940, %v2733, -inf
    %2762 = vmax.xlane.f32.xlu0 %v2761
    %v2763 = vpop.xlane.xlu0 %2762
    %v2764 = vsel %vm940, %v2734, -inf
    %2765 = vmax.xlane.f32.xlu0 %v2764
    %v2766 = vpop.xlane.xlu0 %2765
    %v2767 = vsel %vm940, %v2735, -inf
    %2768 = vmax.xlane.f32.xlu0 %v2767
    %v2769 = vpop.xlane.xlu0 %2768
    %v2770 = vsel %vm940, %v2736, -inf
    %2771 = vmax.xlane.f32.xlu0 %v2770
    %v2772 = vpop.xlane.xlu0 %2771
    %v2773 = vsel %vm940, %v2737, -inf
    %2774 = vmax.xlane.f32.xlu0 %v2773
    %v2775 = vpop.xlane.xlu0 %2774
    %v2776 = vsel %vm940, %v2738, -inf
    %2777 = vmax.xlane.f32.xlu0 %v2776
    %v2778 = vpop.xlane.xlu0 %2777
    %v2779 = vsel %vm940, %v2739, -inf
    %2780 = vmax.xlane.f32.xlu0 %v2779
    %v2781 = vpop.xlane.xlu0 %2780
    %v2782 = vsel %vm940, %v2740, -inf
    %2783 = vmax.xlane.f32.xlu0 %v2782
    %v2784 = vpop.xlane.xlu0 %2783
    %v2785 = vsel %vm940, %v2741, -inf
    %2786 = vmax.xlane.f32.xlu0 %v2785
    %v2787 = vpop.xlane.xlu0 %2786
    %v2788 = vsel %vm940, %v2742, -inf
    %2789 = vmax.xlane.f32.xlu0 %v2788
    %v2790 = vpop.xlane.xlu0 %2789
    %v2791 = vsub.f32 %v2727, %v2745
    %v2792 = vsub.f32 %v2728, %v2748
    %v2793 = vsub.f32 %v2729, %v2751
    %v2794 = vsub.f32 %v2730, %v2754
    %v2795 = vsub.f32 %v2731, %v2757
    %v2796 = vsub.f32 %v2732, %v2760
    %v2797 = vsub.f32 %v2733, %v2763
    %v2798 = vsub.f32 %v2734, %v2766
    %v2799 = vsub.f32 %v2735, %v2769
    %v2800 = vsub.f32 %v2736, %v2772
    %v2801 = vsub.f32 %v2737, %v2775
    %v2802 = vsub.f32 %v2738, %v2778
    %v2803 = vsub.f32 %v2739, %v2781
    %v2804 = vsub.f32 %v2740, %v2784
    %v2805 = vsub.f32 %v2741, %v2787
    %v2806 = vsub.f32 %v2742, %v2790
    %v2807 = vmul.f32 %v2791, 1.442695
    %v2808 = vpow.pop %v2807
    %v2809 = vmul.f32 %v2792, 1.442695
    %v2810 = vpow.pop %v2809
    %v2811 = vmul.f32 %v2793, 1.442695
    %v2812 = vpow.pop %v2811
    %v2813 = vmul.f32 %v2794, 1.442695
    %v2814 = vpow.pop %v2813
    %v2815 = vmul.f32 %v2795, 1.442695
    %v2816 = vpow.pop %v2815
    %v2817 = vmul.f32 %v2796, 1.442695
    %v2818 = vpow.pop %v2817
    %v2819 = vmul.f32 %v2797, 1.442695
    %v2820 = vpow.pop %v2819
    %v2821 = vmul.f32 %v2798, 1.442695
    %v2822 = vpow.pop %v2821
    %v2823 = vmul.f32 %v2799, 1.442695
    %v2824 = vpow.pop %v2823
    %v2825 = vmul.f32 %v2800, 1.442695
    %v2826 = vpow.pop %v2825
    %v2827 = vmul.f32 %v2801, 1.442695
    %v2828 = vpow.pop %v2827
    %v2829 = vmul.f32 %v2802, 1.442695
    %v2830 = vpow.pop %v2829
    %v2831 = vmul.f32 %v2803, 1.442695
    %v2832 = vpow.pop %v2831
    %v2833 = vmul.f32 %v2804, 1.442695
    %v2834 = vpow.pop %v2833
    %v2835 = vmul.f32 %v2805, 1.442695
    %v2836 = vpow.pop %v2835
    %v2837 = vmul.f32 %v2806, 1.442695
    %v2838 = vpow.pop %v2837
    %v2839 = vsel %vm940, %v2808, 0.0
    %2840 = vadd.xlane.f32.xlu0 %v2839
    %v2841 = vpop.xlane.xlu0 %2840
    %v2842 = vsel %vm940, %v2810, 0.0
    %2843 = vadd.xlane.f32.xlu0 %v2842
    %v2844 = vpop.xlane.xlu0 %2843
    %v2845 = vsel %vm940, %v2812, 0.0
    %2846 = vadd.xlane.f32.xlu0 %v2845
    %v2847 = vpop.xlane.xlu0 %2846
    %v2848 = vsel %vm940, %v2814, 0.0
    %2849 = vadd.xlane.f32.xlu0 %v2848
    %v2850 = vpop.xlane.xlu0 %2849
    %v2851 = vsel %vm940, %v2816, 0.0
    %2852 = vadd.xlane.f32.xlu0 %v2851
    %v2853 = vpop.xlane.xlu0 %2852
    %v2854 = vsel %vm940, %v2818, 0.0
    %2855 = vadd.xlane.f32.xlu0 %v2854
    %v2856 = vpop.xlane.xlu0 %2855
    %v2857 = vsel %vm940, %v2820, 0.0
    %2858 = vadd.xlane.f32.xlu0 %v2857
    %v2859 = vpop.xlane.xlu0 %2858
    %v2860 = vsel %vm940, %v2822, 0.0
    %2861 = vadd.xlane.f32.xlu0 %v2860
    %v2862 = vpop.xlane.xlu0 %2861
    %v2863 = vsel %vm940, %v2824, 0.0
    %2864 = vadd.xlane.f32.xlu0 %v2863
    %v2865 = vpop.xlane.xlu0 %2864
    %v2866 = vsel %vm940, %v2826, 0.0
    %2867 = vadd.xlane.f32.xlu0 %v2866
    %v2868 = vpop.xlane.xlu0 %2867
    %v2869 = vsel %vm940, %v2828, 0.0
    %2870 = vadd.xlane.f32.xlu0 %v2869
    %v2871 = vpop.xlane.xlu0 %2870
    %v2872 = vsel %vm940, %v2830, 0.0
    %2873 = vadd.xlane.f32.xlu0 %v2872
    %v2874 = vpop.xlane.xlu0 %2873
    %v2875 = vsel %vm940, %v2832, 0.0
    %2876 = vadd.xlane.f32.xlu0 %v2875
    %v2877 = vpop.xlane.xlu0 %2876
    %v2878 = vsel %vm940, %v2834, 0.0
    %2879 = vadd.xlane.f32.xlu0 %v2878
    %v2880 = vpop.xlane.xlu0 %2879
    %v2881 = vsel %vm940, %v2836, 0.0
    %2882 = vadd.xlane.f32.xlu0 %v2881
    %v2883 = vpop.xlane.xlu0 %2882
    %v2884 = vsel %vm940, %v2838, 0.0
    %2885 = vadd.xlane.f32.xlu0 %v2884
    %v2886 = vpop.xlane.xlu0 %2885
    %v2887 = vrcp.pop %v2841
    %v2888 = vmul.f32 %v2841, %v2887
    %v2889 = vsub.f32 1.0, %v2888
    %v2890 = vmul.f32 %v2887, %v2889
    %v2891 = vadd.f32 %v2887, %v2890
    %vm2892 = vweird.f32 %v2841
    %vm2893 = vweird.f32 %v2887
    %vm2894 = vmor %vm2892, %vm2893
    %v2895 = vsel %vm2894, %v2887, %v2891
    %v2896 = vand.u32 2147483647, %v2841
    %vm2897 = vcmp.eq.f32.partialorder %v2896, 8.507059e+37
    %v2898 = vand.u32 %v2841, 2147483648
    %v2899 = vor.u32 1.1754944e-38, %v2898
    %v2900 = vsel %vm2897, %v2899, %v2895
    %v2901 = vmul.f32 1.0, %v2900
    %v2902 = vrcp.pop %v2844
    %v2903 = vmul.f32 %v2844, %v2902
    %v2904 = vsub.f32 1.0, %v2903
    %v2905 = vmul.f32 %v2902, %v2904
    %v2906 = vadd.f32 %v2902, %v2905
    %vm2907 = vweird.f32 %v2844
    %vm2908 = vweird.f32 %v2902
    %vm2909 = vmor %vm2907, %vm2908
    %v2910 = vsel %vm2909, %v2902, %v2906
    %v2911 = vand.u32 2147483647, %v2844
    %vm2912 = vcmp.eq.f32.partialorder %v2911, 8.507059e+37
    %v2913 = vand.u32 %v2844, 2147483648
    %v2914 = vor.u32 1.1754944e-38, %v2913
    %v2915 = vsel %vm2912, %v2914, %v2910
    %v2916 = vmul.f32 1.0, %v2915
    %v2917 = vrcp.pop %v2847
    %v2918 = vmul.f32 %v2847, %v2917
    %v2919 = vsub.f32 1.0, %v2918
    %v2920 = vmul.f32 %v2917, %v2919
    %v2921 = vadd.f32 %v2917, %v2920
    %vm2922 = vweird.f32 %v2847
    %vm2923 = vweird.f32 %v2917
    %vm2924 = vmor %vm2922, %vm2923
    %v2925 = vsel %vm2924, %v2917, %v2921
    %v2926 = vand.u32 2147483647, %v2847
    %vm2927 = vcmp.eq.f32.partialorder %v2926, 8.507059e+37
    %v2928 = vand.u32 %v2847, 2147483648
    %v2929 = vor.u32 1.1754944e-38, %v2928
    %v2930 = vsel %vm2927, %v2929, %v2925
    %v2931 = vmul.f32 1.0, %v2930
    %v2932 = vrcp.pop %v2850
    %v2933 = vmul.f32 %v2850, %v2932
    %v2934 = vsub.f32 1.0, %v2933
    %v2935 = vmul.f32 %v2932, %v2934
    %v2936 = vadd.f32 %v2932, %v2935
    %vm2937 = vweird.f32 %v2850
    %vm2938 = vweird.f32 %v2932
    %vm2939 = vmor %vm2937, %vm2938
    %v2940 = vsel %vm2939, %v2932, %v2936
    %v2941 = vand.u32 2147483647, %v2850
    %vm2942 = vcmp.eq.f32.partialorder %v2941, 8.507059e+37
    %v2943 = vand.u32 %v2850, 2147483648
    %v2944 = vor.u32 1.1754944e-38, %v2943
    %v2945 = vsel %vm2942, %v2944, %v2940
    %v2946 = vmul.f32 1.0, %v2945
    %v2947 = vrcp.pop %v2853
    %v2948 = vmul.f32 %v2853, %v2947
    %v2949 = vsub.f32 1.0, %v2948
    %v2950 = vmul.f32 %v2947, %v2949
    %v2951 = vadd.f32 %v2947, %v2950
    %vm2952 = vweird.f32 %v2853
    %vm2953 = vweird.f32 %v2947
    %vm2954 = vmor %vm2952, %vm2953
    %v2955 = vsel %vm2954, %v2947, %v2951
    %v2956 = vand.u32 2147483647, %v2853
    %vm2957 = vcmp.eq.f32.partialorder %v2956, 8.507059e+37
    %v2958 = vand.u32 %v2853, 2147483648
    %v2959 = vor.u32 1.1754944e-38, %v2958
    %v2960 = vsel %vm2957, %v2959, %v2955
    %v2961 = vmul.f32 1.0, %v2960
    %v2962 = vrcp.pop %v2856
    %v2963 = vmul.f32 %v2856, %v2962
    %v2964 = vsub.f32 1.0, %v2963
    %v2965 = vmul.f32 %v2962, %v2964
    %v2966 = vadd.f32 %v2962, %v2965
    %vm2967 = vweird.f32 %v2856
    %vm2968 = vweird.f32 %v2962
    %vm2969 = vmor %vm2967, %vm2968
    %v2970 = vsel %vm2969, %v2962, %v2966
    %v2971 = vand.u32 2147483647, %v2856
    %vm2972 = vcmp.eq.f32.partialorder %v2971, 8.507059e+37
    %v2973 = vand.u32 %v2856, 2147483648
    %v2974 = vor.u32 1.1754944e-38, %v2973
    %v2975 = vsel %vm2972, %v2974, %v2970
    %v2976 = vmul.f32 1.0, %v2975
    %v2977 = vrcp.pop %v2859
    %v2978 = vmul.f32 %v2859, %v2977
    %v2979 = vsub.f32 1.0, %v2978
    %v2980 = vmul.f32 %v2977, %v2979
    %v2981 = vadd.f32 %v2977, %v2980
    %vm2982 = vweird.f32 %v2859
    %vm2983 = vweird.f32 %v2977
    %vm2984 = vmor %vm2982, %vm2983
    %v2985 = vsel %vm2984, %v2977, %v2981
    %v2986 = vand.u32 2147483647, %v2859
    %vm2987 = vcmp.eq.f32.partialorder %v2986, 8.507059e+37
    %v2988 = vand.u32 %v2859, 2147483648
    %v2989 = vor.u32 1.1754944e-38, %v2988
    %v2990 = vsel %vm2987, %v2989, %v2985
    %v2991 = vmul.f32 1.0, %v2990
    %v2992 = vrcp.pop %v2862
    %v2993 = vmul.f32 %v2862, %v2992
    %v2994 = vsub.f32 1.0, %v2993
    %v2995 = vmul.f32 %v2992, %v2994
    %v2996 = vadd.f32 %v2992, %v2995
    %vm2997 = vweird.f32 %v2862
    %vm2998 = vweird.f32 %v2992
    %vm2999 = vmor %vm2997, %vm2998
    %v3000 = vsel %vm2999, %v2992, %v2996
    %v3001 = vand.u32 2147483647, %v2862
    %vm3002 = vcmp.eq.f32.partialorder %v3001, 8.507059e+37
    %v3003 = vand.u32 %v2862, 2147483648
    %v3004 = vor.u32 1.1754944e-38, %v3003
    %v3005 = vsel %vm3002, %v3004, %v3000
    %v3006 = vmul.f32 1.0, %v3005
    %v3007 = vrcp.pop %v2865
    %v3008 = vmul.f32 %v2865, %v3007
    %v3009 = vsub.f32 1.0, %v3008
    %v3010 = vmul.f32 %v3007, %v3009
    %v3011 = vadd.f32 %v3007, %v3010
    %vm3012 = vweird.f32 %v2865
    %vm3013 = vweird.f32 %v3007
    %vm3014 = vmor %vm3012, %vm3013
    %v3015 = vsel %vm3014, %v3007, %v3011
    %v3016 = vand.u32 2147483647, %v2865
    %vm3017 = vcmp.eq.f32.partialorder %v3016, 8.507059e+37
    %v3018 = vand.u32 %v2865, 2147483648
    %v3019 = vor.u32 1.1754944e-38, %v3018
    %v3020 = vsel %vm3017, %v3019, %v3015
    %v3021 = vmul.f32 1.0, %v3020
    %v3022 = vrcp.pop %v2868
    %v3023 = vmul.f32 %v2868, %v3022
    %v3024 = vsub.f32 1.0, %v3023
    %v3025 = vmul.f32 %v3022, %v3024
    %v3026 = vadd.f32 %v3022, %v3025
    %vm3027 = vweird.f32 %v2868
    %vm3028 = vweird.f32 %v3022
    %vm3029 = vmor %vm3027, %vm3028
    %v3030 = vsel %vm3029, %v3022, %v3026
    %v3031 = vand.u32 2147483647, %v2868
    %vm3032 = vcmp.eq.f32.partialorder %v3031, 8.507059e+37
    %v3033 = vand.u32 %v2868, 2147483648
    %v3034 = vor.u32 1.1754944e-38, %v3033
    %v3035 = vsel %vm3032, %v3034, %v3030
    %v3036 = vmul.f32 1.0, %v3035
    %v3037 = vrcp.pop %v2871
    %v3038 = vmul.f32 %v2871, %v3037
    %v3039 = vsub.f32 1.0, %v3038
    %v3040 = vmul.f32 %v3037, %v3039
    %v3041 = vadd.f32 %v3037, %v3040
    %vm3042 = vweird.f32 %v2871
    %vm3043 = vweird.f32 %v3037
    %vm3044 = vmor %vm3042, %vm3043
    %v3045 = vsel %vm3044, %v3037, %v3041
    %v3046 = vand.u32 2147483647, %v2871
    %vm3047 = vcmp.eq.f32.partialorder %v3046, 8.507059e+37
    %v3048 = vand.u32 %v2871, 2147483648
    %v3049 = vor.u32 1.1754944e-38, %v3048
    %v3050 = vsel %vm3047, %v3049, %v3045
    %v3051 = vmul.f32 1.0, %v3050
    %v3052 = vrcp.pop %v2874
    %v3053 = vmul.f32 %v2874, %v3052
    %v3054 = vsub.f32 1.0, %v3053
    %v3055 = vmul.f32 %v3052, %v3054
    %v3056 = vadd.f32 %v3052, %v3055
    %vm3057 = vweird.f32 %v2874
    %vm3058 = vweird.f32 %v3052
    %vm3059 = vmor %vm3057, %vm3058
    %v3060 = vsel %vm3059, %v3052, %v3056
    %v3061 = vand.u32 2147483647, %v2874
    %vm3062 = vcmp.eq.f32.partialorder %v3061, 8.507059e+37
    %v3063 = vand.u32 %v2874, 2147483648
    %v3064 = vor.u32 1.1754944e-38, %v3063
    %v3065 = vsel %vm3062, %v3064, %v3060
    %v3066 = vmul.f32 1.0, %v3065
    %v3067 = vrcp.pop %v2877
    %v3068 = vmul.f32 %v2877, %v3067
    %v3069 = vsub.f32 1.0, %v3068
    %v3070 = vmul.f32 %v3067, %v3069
    %v3071 = vadd.f32 %v3067, %v3070
    %vm3072 = vweird.f32 %v2877
    %vm3073 = vweird.f32 %v3067
    %vm3074 = vmor %vm3072, %vm3073
    %v3075 = vsel %vm3074, %v3067, %v3071
    %v3076 = vand.u32 2147483647, %v2877
    %vm3077 = vcmp.eq.f32.partialorder %v3076, 8.507059e+37
    %v3078 = vand.u32 %v2877, 2147483648
    %v3079 = vor.u32 1.1754944e-38, %v3078
    %v3080 = vsel %vm3077, %v3079, %v3075
    %v3081 = vmul.f32 1.0, %v3080
    %v3082 = vrcp.pop %v2880
    %v3083 = vmul.f32 %v2880, %v3082
    %v3084 = vsub.f32 1.0, %v3083
    %v3085 = vmul.f32 %v3082, %v3084
    %v3086 = vadd.f32 %v3082, %v3085
    %vm3087 = vweird.f32 %v2880
    %vm3088 = vweird.f32 %v3082
    %vm3089 = vmor %vm3087, %vm3088
    %v3090 = vsel %vm3089, %v3082, %v3086
    %v3091 = vand.u32 2147483647, %v2880
    %vm3092 = vcmp.eq.f32.partialorder %v3091, 8.507059e+37
    %v3093 = vand.u32 %v2880, 2147483648
    %v3094 = vor.u32 1.1754944e-38, %v3093
    %v3095 = vsel %vm3092, %v3094, %v3090
    %v3096 = vmul.f32 1.0, %v3095
    %v3097 = vrcp.pop %v2883
    %v3098 = vmul.f32 %v2883, %v3097
    %v3099 = vsub.f32 1.0, %v3098
    %v3100 = vmul.f32 %v3097, %v3099
    %v3101 = vadd.f32 %v3097, %v3100
    %vm3102 = vweird.f32 %v2883
    %vm3103 = vweird.f32 %v3097
    %vm3104 = vmor %vm3102, %vm3103
    %v3105 = vsel %vm3104, %v3097, %v3101
    %v3106 = vand.u32 2147483647, %v2883
    %vm3107 = vcmp.eq.f32.partialorder %v3106, 8.507059e+37
    %v3108 = vand.u32 %v2883, 2147483648
    %v3109 = vor.u32 1.1754944e-38, %v3108
    %v3110 = vsel %vm3107, %v3109, %v3105
    %v3111 = vmul.f32 1.0, %v3110
    %v3112 = vrcp.pop %v2886
    %v3113 = vmul.f32 %v2886, %v3112
    %v3114 = vsub.f32 1.0, %v3113
    %v3115 = vmul.f32 %v3112, %v3114
    %v3116 = vadd.f32 %v3112, %v3115
    %vm3117 = vweird.f32 %v2886
    %vm3118 = vweird.f32 %v3112
    %vm3119 = vmor %vm3117, %vm3118
    %v3120 = vsel %vm3119, %v3112, %v3116
    %v3121 = vand.u32 2147483647, %v2886
    %vm3122 = vcmp.eq.f32.partialorder %v3121, 8.507059e+37
    %v3123 = vand.u32 %v2886, 2147483648
    %v3124 = vor.u32 1.1754944e-38, %v3123
    %v3125 = vsel %vm3122, %v3124, %v3120
    %v3126 = vmul.f32 1.0, %v3125
    %v3127 = vmul.f32 %v2808, %v2901
    %v3128 = vmul.f32 %v2810, %v2916
    %v3129 = vmul.f32 %v2812, %v2931
    %v3130 = vmul.f32 %v2814, %v2946
    %v3131 = vmul.f32 %v2816, %v2961
    %v3132 = vmul.f32 %v2818, %v2976
    %v3133 = vmul.f32 %v2820, %v2991
    %v3134 = vmul.f32 %v2822, %v3006
    %v3135 = vmul.f32 %v2824, %v3021
    %v3136 = vmul.f32 %v2826, %v3036
    %v3137 = vmul.f32 %v2828, %v3051
    %v3138 = vmul.f32 %v2830, %v3066
    %v3139 = vmul.f32 %v2832, %v3081
    %v3140 = vmul.f32 %v2834, %v3096
    %v3141 = vmul.f32 %v2836, %v3111
    %v3142 = vmul.f32 %v2838, %v3126
    %v3144 = vsel %vm940, %v3127, 0
    %3146 = vmatpush.msra.mxu0 0.0
    %3147 = vmatpush.msra.mxu0 0.0
    %3148 = vmatpush.msra.mxu0 0.0
    %3149 = vmatpush.msra.mxu0 0.0
    %3150 = vmatpush.msra.mxu0 0.0
    %3151 = vmatpush.msra.mxu0 0.0
    %3152 = vmatpush.msra.mxu0 0.0
    %3153 = vmatpush.msra.mxu0 0.0
    %3154 = vmatpush.msra.mxu0 0.0
    %3155 = vmatpush.msra.mxu0 0.0
    %3156 = vmatpush.msra.mxu0 0.0
    %3157 = vmatpush.msra.mxu0 0.0
    %3158 = vmatpush.msra.mxu0 0.0
    %3159 = vmatpush.msra.mxu0 0.0
    %3160 = vmatpush.msra.mxu0 0.0
    %3161 = vmatpush.msra.mxu0 %v2234
    %3162 = vmatmul.f32.gmra.mxu0 %v3144
    %v3163 = vpop.f32.mrf.mxu0
    %v3164 = vadd.f32 0.0, %v3163
    %3165 = vdwg.mxu0
    %v3167 = vsel %vm940, %v3128, 0
    %3169 = vmatpush.msra.mxu0 0.0
    %3170 = vmatpush.msra.mxu0 0.0
    %3171 = vmatpush.msra.mxu0 0.0
    %3172 = vmatpush.msra.mxu0 0.0
    %3173 = vmatpush.msra.mxu0 0.0
    %3174 = vmatpush.msra.mxu0 0.0
    %3175 = vmatpush.msra.mxu0 0.0
    %3176 = vmatpush.msra.mxu0 0.0
    %3177 = vmatpush.msra.mxu0 0.0
    %3178 = vmatpush.msra.mxu0 0.0
    %3179 = vmatpush.msra.mxu0 0.0
    %3180 = vmatpush.msra.mxu0 0.0
    %3181 = vmatpush.msra.mxu0 0.0
    %3182 = vmatpush.msra.mxu0 0.0
    %3183 = vmatpush.msra.mxu0 0.0
    %3184 = vmatpush.msra.mxu0 %v2302
    %3185 = vmatmul.f32.gmra.mxu0 %v3167
    %v3186 = vpop.f32.mrf.mxu0
    %v3187 = vadd.f32 0.0, %v3186
    %3188 = vdwg.mxu0
    %v3190 = vsel %vm940, %v3129, 0
    %3192 = vmatpush.msra.mxu0 0.0
    %3193 = vmatpush.msra.mxu0 0.0
    %3194 = vmatpush.msra.mxu0 0.0
    %3195 = vmatpush.msra.mxu0 0.0
    %3196 = vmatpush.msra.mxu0 0.0
    %3197 = vmatpush.msra.mxu0 0.0
    %3198 = vmatpush.msra.mxu0 0.0
    %3199 = vmatpush.msra.mxu0 0.0
    %3200 = vmatpush.msra.mxu0 0.0
    %3201 = vmatpush.msra.mxu0 0.0
    %3202 = vmatpush.msra.mxu0 0.0
    %3203 = vmatpush.msra.mxu0 0.0
    %3204 = vmatpush.msra.mxu0 0.0
    %3205 = vmatpush.msra.mxu0 0.0
    %3206 = vmatpush.msra.mxu0 0.0
    %3207 = vmatpush.msra.mxu0 %v2308
    %3208 = vmatmul.f32.gmra.mxu0 %v3190
    %v3209 = vpop.f32.mrf.mxu0
    %v3210 = vadd.f32 0.0, %v3209
    %3211 = vdwg.mxu0
    %v3213 = vsel %vm940, %v3130, 0
    %3215 = vmatpush.msra.mxu0 0.0
    %3216 = vmatpush.msra.mxu0 0.0
    %3217 = vmatpush.msra.mxu0 0.0
    %3218 = vmatpush.msra.mxu0 0.0
    %3219 = vmatpush.msra.mxu0 0.0
    %3220 = vmatpush.msra.mxu0 0.0
    %3221 = vmatpush.msra.mxu0 0.0
    %3222 = vmatpush.msra.mxu0 0.0
    %3223 = vmatpush.msra.mxu0 0.0
    %3224 = vmatpush.msra.mxu0 0.0
    %3225 = vmatpush.msra.mxu0 0.0
    %3226 = vmatpush.msra.mxu0 0.0
    %3227 = vmatpush.msra.mxu0 0.0
    %3228 = vmatpush.msra.mxu0 0.0
    %3229 = vmatpush.msra.mxu0 0.0
    %3230 = vmatpush.msra.mxu0 %v2314
    %3231 = vmatmul.f32.gmra.mxu0 %v3213
    %v3232 = vpop.f32.mrf.mxu0
    %v3233 = vadd.f32 0.0, %v3232
    %3234 = vdwg.mxu0
    %v3236 = vsel %vm940, %v3131, 0
    %3238 = vmatpush.msra.mxu0 0.0
    %3239 = vmatpush.msra.mxu0 0.0
    %3240 = vmatpush.msra.mxu0 0.0
    %3241 = vmatpush.msra.mxu0 0.0
    %3242 = vmatpush.msra.mxu0 0.0
    %3243 = vmatpush.msra.mxu0 0.0
    %3244 = vmatpush.msra.mxu0 0.0
    %3245 = vmatpush.msra.mxu0 0.0
    %3246 = vmatpush.msra.mxu0 0.0
    %3247 = vmatpush.msra.mxu0 0.0
    %3248 = vmatpush.msra.mxu0 0.0
    %3249 = vmatpush.msra.mxu0 0.0
    %3250 = vmatpush.msra.mxu0 0.0
    %3251 = vmatpush.msra.mxu0 0.0
    %3252 = vmatpush.msra.mxu0 0.0
    %3253 = vmatpush.msra.mxu0 %v2320
    %3254 = vmatmul.f32.gmra.mxu0 %v3236
    %v3255 = vpop.f32.mrf.mxu0
    %v3256 = vadd.f32 0.0, %v3255
    %3257 = vdwg.mxu0
    %v3259 = vsel %vm940, %v3132, 0
    %3261 = vmatpush.msra.mxu0 0.0
    %3262 = vmatpush.msra.mxu0 0.0
    %3263 = vmatpush.msra.mxu0 0.0
    %3264 = vmatpush.msra.mxu0 0.0
    %3265 = vmatpush.msra.mxu0 0.0
    %3266 = vmatpush.msra.mxu0 0.0
    %3267 = vmatpush.msra.mxu0 0.0
    %3268 = vmatpush.msra.mxu0 0.0
    %3269 = vmatpush.msra.mxu0 0.0
    %3270 = vmatpush.msra.mxu0 0.0
    %3271 = vmatpush.msra.mxu0 0.0
    %3272 = vmatpush.msra.mxu0 0.0
    %3273 = vmatpush.msra.mxu0 0.0
    %3274 = vmatpush.msra.mxu0 0.0
    %3275 = vmatpush.msra.mxu0 0.0
    %3276 = vmatpush.msra.mxu0 %v2326
    %3277 = vmatmul.f32.gmra.mxu0 %v3259
    %v3278 = vpop.f32.mrf.mxu0
    %v3279 = vadd.f32 0.0, %v3278
    %3280 = vdwg.mxu0
    %v3282 = vsel %vm940, %v3133, 0
    %3284 = vmatpush.msra.mxu0 0.0
    %3285 = vmatpush.msra.mxu0 0.0
    %3286 = vmatpush.msra.mxu0 0.0
    %3287 = vmatpush.msra.mxu0 0.0
    %3288 = vmatpush.msra.mxu0 0.0
    %3289 = vmatpush.msra.mxu0 0.0
    %3290 = vmatpush.msra.mxu0 0.0
    %3291 = vmatpush.msra.mxu0 0.0
    %3292 = vmatpush.msra.mxu0 0.0
    %3293 = vmatpush.msra.mxu0 0.0
    %3294 = vmatpush.msra.mxu0 0.0
    %3295 = vmatpush.msra.mxu0 0.0
    %3296 = vmatpush.msra.mxu0 0.0
    %3297 = vmatpush.msra.mxu0 0.0
    %3298 = vmatpush.msra.mxu0 0.0
    %3299 = vmatpush.msra.mxu0 %v2332
    %3300 = vmatmul.f32.gmra.mxu0 %v3282
    %v3301 = vpop.f32.mrf.mxu0
    %v3302 = vadd.f32 0.0, %v3301
    %3303 = vdwg.mxu0
    %v3305 = vsel %vm940, %v3134, 0
    %3307 = vmatpush.msra.mxu0 0.0
    %3308 = vmatpush.msra.mxu0 0.0
    %3309 = vmatpush.msra.mxu0 0.0
    %3310 = vmatpush.msra.mxu0 0.0
    %3311 = vmatpush.msra.mxu0 0.0
    %3312 = vmatpush.msra.mxu0 0.0
    %3313 = vmatpush.msra.mxu0 0.0
    %3314 = vmatpush.msra.mxu0 0.0
    %3315 = vmatpush.msra.mxu0 0.0
    %3316 = vmatpush.msra.mxu0 0.0
    %3317 = vmatpush.msra.mxu0 0.0
    %3318 = vmatpush.msra.mxu0 0.0
    %3319 = vmatpush.msra.mxu0 0.0
    %3320 = vmatpush.msra.mxu0 0.0
    %3321 = vmatpush.msra.mxu0 0.0
    %3322 = vmatpush.msra.mxu0 %v2338
    %3323 = vmatmul.f32.gmra.mxu0 %v3305
    %v3324 = vpop.f32.mrf.mxu0
    %v3325 = vadd.f32 0.0, %v3324
    %3326 = vdwg.mxu0
    %v3328 = vsel %vm940, %v3135, 0
    %3330 = vmatpush.msra.mxu0 0.0
    %3331 = vmatpush.msra.mxu0 0.0
    %3332 = vmatpush.msra.mxu0 0.0
    %3333 = vmatpush.msra.mxu0 0.0
    %3334 = vmatpush.msra.mxu0 0.0
    %3335 = vmatpush.msra.mxu0 0.0
    %3336 = vmatpush.msra.mxu0 0.0
    %3337 = vmatpush.msra.mxu0 0.0
    %3338 = vmatpush.msra.mxu0 0.0
    %3339 = vmatpush.msra.mxu0 0.0
    %3340 = vmatpush.msra.mxu0 0.0
    %3341 = vmatpush.msra.mxu0 0.0
    %3342 = vmatpush.msra.mxu0 0.0
    %3343 = vmatpush.msra.mxu0 0.0
    %3344 = vmatpush.msra.mxu0 0.0
    %3345 = vmatpush.msra.mxu0 %v2237
    %3346 = vmatmul.f32.gmra.mxu0 %v3328
    %v3347 = vpop.f32.mrf.mxu0
    %v3348 = vadd.f32 0.0, %v3347
    %3349 = vdwg.mxu0
    %v3351 = vsel %vm940, %v3136, 0
    %3353 = vmatpush.msra.mxu0 0.0
    %3354 = vmatpush.msra.mxu0 0.0
    %3355 = vmatpush.msra.mxu0 0.0
    %3356 = vmatpush.msra.mxu0 0.0
    %3357 = vmatpush.msra.mxu0 0.0
    %3358 = vmatpush.msra.mxu0 0.0
    %3359 = vmatpush.msra.mxu0 0.0
    %3360 = vmatpush.msra.mxu0 0.0
    %3361 = vmatpush.msra.mxu0 0.0
    %3362 = vmatpush.msra.mxu0 0.0
    %3363 = vmatpush.msra.mxu0 0.0
    %3364 = vmatpush.msra.mxu0 0.0
    %3365 = vmatpush.msra.mxu0 0.0
    %3366 = vmatpush.msra.mxu0 0.0
    %3367 = vmatpush.msra.mxu0 0.0
    %3368 = vmatpush.msra.mxu0 %v2304
    %3369 = vmatmul.f32.gmra.mxu0 %v3351
    %v3370 = vpop.f32.mrf.mxu0
    %v3371 = vadd.f32 0.0, %v3370
    %3372 = vdwg.mxu0
    %v3374 = vsel %vm940, %v3137, 0
    %3376 = vmatpush.msra.mxu0 0.0
    %3377 = vmatpush.msra.mxu0 0.0
    %3378 = vmatpush.msra.mxu0 0.0
    %3379 = vmatpush.msra.mxu0 0.0
    %3380 = vmatpush.msra.mxu0 0.0
    %3381 = vmatpush.msra.mxu0 0.0
    %3382 = vmatpush.msra.mxu0 0.0
    %3383 = vmatpush.msra.mxu0 0.0
    %3384 = vmatpush.msra.mxu0 0.0
    %3385 = vmatpush.msra.mxu0 0.0
    %3386 = vmatpush.msra.mxu0 0.0
    %3387 = vmatpush.msra.mxu0 0.0
    %3388 = vmatpush.msra.mxu0 0.0
    %3389 = vmatpush.msra.mxu0 0.0
    %3390 = vmatpush.msra.mxu0 0.0
    %3391 = vmatpush.msra.mxu0 %v2310
    %3392 = vmatmul.f32.gmra.mxu0 %v3374
    %v3393 = vpop.f32.mrf.mxu0
    %v3394 = vadd.f32 0.0, %v3393
    %3395 = vdwg.mxu0
    %v3397 = vsel %vm940, %v3138, 0
    %3399 = vmatpush.msra.mxu0 0.0
    %3400 = vmatpush.msra.mxu0 0.0
    %3401 = vmatpush.msra.mxu0 0.0
    %3402 = vmatpush.msra.mxu0 0.0
    %3403 = vmatpush.msra.mxu0 0.0
    %3404 = vmatpush.msra.mxu0 0.0
    %3405 = vmatpush.msra.mxu0 0.0
    %3406 = vmatpush.msra.mxu0 0.0
    %3407 = vmatpush.msra.mxu0 0.0
    %3408 = vmatpush.msra.mxu0 0.0
    %3409 = vmatpush.msra.mxu0 0.0
    %3410 = vmatpush.msra.mxu0 0.0
    %3411 = vmatpush.msra.mxu0 0.0
    %3412 = vmatpush.msra.mxu0 0.0
    %3413 = vmatpush.msra.mxu0 0.0
    %3414 = vmatpush.msra.mxu0 %v2316
    %3415 = vmatmul.f32.gmra.mxu0 %v3397
    %v3416 = vpop.f32.mrf.mxu0
    %v3417 = vadd.f32 0.0, %v3416
    %3418 = vdwg.mxu0
    %v3420 = vsel %vm940, %v3139, 0
    %3422 = vmatpush.msra.mxu0 0.0
    %3423 = vmatpush.msra.mxu0 0.0
    %3424 = vmatpush.msra.mxu0 0.0
    %3425 = vmatpush.msra.mxu0 0.0
    %3426 = vmatpush.msra.mxu0 0.0
    %3427 = vmatpush.msra.mxu0 0.0
    %3428 = vmatpush.msra.mxu0 0.0
    %3429 = vmatpush.msra.mxu0 0.0
    %3430 = vmatpush.msra.mxu0 0.0
    %3431 = vmatpush.msra.mxu0 0.0
    %3432 = vmatpush.msra.mxu0 0.0
    %3433 = vmatpush.msra.mxu0 0.0
    %3434 = vmatpush.msra.mxu0 0.0
    %3435 = vmatpush.msra.mxu0 0.0
    %3436 = vmatpush.msra.mxu0 0.0
    %3437 = vmatpush.msra.mxu0 %v2322
    %3438 = vmatmul.f32.gmra.mxu0 %v3420
    %v3439 = vpop.f32.mrf.mxu0
    %v3440 = vadd.f32 0.0, %v3439
    %3441 = vdwg.mxu0
    %v3443 = vsel %vm940, %v3140, 0
    %3445 = vmatpush.msra.mxu0 0.0
    %3446 = vmatpush.msra.mxu0 0.0
    %3447 = vmatpush.msra.mxu0 0.0
    %3448 = vmatpush.msra.mxu0 0.0
    %3449 = vmatpush.msra.mxu0 0.0
    %3450 = vmatpush.msra.mxu0 0.0
    %3451 = vmatpush.msra.mxu0 0.0
    %3452 = vmatpush.msra.mxu0 0.0
    %3453 = vmatpush.msra.mxu0 0.0
    %3454 = vmatpush.msra.mxu0 0.0
    %3455 = vmatpush.msra.mxu0 0.0
    %3456 = vmatpush.msra.mxu0 0.0
    %3457 = vmatpush.msra.mxu0 0.0
    %3458 = vmatpush.msra.mxu0 0.0
    %3459 = vmatpush.msra.mxu0 0.0
    %3460 = vmatpush.msra.mxu0 %v2328
    %3461 = vmatmul.f32.gmra.mxu0 %v3443
    %v3462 = vpop.f32.mrf.mxu0
    %v3463 = vadd.f32 0.0, %v3462
    %3464 = vdwg.mxu0
    %v3466 = vsel %vm940, %v3141, 0
    %3468 = vmatpush.msra.mxu0 0.0
    %3469 = vmatpush.msra.mxu0 0.0
    %3470 = vmatpush.msra.mxu0 0.0
    %3471 = vmatpush.msra.mxu0 0.0
    %3472 = vmatpush.msra.mxu0 0.0
    %3473 = vmatpush.msra.mxu0 0.0
    %3474 = vmatpush.msra.mxu0 0.0
    %3475 = vmatpush.msra.mxu0 0.0
    %3476 = vmatpush.msra.mxu0 0.0
    %3477 = vmatpush.msra.mxu0 0.0
    %3478 = vmatpush.msra.mxu0 0.0
    %3479 = vmatpush.msra.mxu0 0.0
    %3480 = vmatpush.msra.mxu0 0.0
    %3481 = vmatpush.msra.mxu0 0.0
    %3482 = vmatpush.msra.mxu0 0.0
    %3483 = vmatpush.msra.mxu0 %v2334
    %3484 = vmatmul.f32.gmra.mxu0 %v3466
    %v3485 = vpop.f32.mrf.mxu0
    %v3486 = vadd.f32 0.0, %v3485
    %3487 = vdwg.mxu0
    %v3489 = vsel %vm940, %v3142, 0
    %3491 = vmatpush.msra.mxu0 0.0
    %3492 = vmatpush.msra.mxu0 0.0
    %3493 = vmatpush.msra.mxu0 0.0
    %3494 = vmatpush.msra.mxu0 0.0
    %3495 = vmatpush.msra.mxu0 0.0
    %3496 = vmatpush.msra.mxu0 0.0
    %3497 = vmatpush.msra.mxu0 0.0
    %3498 = vmatpush.msra.mxu0 0.0
    %3499 = vmatpush.msra.mxu0 0.0
    %3500 = vmatpush.msra.mxu0 0.0
    %3501 = vmatpush.msra.mxu0 0.0
    %3502 = vmatpush.msra.mxu0 0.0
    %3503 = vmatpush.msra.mxu0 0.0
    %3504 = vmatpush.msra.mxu0 0.0
    %3505 = vmatpush.msra.mxu0 0.0
    %3506 = vmatpush.msra.mxu0 %v2340
    %3507 = vmatmul.f32.gmra.mxu0 %v3489
    %v3508 = vpop.f32.mrf.mxu0
    %v3509 = vadd.f32 0.0, %v3508
    %3510 = vdwg.mxu0
    %3513 = vrot.lane.b32.xlu0 %v3187, 16
    %v3514 = vpop.permute.xlu0 %3513
    %3515 = vrot.lane.b32.xlu0 %v3371, 16
    %v3516 = vpop.permute.xlu0 %3515
    %3521 = vrot.lane.b32.xlu0 %v3210, 32
    %v3522 = vpop.permute.xlu0 %3521
    %3523 = vrot.lane.b32.xlu0 %v3394, 32
    %v3524 = vpop.permute.xlu0 %3523
    %3529 = vrot.lane.b32.xlu0 %v3233, 48
    %v3530 = vpop.permute.xlu0 %3529
    %3531 = vrot.lane.b32.xlu0 %v3417, 48
    %v3532 = vpop.permute.xlu0 %3531
    %3537 = vrot.lane.b32.xlu0 %v3256, 64
    %v3538 = vpop.permute.xlu0 %3537
    %3539 = vrot.lane.b32.xlu0 %v3440, 64
    %v3540 = vpop.permute.xlu0 %3539
    %3545 = vrot.lane.b32.xlu0 %v3279, 80
    %v3546 = vpop.permute.xlu0 %3545
    %3547 = vrot.lane.b32.xlu0 %v3463, 80
    %v3548 = vpop.permute.xlu0 %3547
    %3553 = vrot.lane.b32.xlu0 %v3302, 96
    %v3554 = vpop.permute.xlu0 %3553
    %3555 = vrot.lane.b32.xlu0 %v3486, 96
    %v3556 = vpop.permute.xlu0 %3555
    %3561 = vrot.lane.b32.xlu0 %v3325, 112
    %v3562 = vpop.permute.xlu0 %3561
    %3563 = vrot.lane.b32.xlu0 %v3509, 112
    %v3564 = vpop.permute.xlu0 %3563
    %v3567 = vsel %vm539, %v3164, %v3514
    %v3568 = vsel %vm539, %v3348, %v3516
    %v3569 = vsel %vm276, %v3567, %v3522
    %v3570 = vsel %vm276, %v3568, %v3524
    %v3571 = vsel %vm1769, %v3569, %v3530
    %v3572 = vsel %vm1769, %v3570, %v3532
    %v3573 = vsel %vm1772, %v3571, %v3538
    %v3574 = vsel %vm1772, %v3572, %v3540
    %v3575 = vsel %vm1775, %v3573, %v3546
    %v3576 = vsel %vm1775, %v3574, %v3548
    %v3577 = vsel %vm1778, %v3575, %v3554
    %v3578 = vsel %vm1778, %v3576, %v3556
    %v3579 = vsel %vm1781, %v3577, %v3562
    %v3580 = vsel %vm1781, %v3578, %v3564
    %s3581 = scalar_lea.vmem [#allocation10], 128
    %v3582 = vld [vmem:[%s3581] sm:$0xff]
    %v3583 = vld [vmem:[%s3581 + $0x8] sm:$0xff]
    %v3584 = vld [vmem:[%s3581 + $0x10] sm:$0xff]
    %v3585 = vld [vmem:[%s3581 + $0x18] sm:$0xff]
    %v3586 = vld [vmem:[%s3581 + $0x20] sm:$0xff]
    %v3587 = vld [vmem:[%s3581 + $0x28] sm:$0xff]
    %v3588 = vld [vmem:[%s3581 + $0x30] sm:$0xff]
    %v3589 = vld [vmem:[%s3581 + $0x38] sm:$0xff]
    %v3590 = vld [vmem:[%s3581 + $0x40] sm:$0xff]
    %v3591 = vld [vmem:[%s3581 + $0x48] sm:$0xff]
    %v3592 = vld [vmem:[%s3581 + $0x50] sm:$0xff]
    %v3593 = vld [vmem:[%s3581 + $0x58] sm:$0xff]
    %v3594 = vld [vmem:[%s3581 + $0x60] sm:$0xff]
    %v3595 = vld [vmem:[%s3581 + $0x68] sm:$0xff]
    %v3596 = vld [vmem:[%s3581 + $0x70] sm:$0xff]
    %v3597 = vld [vmem:[%s3581 + $0x78] sm:$0xff]
    %s3598 = scalar_lea.vmem %s7, 1
    %v3599 = vld [vmem:[%s3598] sm:$0x1]
    %v3601 = vperm.slane %v3599, 0
    %3603 = vmatpush.msra.mxu0 %v3597
    %3604 = vmatpush.msra.mxu0 %v3596
    %3605 = vmatpush.msra.mxu0 %v3595
    %3606 = vmatpush.msra.mxu0 %v3594
    %3607 = vmatpush.msra.mxu0 %v3593
    %3608 = vmatpush.msra.mxu0 %v3592
    %3609 = vmatpush.msra.mxu0 %v3591
    %3610 = vmatpush.msra.mxu0 %v3590
    %3611 = vmatpush.msra.mxu0 %v3589
    %3612 = vmatpush.msra.mxu0 %v3588
    %3613 = vmatpush.msra.mxu0 %v3587
    %3614 = vmatpush.msra.mxu0 %v3586
    %3615 = vmatpush.msra.mxu0 %v3585
    %3616 = vmatpush.msra.mxu0 %v3584
    %3617 = vmatpush.msra.mxu0 %v3583
    %3618 = vmatpush.msra.mxu0 %v3582
    %3619 = vmatmul.f32.gmra.mxu0 %v3579
    %v3620 = vpop.f32.mrf.mxu0
    %v3621 = vadd.f32 %v3601, %v3620
    %3622 = vmatmul.f32.gmra.mxu0 %v3580
    %v3623 = vpop.f32.mrf.mxu0
    %v3624 = vadd.f32 %v3601, %v3623
    %3625 = vdwg.mxu0
    %v3626 = vadd.f32 %v2110, %v3621
    %v3627 = vadd.f32 %v2111, %v3624
    %s3628 = scalar_lea.vmem %s8, 1
    %v3629 = vld [vmem:[%s3628] sm:$0x1]
    %s3630 = scalar_lea.vmem [#allocation11], 1
    %v3631 = vld [vmem:[%s3630] sm:$0x1]
    %3632 = vadd.xlane.f32.xlu0 %v3626
    %v3633 = vpop.xlane.xlu0 %3632
    %3634 = vadd.xlane.f32.xlu0 %v3627
    %v3635 = vpop.xlane.xlu0 %3634
    %v3636 = vmul.f32 %v3633, %v1841
    %v3637 = vmul.f32 %v3635, %v1841
    %v3638 = vsub.f32 %v3626, %v3636
    %v3639 = vsub.f32 %v3627, %v3637
    %v3640 = vmul.f32 %v3638, %v3638
    %v3641 = vmul.f32 %v3639, %v3639
    %3642 = vadd.xlane.f32.xlu0 %v3640
    %v3643 = vpop.xlane.xlu0 %3642
    %3644 = vadd.xlane.f32.xlu0 %v3641
    %v3645 = vpop.xlane.xlu0 %3644
    %v3646 = vmul.f32 %v3643, %v1841
    %v3647 = vmul.f32 %v3645, %v1841
    %v3648 = vadd.f32 %v3646, 1e-05
    %v3649 = vadd.f32 %v3647, 1e-05
    %v3650 = vrsqrt.pop %v3648
    %v3651 = vmul.f32 %v3650, %v3648
    %v3652 = vmul.f32 %v3651, %v3650
    %v3653 = vmul.f32 0.5, %v3652
    %v3654 = vsub.f32 1.5, %v3653
    %v3655 = vmul.f32 %v3650, %v3654
    %vm3656 = vweird.f32 %v3648
    %vm3657 = vweird.f32 %v3650
    %vm3658 = vmor %vm3656, %vm3657
    %v3659 = vsel %vm3658, %v3650, %v3655
    %v3660 = vrsqrt.pop %v3649
    %v3661 = vmul.f32 %v3660, %v3649
    %v3662 = vmul.f32 %v3661, %v3660
    %v3663 = vmul.f32 0.5, %v3662
    %v3664 = vsub.f32 1.5, %v3663
    %v3665 = vmul.f32 %v3660, %v3664
    %vm3666 = vweird.f32 %v3649
    %vm3667 = vweird.f32 %v3660
    %vm3668 = vmor %vm3666, %vm3667
    %v3669 = vsel %vm3668, %v3660, %v3665
    %v3670 = vmul.f32 %v3638, %v3659
    %v3671 = vmul.f32 %v3639, %v3669
    %v3673 = vperm.slane %v3629, 0
    %v3675 = vmul.f32 %v3670, %v3673
    %v3676 = vmul.f32 %v3671, %v3673
    %v3678 = vperm.slane %v3631, 0
    %v3680 = vadd.f32 %v3675, %v3678
    %v3681 = vadd.f32 %v3676, %v3678
    %s3682 = scalar_lea.vmem [#allocation13], 256
    %v3683 = vld [vmem:[%s3682] sm:$0xff]
    %v3684 = vld [vmem:[%s3682 + $0x8] sm:$0xff]
    %v3685 = vld [vmem:[%s3682 + $0x10] sm:$0xff]
    %v3686 = vld [vmem:[%s3682 + $0x18] sm:$0xff]
    %v3687 = vld [vmem:[%s3682 + $0x20] sm:$0xff]
    %v3688 = vld [vmem:[%s3682 + $0x28] sm:$0xff]
    %v3689 = vld [vmem:[%s3682 + $0x30] sm:$0xff]
    %v3690 = vld [vmem:[%s3682 + $0x38] sm:$0xff]
    %v3691 = vld [vmem:[%s3682 + $0x40] sm:$0xff]
    %v3692 = vld [vmem:[%s3682 + $0x48] sm:$0xff]
    %v3693 = vld [vmem:[%s3682 + $0x50] sm:$0xff]
    %v3694 = vld [vmem:[%s3682 + $0x58] sm:$0xff]
    %v3695 = vld [vmem:[%s3682 + $0x60] sm:$0xff]
    %v3696 = vld [vmem:[%s3682 + $0x68] sm:$0xff]
    %v3697 = vld [vmem:[%s3682 + $0x70] sm:$0xff]
    %v3698 = vld [vmem:[%s3682 + $0x78] sm:$0xff]
    %v3699 = vld [vmem:[%s3682 + $0x80] sm:$0xff]
    %v3700 = vld [vmem:[%s3682 + $0x88] sm:$0xff]
    %v3701 = vld [vmem:[%s3682 + $0x90] sm:$0xff]
    %v3702 = vld [vmem:[%s3682 + $0x98] sm:$0xff]
    %v3703 = vld [vmem:[%s3682 + $0xa0] sm:$0xff]
    %v3704 = vld [vmem:[%s3682 + $0xa8] sm:$0xff]
    %v3705 = vld [vmem:[%s3682 + $0xb0] sm:$0xff]
    %v3706 = vld [vmem:[%s3682 + $0xb8] sm:$0xff]
    %v3707 = vld [vmem:[%s3682 + $0xc0] sm:$0xff]
    %v3708 = vld [vmem:[%s3682 + $0xc8] sm:$0xff]
    %v3709 = vld [vmem:[%s3682 + $0xd0] sm:$0xff]
    %v3710 = vld [vmem:[%s3682 + $0xd8] sm:$0xff]
    %v3711 = vld [vmem:[%s3682 + $0xe0] sm:$0xff]
    %v3712 = vld [vmem:[%s3682 + $0xe8] sm:$0xff]
    %v3713 = vld [vmem:[%s3682 + $0xf0] sm:$0xff]
    %v3714 = vld [vmem:[%s3682 + $0xf8] sm:$0xff]
    %s3715 = scalar_lea.vmem %s11, 2
    %v3716 = vld [vmem:[%s3715] sm:$0x3]
    %v3718 = vperm.slane %v3716, 0
    %v3719 = vperm.slane %v3716, 1
    %3722 = vmatpush.msra.mxu0 %v3713
    %3723 = vmatpush.msra.mxu0 %v3711
    %3724 = vmatpush.msra.mxu0 %v3709
    %3725 = vmatpush.msra.mxu0 %v3707
    %3726 = vmatpush.msra.mxu0 %v3705
    %3727 = vmatpush.msra.mxu0 %v3703
    %3728 = vmatpush.msra.mxu0 %v3701
    %3729 = vmatpush.msra.mxu0 %v3699
    %3730 = vmatpush.msra.mxu0 %v3697
    %3731 = vmatpush.msra.mxu0 %v3695
    %3732 = vmatpush.msra.mxu0 %v3693
    %3733 = vmatpush.msra.mxu0 %v3691
    %3734 = vmatpush.msra.mxu0 %v3689
    %3735 = vmatpush.msra.mxu0 %v3687
    %3736 = vmatpush.msra.mxu0 %v3685
    %3737 = vmatpush.msra.mxu0 %v3683
    %3738 = vmatmul.f32.gmra.mxu0 %v3680
    %v3739 = vpop.f32.mrf.mxu0
    %v3740 = vadd.f32 %v3718, %v3739
    %3741 = vmatmul.f32.gmra.mxu0 %v3681
    %v3742 = vpop.f32.mrf.mxu0
    %v3743 = vadd.f32 %v3718, %v3742
    %3744 = vdwg.mxu0
    %3745 = vmatpush.msra.mxu0 %v3714
    %3746 = vmatpush.msra.mxu0 %v3712
    %3747 = vmatpush.msra.mxu0 %v3710
    %3748 = vmatpush.msra.mxu0 %v3708
    %3749 = vmatpush.msra.mxu0 %v3706
    %3750 = vmatpush.msra.mxu0 %v3704
    %3751 = vmatpush.msra.mxu0 %v3702
    %3752 = vmatpush.msra.mxu0 %v3700
    %3753 = vmatpush.msra.mxu0 %v3698
    %3754 = vmatpush.msra.mxu0 %v3696
    %3755 = vmatpush.msra.mxu0 %v3694
    %3756 = vmatpush.msra.mxu0 %v3692
    %3757 = vmatpush.msra.mxu0 %v3690
    %3758 = vmatpush.msra.mxu0 %v3688
    %3759 = vmatpush.msra.mxu0 %v3686
    %3760 = vmatpush.msra.mxu0 %v3684
    %3761 = vmatmul.f32.gmra.mxu0 %v3680
    %v3762 = vpop.f32.mrf.mxu0
    %v3763 = vadd.f32 %v3719, %v3762
    %3764 = vmatmul.f32.gmra.mxu0 %v3681
    %v3765 = vpop.f32.mrf.mxu0
    %v3766 = vadd.f32 %v3719, %v3765
    %3767 = vdwg.mxu0
    %v3768 = vmax.f32 %v3740, 0.0
    %v3769 = vmax.f32 %v3763, 0.0
    %v3770 = vmax.f32 %v3743, 0.0
    %v3771 = vmax.f32 %v3766, 0.0
    %s3772 = scalar_lea.vmem [#allocation14], 256
    %v3773 = vld [vmem:[%s3772] sm:$0xff]
    %v3774 = vld [vmem:[%s3772 + $0x8] sm:$0xff]
    %v3775 = vld [vmem:[%s3772 + $0x10] sm:$0xff]
    %v3776 = vld [vmem:[%s3772 + $0x18] sm:$0xff]
    %v3777 = vld [vmem:[%s3772 + $0x20] sm:$0xff]
    %v3778 = vld [vmem:[%s3772 + $0x28] sm:$0xff]
    %v3779 = vld [vmem:[%s3772 + $0x30] sm:$0xff]
    %v3780 = vld [vmem:[%s3772 + $0x38] sm:$0xff]
    %v3781 = vld [vmem:[%s3772 + $0x40] sm:$0xff]
    %v3782 = vld [vmem:[%s3772 + $0x48] sm:$0xff]
    %v3783 = vld [vmem:[%s3772 + $0x50] sm:$0xff]
    %v3784 = vld [vmem:[%s3772 + $0x58] sm:$0xff]
    %v3785 = vld [vmem:[%s3772 + $0x60] sm:$0xff]
    %v3786 = vld [vmem:[%s3772 + $0x68] sm:$0xff]
    %v3787 = vld [vmem:[%s3772 + $0x70] sm:$0xff]
    %v3788 = vld [vmem:[%s3772 + $0x78] sm:$0xff]
    %v3789 = vld [vmem:[%s3772 + $0x80] sm:$0xff]
    %v3790 = vld [vmem:[%s3772 + $0x88] sm:$0xff]
    %v3791 = vld [vmem:[%s3772 + $0x90] sm:$0xff]
    %v3792 = vld [vmem:[%s3772 + $0x98] sm:$0xff]
    %v3793 = vld [vmem:[%s3772 + $0xa0] sm:$0xff]
    %v3794 = vld [vmem:[%s3772 + $0xa8] sm:$0xff]
    %v3795 = vld [vmem:[%s3772 + $0xb0] sm:$0xff]
    %v3796 = vld [vmem:[%s3772 + $0xb8] sm:$0xff]
    %v3797 = vld [vmem:[%s3772 + $0xc0] sm:$0xff]
    %v3798 = vld [vmem:[%s3772 + $0xc8] sm:$0xff]
    %v3799 = vld [vmem:[%s3772 + $0xd0] sm:$0xff]
    %v3800 = vld [vmem:[%s3772 + $0xd8] sm:$0xff]
    %v3801 = vld [vmem:[%s3772 + $0xe0] sm:$0xff]
    %v3802 = vld [vmem:[%s3772 + $0xe8] sm:$0xff]
    %v3803 = vld [vmem:[%s3772 + $0xf0] sm:$0xff]
    %v3804 = vld [vmem:[%s3772 + $0xf8] sm:$0xff]
    %s3805 = scalar_lea.vmem [#allocation16], 1
    %v3806 = vld [vmem:[%s3805] sm:$0x1]
    %v3808 = vperm.slane %v3806, 0
    %3810 = vmatpush.msra.mxu0 %v3788
    %3811 = vmatpush.msra.mxu0 %v3787
    %3812 = vmatpush.msra.mxu0 %v3786
    %3813 = vmatpush.msra.mxu0 %v3785
    %3814 = vmatpush.msra.mxu0 %v3784
    %3815 = vmatpush.msra.mxu0 %v3783
    %3816 = vmatpush.msra.mxu0 %v3782
    %3817 = vmatpush.msra.mxu0 %v3781
    %3818 = vmatpush.msra.mxu0 %v3780
    %3819 = vmatpush.msra.mxu0 %v3779
    %3820 = vmatpush.msra.mxu0 %v3778
    %3821 = vmatpush.msra.mxu0 %v3777
    %3822 = vmatpush.msra.mxu0 %v3776
    %3823 = vmatpush.msra.mxu0 %v3775
    %3824 = vmatpush.msra.mxu0 %v3774
    %3825 = vmatpush.msra.mxu0 %v3773
    %3826 = vmatmul.f32.gmra.mxu0 %v3768
    %v3827 = vpop.f32.mrf.mxu0
    %v3828 = vadd.f32 %v3808, %v3827
    %3829 = vmatmul.f32.gmra.mxu0 %v3770
    %v3830 = vpop.f32.mrf.mxu0
    %v3831 = vadd.f32 %v3808, %v3830
    %3832 = vdwg.mxu0
    %3833 = vmatpush.msra.mxu0 %v3804
    %3834 = vmatpush.msra.mxu0 %v3803
    %3835 = vmatpush.msra.mxu0 %v3802
    %3836 = vmatpush.msra.mxu0 %v3801
    %3837 = vmatpush.msra.mxu0 %v3800
    %3838 = vmatpush.msra.mxu0 %v3799
    %3839 = vmatpush.msra.mxu0 %v3798
    %3840 = vmatpush.msra.mxu0 %v3797
    %3841 = vmatpush.msra.mxu0 %v3796
    %3842 = vmatpush.msra.mxu0 %v3795
    %3843 = vmatpush.msra.mxu0 %v3794
    %3844 = vmatpush.msra.mxu0 %v3793
    %3845 = vmatpush.msra.mxu0 %v3792
    %3846 = vmatpush.msra.mxu0 %v3791
    %3847 = vmatpush.msra.mxu0 %v3790
    %3848 = vmatpush.msra.mxu0 %v3789
    %3849 = vmatmul.f32.gmra.mxu0 %v3769
    %v3850 = vpop.f32.mrf.mxu0
    %v3851 = vadd.f32 %v3828, %v3850
    %3852 = vmatmul.f32.gmra.mxu0 %v3771
    %v3853 = vpop.f32.mrf.mxu0
    %v3854 = vadd.f32 %v3831, %v3853
    %3855 = vdwg.mxu0
    %v3856 = vadd.f32 %v3680, %v3851
    %v3857 = vadd.f32 %v3681, %v3854
    %s3858 = scalar_lea.vmem [#allocation17], 1
    %v3859 = vld [vmem:[%s3858] sm:$0x1]
    %s3860 = scalar_lea.vmem [#allocation19], 1
    %v3861 = vld [vmem:[%s3860] sm:$0x1]
    %3862 = vadd.xlane.f32.xlu0 %v3856
    %v3863 = vpop.xlane.xlu0 %3862
    %3864 = vadd.xlane.f32.xlu0 %v3857
    %v3865 = vpop.xlane.xlu0 %3864
    %v3866 = vmul.f32 %v3863, %v1841
    %v3867 = vmul.f32 %v3865, %v1841
    %v3868 = vsub.f32 %v3856, %v3866
    %v3869 = vsub.f32 %v3857, %v3867
    %v3870 = vmul.f32 %v3868, %v3868
    %v3871 = vmul.f32 %v3869, %v3869
    %3872 = vadd.xlane.f32.xlu0 %v3870
    %v3873 = vpop.xlane.xlu0 %3872
    %3874 = vadd.xlane.f32.xlu0 %v3871
    %v3875 = vpop.xlane.xlu0 %3874
    %v3876 = vmul.f32 %v3873, %v1841
    %v3877 = vmul.f32 %v3875, %v1841
    %v3878 = vadd.f32 %v3876, 1e-05
    %v3879 = vadd.f32 %v3877, 1e-05
    %v3880 = vrsqrt.pop %v3878
    %v3881 = vmul.f32 %v3880, %v3878
    %v3882 = vmul.f32 %v3881, %v3880
    %v3883 = vmul.f32 0.5, %v3882
    %v3884 = vsub.f32 1.5, %v3883
    %v3885 = vmul.f32 %v3880, %v3884
    %vm3886 = vweird.f32 %v3878
    %vm3887 = vweird.f32 %v3880
    %vm3888 = vmor %vm3886, %vm3887
    %v3889 = vsel %vm3888, %v3880, %v3885
    %v3890 = vrsqrt.pop %v3879
    %v3891 = vmul.f32 %v3890, %v3879
    %v3892 = vmul.f32 %v3891, %v3890
    %v3893 = vmul.f32 0.5, %v3892
    %v3894 = vsub.f32 1.5, %v3893
    %v3895 = vmul.f32 %v3890, %v3894
    %vm3896 = vweird.f32 %v3879
    %vm3897 = vweird.f32 %v3890
    %vm3898 = vmor %vm3896, %vm3897
    %v3899 = vsel %vm3898, %v3890, %v3895
    %v3900 = vmul.f32 %v3868, %v3889
    %v3901 = vmul.f32 %v3869, %v3899
    %v3903 = vperm.slane %v3859, 0
    %v3905 = vmul.f32 %v3900, %v3903
    %v3906 = vmul.f32 %v3901, %v3903
    %v3908 = vperm.slane %v3861, 0
    %v3910 = vadd.f32 %v3905, %v3908
    %v3911 = vadd.f32 %v3906, %v3908
    %v3912 = vld [vmem:[%s16] sm:$0xff]
    %v3913 = vld [vmem:[%s16 + $0x8] sm:$0xff]
    %v3914 = vld [vmem:[%s16 + $0x10] sm:$0xff]
    %v3915 = vld [vmem:[%s16 + $0x18] sm:$0xff]
    %v3916 = vld [vmem:[%s16 + $0x20] sm:$0xff]
    %v3917 = vld [vmem:[%s16 + $0x28] sm:$0xff]
    %v3918 = vld [vmem:[%s16 + $0x30] sm:$0xff]
    %v3919 = vld [vmem:[%s16 + $0x38] sm:$0xff]
    %v3920 = vld [vmem:[%s16 + $0x40] sm:$0xff]
    %v3921 = vld [vmem:[%s16 + $0x48] sm:$0xff]
    %v3922 = vld [vmem:[%s16 + $0x50] sm:$0xff]
    %v3923 = vld [vmem:[%s16 + $0x58] sm:$0xff]
    %v3924 = vld [vmem:[%s16 + $0x60] sm:$0xff]
    %v3925 = vld [vmem:[%s16 + $0x68] sm:$0xff]
    %v3926 = vld [vmem:[%s16 + $0x70] sm:$0xff]
    %v3927 = vld [vmem:[%s16 + $0x78] sm:$0xff]
    %v3928 = vld [vmem:[#allocation20] sm:$0x1]
    %v3930 = vperm.slane %v3928, 0
    %3932 = vmatpush.msra.mxu0 %v3927
    %3933 = vmatpush.msra.mxu0 %v3926
    %3934 = vmatpush.msra.mxu0 %v3925
    %3935 = vmatpush.msra.mxu0 %v3924
    %3936 = vmatpush.msra.mxu0 %v3923
    %3937 = vmatpush.msra.mxu0 %v3922
    %3938 = vmatpush.msra.mxu0 %v3921
    %3939 = vmatpush.msra.mxu0 %v3920
    %3940 = vmatpush.msra.mxu0 %v3919
    %3941 = vmatpush.msra.mxu0 %v3918
    %3942 = vmatpush.msra.mxu0 %v3917
    %3943 = vmatpush.msra.mxu0 %v3916
    %3944 = vmatpush.msra.mxu0 %v3915
    %3945 = vmatpush.msra.mxu0 %v3914
    %3946 = vmatpush.msra.mxu0 %v3913
    %3947 = vmatpush.msra.mxu0 %v3912
    %3948 = vmatmul.f32.gmra.mxu0 %v3910
    %v3949 = vpop.f32.mrf.mxu0
    %v3950 = vadd.f32 %v3930, %v3949
    %3951 = vmatmul.f32.gmra.mxu0 %v3911
    %v3952 = vpop.f32.mrf.mxu0
    %v3953 = vadd.f32 %v3930, %v3952
    %3954 = vdwg.mxu0
    %3955 = vst [vmem:[#allocation22] sm:$0xff] %v3950
    %3956 = vst [vmem:[#allocation22 + $0x8] sm:$0xff] %v3953
    %v3957 = vrot.slane %v3910, 4
    %v3958 = vadd.f32 %v3910, %v3957
    %v3959 = vrot.slane %v3958, 2
    %v3960 = vadd.f32 %v3958, %v3959
    %v3961 = vrot.slane %v3960, 1
    %v3962 = vadd.f32 %v3960, %v3961
    %v3963 = vrot.slane %v3911, 4
    %v3964 = vadd.f32 %v3911, %v3963
    %v3965 = vrot.slane %v3964, 2
    %v3966 = vadd.f32 %v3964, %v3965
    %v3967 = vrot.slane %v3966, 1
    %v3968 = vadd.f32 %v3966, %v3967
    %v3969 = vrcp.pop 8.0
    %v3970 = vmul.f32 8.0, %v3969
    %v3971 = vsub.f32 1.0, %v3970
    %v3972 = vmul.f32 %v3969, %v3971
    %v3973 = vadd.f32 %v3969, %v3972
    %vm3974 = vweird.f32 %v3969
    %v3975 = vsel %vm3974, %v3969, %v3973
    %v3976 = vmul.f32 %v3962, %v3975
    %v3977 = vmul.f32 %v3968, %v3975
    %v3978 = vld [vmem:[%s18] sm:$0xff]
    %v3979 = vld [vmem:[%s18 + $0x8] sm:$0xff]
    %v3980 = vld [vmem:[%s18 + $0x10] sm:$0xff]
    %v3981 = vld [vmem:[%s18 + $0x18] sm:$0xff]
    %v3982 = vld [vmem:[%s18 + $0x20] sm:$0xff]
    %v3983 = vld [vmem:[%s18 + $0x28] sm:$0xff]
    %v3984 = vld [vmem:[%s18 + $0x30] sm:$0xff]
    %v3985 = vld [vmem:[%s18 + $0x38] sm:$0xff]
    %v3986 = vld [vmem:[%s18 + $0x40] sm:$0xff]
    %v3987 = vld [vmem:[%s18 + $0x48] sm:$0xff]
    %v3988 = vld [vmem:[%s18 + $0x50] sm:$0xff]
    %v3989 = vld [vmem:[%s18 + $0x58] sm:$0xff]
    %v3990 = vld [vmem:[%s18 + $0x60] sm:$0xff]
    %v3991 = vld [vmem:[%s18 + $0x68] sm:$0xff]
    %v3992 = vld [vmem:[%s18 + $0x70] sm:$0xff]
    %v3993 = vld [vmem:[%s18 + $0x78] sm:$0xff]
    %v3994 = vld [vmem:[%s19] sm:$0x1]
    %v3996 = vperm.slane %v3994, 0
    %vm4000 = vcmask 1041409
    %v4001 = vsel %vm4000, %v3977, %v3976
    %4003 = vmatpush.msra.mxu0 %v3993
    %4004 = vmatpush.msra.mxu0 %v3992
    %4005 = vmatpush.msra.mxu0 %v3991
    %4006 = vmatpush.msra.mxu0 %v3990
    %4007 = vmatpush.msra.mxu0 %v3989
    %4008 = vmatpush.msra.mxu0 %v3988
    %4009 = vmatpush.msra.mxu0 %v3987
    %4010 = vmatpush.msra.mxu0 %v3986
    %4011 = vmatpush.msra.mxu0 %v3985
    %4012 = vmatpush.msra.mxu0 %v3984
    %4013 = vmatpush.msra.mxu0 %v3983
    %4014 = vmatpush.msra.mxu0 %v3982
    %4015 = vmatpush.msra.mxu0 %v3981
    %4016 = vmatpush.msra.mxu0 %v3980
    %4017 = vmatpush.msra.mxu0 %v3979
    %4018 = vmatpush.msra.mxu0 %v3978
    %4019 = vmatmul.f32.gmra.mxu0 %v4001
    %v4020 = vpop.f32.mrf.mxu0
    %v4021 = vadd.f32 %v3996, %v4020
    %4022 = vdwg.mxu0
    %v4023 = vld [vmem:[%s20] sm:$0x1]
    %v4024 = vld [vmem:[%s21] sm:$0x1]
    %vm4025 = vcmask 517120
    %v4026 = vsel %vm4025, %v4021, 0.0
    %4027 = vadd.xlane.f32.xlu0 %v4026
    %v4028 = vpop.xlane.xlu0 %4027
    %v4029 = vrcp.pop 64.0
    %v4030 = vmul.f32 64.0, %v4029
    %v4031 = vsub.f32 1.0, %v4030
    %v4032 = vmul.f32 %v4029, %v4031
    %v4033 = vadd.f32 %v4029, %v4032
    %vm4034 = vweird.f32 %v4029
    %v4035 = vsel %vm4034, %v4029, %v4033
    %v4036 = vmul.f32 %v4028, %v4035
    %v4037 = vsub.f32 %v4021, %v4036
    %v4038 = vmul.f32 %v4037, %v4037
    %v4039 = vsel %vm4025, %v4038, 0.0
    %4040 = vadd.xlane.f32.xlu0 %v4039
    %v4041 = vpop.xlane.xlu0 %4040
    %v4042 = vmul.f32 %v4041, %v4035
    %v4043 = vadd.f32 %v4042, 1e-05
    %v4044 = vrsqrt.pop %v4043
    %v4045 = vmul.f32 %v4044, %v4043
    %v4046 = vmul.f32 %v4045, %v4044
    %v4047 = vmul.f32 0.5, %v4046
    %v4048 = vsub.f32 1.5, %v4047
    %v4049 = vmul.f32 %v4044, %v4048
    %vm4050 = vweird.f32 %v4043
    %vm4051 = vweird.f32 %v4044
    %vm4052 = vmor %vm4050, %vm4051
    %v4053 = vsel %vm4052, %v4044, %v4049
    %v4054 = vmul.f32 %v4037, %v4053
    %v4056 = vperm.slane %v4023, 0
    %v4058 = vmul.f32 %v4054, %v4056
    %v4060 = vperm.slane %v4024, 0
    %v4062 = vadd.f32 %v4058, %v4060
    %v4063 = vmul.f32 %v4062, 0.5
    %v4064 = vrcp.pop 1.4142135
    %v4065 = vmul.f32 1.4142135, %v4064
    %v4066 = vsub.f32 1.0, %v4065
    %v4067 = vmul.f32 %v4064, %v4066
    %v4068 = vadd.f32 %v4064, %v4067
    %vm4069 = vweird.f32 %v4064
    %v4070 = vsel %vm4069, %v4064, %v4068
    %v4071 = vmul.f32 %v4062, %v4070
    %v4072 = vmul.f32 %v4071, %v4071
    %v4073 = vmin.f32 16.0, %v4072
    %v4074 = vmul.f32 %v4073, 2.1237322e-06
    %v4075 = vadd.f32 %v4074, 0.00028619796
    %v4076 = vmul.f32 %v4073, %v4075
    %v4077 = vadd.f32 %v4076, 0.0036580483
    %v4078 = vmul.f32 %v4073, %v4077
    %v4079 = vadd.f32 %v4078, 0.05243302
    %v4080 = vmul.f32 %v4073, %v4079
    %v4081 = vadd.f32 %v4080, 0.18741608
    %v4082 = vmul.f32 %v4073, %v4081
    %v4083 = vadd.f32 %v4082, 1.1283791
    %v4084 = vmul.f32 %v4071, %v4083
    %v4085 = vmul.f32 %v4073, 3.8918573e-05
    %v4086 = vadd.f32 %v4085, 0.001143296
    %v4087 = vmul.f32 %v4073, %v4086
    %v4088 = vadd.f32 %v4087, 0.014752088
    %v4089 = vmul.f32 %v4073, %v4088
    %v4090 = vadd.f32 %v4089, 0.112945676
    %v4091 = vmul.f32 %v4073, %v4090
    %v4092 = vadd.f32 %v4091, 0.4994258
    %v4093 = vmul.f32 %v4073, %v4092
    %v4094 = vadd.f32 %v4093, 1.0
    %v4095 = vrcp.pop %v4094
    %v4096 = vmul.f32 %v4094, %v4095
    %v4097 = vsub.f32 1.0, %v4096
    %v4098 = vmul.f32 %v4095, %v4097
    %v4099 = vadd.f32 %v4095, %v4098
    %vm4100 = vweird.f32 %v4094
    %vm4101 = vweird.f32 %v4095
    %vm4102 = vmor %vm4100, %vm4101
    %v4103 = vsel %vm4102, %v4095, %v4099
    %v4104 = vand.u32 2147483647, %v4094
    %vm4105 = vcmp.eq.f32.partialorder %v4104, 8.507059e+37
    %v4106 = vand.u32 %v4094, 2147483648
    %v4107 = vor.u32 1.1754944e-38, %v4106
    %v4108 = vsel %vm4105, %v4107, %v4103
    %v4109 = vmul.f32 %v4084, %v4108
    %v4110 = vmin.f32 %v4109, 1.0
    %v4111 = vmax.f32 %v4110, -1.0
    %v4112 = vadd.f32 %v4111, 1.0
    %v4113 = vmul.f32 %v4063, %v4112
    %v4114 = vld [vmem:[%s22] sm:$0xff]
    %v4115 = vld [vmem:[%s22 + $0x8] sm:$0xff]
    %v4116 = vld [vmem:[%s22 + $0x10] sm:$0xff]
    %v4117 = vld [vmem:[%s22 + $0x18] sm:$0xff]
    %v4118 = vld [vmem:[%s22 + $0x20] sm:$0xff]
    %v4119 = vld [vmem:[%s22 + $0x28] sm:$0xff]
    %v4120 = vld [vmem:[%s22 + $0x30] sm:$0xff]
    %v4121 = vld [vmem:[%s22 + $0x38] sm:$0xff]
    %v4122 = vld [vmem:[%s23] sm:$0x1]
    %v4124 = vperm.slane %v4122, 0
    %v4127 = vsel %vm1772, %v4113, 0
    %4129 = vmatpush.msra.mxu0 0.0
    %4130 = vmatpush.msra.mxu0 0.0
    %4131 = vmatpush.msra.mxu0 0.0
    %4132 = vmatpush.msra.mxu0 0.0
    %4133 = vmatpush.msra.mxu0 0.0
    %4134 = vmatpush.msra.mxu0 0.0
    %4135 = vmatpush.msra.mxu0 0.0
    %4136 = vmatpush.msra.mxu0 0.0
    %4137 = vmatpush.msra.mxu0 %v4121
    %4138 = vmatpush.msra.mxu0 %v4120
    %4139 = vmatpush.msra.mxu0 %v4119
    %4140 = vmatpush.msra.mxu0 %v4118
    %4141 = vmatpush.msra.mxu0 %v4117
    %4142 = vmatpush.msra.mxu0 %v4116
    %4143 = vmatpush.msra.mxu0 %v4115
    %4144 = vmatpush.msra.mxu0 %v4114
    %4145 = vmatmul.f32.gmra.mxu0 %v4127
    %v4146 = vpop.f32.mrf.mxu0
    %v4147 = vadd.f32 %v4124, %v4146
    %4148 = vdwg.mxu0
    %4149 = vst [vmem:[#allocation23] sm:$0x3] %v4147
    // Predicated region
    $region146: #{tpu_custom_call.1} parent=1 // pred_check
      _
    $region147: #{tpu_custom_call.1} parent=1 // pred_check_branch
      %4151 = sbr.rel (0) target = $region149
    $region148: #{tpu_custom_call.1} parent=1 // pred_region
      %4153 = vsyncadd [#allocation4], 0
      %s4154 = sshll.u32 [#allocation22], 4
      %s4155 = int_to_ptr.vmem [resolvable:$true] %s4154
      %s4156 = sshll.u32 %s24, 4
      %s4157 = int_to_ptr.hbm [resolvable:$true] %s4156
      %4162 = dma.vmem_to_hbm [thread:$0]  %s4155, 256, %s4157, [#allocation4], 128, 128, 8
    $region149: #{tpu_custom_call.1} parent=1 // pred_fallthru
      _
    // Predicated region
    $region150: #{tpu_custom_call.1} parent=1 // pred_check
      _
    $region151: #{tpu_custom_call.1} parent=1 // pred_check_branch
      %4164 = sbr.rel (0) target = $region153
    $region152: #{tpu_custom_call.1} parent=1 // pred_region
      %4166 = vsyncadd [#allocation24], 0
      %s4168 = sshll.u32 [#allocation23], 4
      %s4169 = int_to_ptr.vmem [resolvable:$true] %s4168
      %s4170 = sshll.u32 %s25, 4
      %s4171 = int_to_ptr.hbm [resolvable:$true] %s4170
      %4173 = dma.vmem_to_hbm [thread:$0]  %s4169, 32, %s4171, [#allocation24]
    $region153: #{tpu_custom_call.1} parent=1 // pred_fallthru
      _
    // Predicated region
    $region154: #{tpu_custom_call.1} parent=1 // pred_check
      _
    $region155: #{tpu_custom_call.1} parent=1 // pred_check_branch
      %4175 = sbr.rel (0) target = $region157
    $region156: #{tpu_custom_call.1} parent=1 // pred_region
      %4177 = dma.done [#allocation4], 256
    $region157: #{tpu_custom_call.1} parent=1 // pred_fallthru
      _
    // Predicated region
    $region158: #{tpu_custom_call.1} parent=1 // pred_check
      _
    $region159: #{tpu_custom_call.1} parent=1 // pred_check_branch
      %4179 = sbr.rel (0) target = $region161
    $region160: #{tpu_custom_call.1} parent=1 // pred_region
      %4181 = dma.done [#allocation24], 32
    $region161: #{tpu_custom_call.1} parent=1 // pred_fallthru
      _
    %4182 = vsyncpa [#allocation3], 1
    %4183 = vsyncpa [#allocation6], 1
    %4184 = vsyncpa [#allocation9], 1
    %4185 = vsyncpa [#allocation12], 1
    %4186 = vsyncpa [#allocation15], 1
    %4187 = vsyncpa [#allocation18], 1
    %4188 = vsyncpa [#allocation21], 1
    %4189 = vsyncpa [#allocation4], 1
    %4190 = vsyncpa [#allocation24], 1

</llo_original>
